<compile_context>
chip_gen: v7x
topology: tpu7x:2x2x1
jax: 0.10.0
libtpu: 0.0.40
codegen_flags: <defaults>
</compile_context>

<pallas_src>
import functools

import jax
import jax.numpy as jnp
from jax import lax
from jax.experimental import pallas as pl
from jax.experimental.pallas import tpu as pltpu


# ----------------------------- fused Pallas kernel ------------------------------ #

def landmark_kernel(xb_ref,     # (T*Bt*N, F)  conv input, rows = (t*Bt + b)*N + n (time-major)
                    w1t_ref,    # (F, 64)      conv1 weight (BN folded), K-major
                    b1_ref,     # (1, 64)
                    w2t_ref,    # (64, C)      conv2 weight (BN folded)
                    b2_ref,     # (1, C)
                    mc_ref,     # (T*Bt, 1)    time-major mask column
                    wx_ref,     # (C, 8H)      input->gate weights [fwd i f g o | bwd i f g o]
                    bg_ref,     # (1, 8H)      gate bias, same column layout
                    whh_ref,    # (2H, 8H)     recurrent weights, block-diag over directions
                    denom_ref,  # (Bt, 1)      clamp(sum_t mask, 1)
                    out_ref,    # (Bt, 2H)
                    gx_ref,     # scratch (T*Bt, 8H): hoisted input->gate projections
                    *, T, Bt, N, H):
    f32 = jnp.float32
    TB = T * Bt
    H4 = 4 * H
    C = w2t_ref.shape[1]

    w1t = w1t_ref[...]
    w2t = w2t_ref[...]
    wx = wx_ref[...]
    wh = whh_ref[...]

    # ---- CNN: two 1x1 convs as lane-dense matmuls over all T*Bt*N positions ----
    h1 = jnp.dot(xb_ref[...], w1t, preferred_element_type=f32) + b1_ref[...]   # (TBN, 64)
    h1 = jnp.maximum(h1, 0.0)
    h2 = jnp.dot(h1.astype(w2t.dtype), w2t, preferred_element_type=f32) + b2_ref[...]  # (TBN, C)
    h2 = jnp.maximum(h2, 0.0)

    # ---- mean over the N landmarks: sublane-group reduce (no dense averaging matmul) ----
    feat = h2.reshape(TB, N, C).sum(axis=1) * (1.0 / N)          # (TB, C), time-major rows
    feat = feat * mc_ref[...]                                     # mask padded frames / batches

    # ---- hoisted input->gate projections for BOTH directions, one dense matmul ----
    gx_ref[...] = (jnp.dot(feat.astype(wx.dtype), wx, preferred_element_type=f32)
                   + bg_ref[...])                                 # (TB, 8H), single dense store

    inv_denom = 1.0 / denom_ref[...]                              # hoisted normalization

    def sigm(v):                                                  # 1 EUP op instead of exp+recip
        return 0.5 * jnp.tanh(0.5 * v) + 0.5

    # ---- fused fwd+bwd recurrence: state = [h_fwd | h_bwd] on the lane axis ----
    def step(t, carry):
        h, c, acc_f, acc_b = carry                                # h,c:(Bt,2H) acc:(Bt,H)
        rf = pl.multiple_of(t * Bt, Bt)                           # fwd input at time t
        rb = pl.multiple_of((T - 1 - t) * Bt, Bt)                 # bwd input at time T-1-t
        row_f = gx_ref[pl.ds(rf, Bt), :]                          # (Bt, 8H)
        row_b = gx_ref[pl.ds(rb, Bt), :]
        g = (jnp.concatenate([row_f[:, :H4], row_b[:, H4:]], axis=1)
             + jnp.dot(h.astype(wh.dtype), wh, preferred_element_type=f32))   # (Bt, 8H)
        i_g = sigm(jnp.concatenate([g[:, 0 * H:1 * H], g[:, H4 + 0 * H:H4 + 1 * H]], axis=1))
        f_g = sigm(jnp.concatenate([g[:, 1 * H:2 * H], g[:, H4 + 1 * H:H4 + 2 * H]], axis=1))
        g_g = jnp.tanh(jnp.concatenate([g[:, 2 * H:3 * H], g[:, H4 + 2 * H:H4 + 3 * H]], axis=1))
        o_g = sigm(jnp.concatenate([g[:, 3 * H:4 * H], g[:, H4 + 3 * H:H4 + 4 * H]], axis=1))
        c = f_g * c + i_g * g_g
        h = o_g * jnp.tanh(c)
        mf = mc_ref[pl.ds(rf, Bt), :]                             # (Bt,1) mask at time t
        mb = mc_ref[pl.ds(rb, Bt), :]                             # (Bt,1) mask at time T-1-t
        acc_f = acc_f + mf * h[:, :H]                             # masked temporal sums
        acc_b = acc_b + mb * h[:, H:]
        return h, c, acc_f, acc_b

    z2 = jnp.zeros((Bt, 2 * H), f32)
    z1 = jnp.zeros((Bt, H), f32)
    _, _, acc_f, acc_b = lax.fori_loop(0, T, step, (z2, z2, z1, z1), unroll=min(T, 8))

    out_ref[...] = jnp.concatenate([acc_f, acc_b], axis=1) * inv_denom


# ------------------------------- wrapper ----------------------------------- #

def landmark_branch_forward(x, mask, params, *, matmul_dtype=jnp.float32):
    """x: (B, T, N, F) f32, mask: (B, T) f32.  Returns (B, 2H) f32.

    Pass matmul_dtype=jnp.bfloat16 on v6e/v7x to run MXU operands in bf16
    (accumulation stays f32); loosen correctness tolerances accordingly.
    """
    B, T, N, F = x.shape
    C = params["w2"].shape[0]
    H = params["whf"].shape[0]

    Bt = 8                                   # batch tile = one sublane group
    nb = -(-B // Bt)                         # ceil(B / Bt)
    Bp = nb * Bt

    # Zero-pad batch to a multiple of 8 sublanes (padded rows have mask 0 -> contribute 0).
    if Bp != B:
        x = jnp.pad(x, ((0, Bp - B), (0, 0), (0, 0), (0, 0)))
        mask = jnp.pad(mask, ((0, Bp - B), (0, 0)))
    mask = mask.astype(jnp.float32)

    # torch: x.view(B*T, F, N) is a row-major reinterpretation of the (N, F) tail as (F, N).
    xr = x.reshape(Bp, T, F, N)
    xq = jnp.transpose(xr, (0, 1, 3, 2))     # (Bp, T, N, F): rows = conv positions, cols = channels
    # Group into batch tiles, time-major inside each tile: row ((tile*T + t)*Bt + b)*N + n.
    xb = (xq.reshape(nb, Bt, T, N, F)
            .transpose(0, 2, 1, 3, 4)
            .reshape(nb * T * Bt * N, F)).astype(matmul_dtype)

    # Time-major mask column (same (tile, t, b) ordering) and clamped denominator.
    mc = (mask.reshape(nb, Bt, T)
              .transpose(0, 2, 1)
              .reshape(nb * T * Bt, 1))
    denom = jnp.maximum(jnp.sum(mask, axis=1, keepdims=True), 1.0)          # (Bp, 1)

    # CNN weights in (K, out) layout (BN already folded in init_params).
    w1t = params["w1"].T.astype(matmul_dtype)          # (F, 64)
    b1r = params["b1"].reshape(1, -1)                   # (1, 64)
    w2t = params["w2"].T.astype(matmul_dtype)          # (64, C)
    b2r = params["b2"].reshape(1, -1)                   # (1, C)

    # LSTM weights: direction-major gate columns [fwd i f g o | bwd i f g o].
    wx_all = jnp.concatenate([params["wxf"], params["wxb"]], axis=1).astype(matmul_dtype)  # (C, 8H)
    bg = jnp.concatenate([params["bf"], params["bb"]], axis=1)                             # (1, 8H)
    zH = jnp.zeros((H, 4 * H), jnp.float32)
    wh_big = jnp.concatenate(
        [jnp.concatenate([params["whf"], zH], axis=1),
         jnp.concatenate([zH, params["whb"]], axis=1)], axis=0).astype(matmul_dtype)       # (2H, 8H)

    grid_spec = pltpu.PrefetchScalarGridSpec(
        num_scalar_prefetch=0,
        grid=(nb,),
        in_specs=[
            pl.BlockSpec((T * Bt * N, F), lambda i: (i, 0)),
            pl.BlockSpec((F, 64), lambda i: (0, 0)),
            pl.BlockSpec((1, 64), lambda i: (0, 0)),
            pl.BlockSpec((64, C), lambda i: (0, 0)),
            pl.BlockSpec((1, C), lambda i: (0, 0)),
            pl.BlockSpec((T * Bt, 1), lambda i: (i, 0)),
            pl.BlockSpec((C, 8 * H), lambda i: (0, 0)),
            pl.BlockSpec((1, 8 * H), lambda i: (0, 0)),
            pl.BlockSpec((2 * H, 8 * H), lambda i: (0, 0)),
            pl.BlockSpec((Bt, 1), lambda i: (i, 0)),
        ],
        out_specs=pl.BlockSpec((Bt, 2 * H), lambda i: (i, 0)),
        scratch_shapes=[pltpu.VMEM((T * Bt, 8 * H), jnp.float32)],
    )

    out = pl.pallas_call(
        functools.partial(landmark_kernel, T=T, Bt=Bt, N=N, H=H),
        out_shape=jax.ShapeDtypeStruct((Bp, 2 * H), jnp.float32),
        grid_spec=grid_spec,
        compiler_params=pltpu.CompilerParams(
            dimension_semantics=("parallel",)),   # batch tiles -> both TCs on v7x
    )(xb, w1t, b1r, w2t, b2r, mc, wx_all, bg, wh_big, denom)

    return out[:B]


# ------------------------- params / reference ------------------------------ #

def init_params(key, in_dim, cnn_out, lstm_hidden):
    ks = jax.random.split(key, 10)
    eps = 1e-5
    bn_scale = 1.0 / jnp.sqrt(1.0 + eps)     # BatchNorm folded (default running stats)

    w1 = jax.random.normal(ks[0], (64, in_dim), jnp.float32) * 0.1
    b1 = jax.random.normal(ks[1], (64,), jnp.float32) * 0.1
    w2 = jax.random.normal(ks[2], (cnn_out, 64), jnp.float32) * 0.1
    b2 = jax.random.normal(ks[3], (cnn_out,), jnp.float32) * 0.1

    H = lstm_hidden
    k = 1.0 / jnp.sqrt(H)
    u = lambda kk, shp: jax.random.uniform(kk, shp, jnp.float32, -k, k)
    w_ih_f = u(ks[4], (4 * H, cnn_out)); w_hh_f = u(ks[5], (4 * H, H)); b_f = u(ks[6], (4 * H,))
    w_ih_b = u(ks[7], (4 * H, cnn_out)); w_hh_b = u(ks[8], (4 * H, H)); b_b = u(ks[9], (4 * H,))

    return dict(
        w1=w1 * bn_scale, b1=(b1 * bn_scale)[:, None],
        w2=w2 * bn_scale, b2=(b2 * bn_scale)[:, None],
        wxf=w_ih_f.T, whf=w_hh_f.T, bf=b_f[None, :],
        wxb=w_ih_b.T, whb=w_hh_b.T, bb=b_b[None, :],
    )


def reference_forward(x, mask, params):
    """Pure-JAX reference (same math) for correctness checking."""
    B, T, N, F = x.shape
    C = params["w2"].shape[0]
    H = params["whf"].shape[0]

    xr = x.reshape(B * T, F, N)
    h = jnp.maximum(jnp.einsum("of,bfn->bon", params["w1"], xr) + params["b1"][None], 0.0)
    h2 = jnp.maximum(jnp.einsum("co,bon->bcn", params["w2"], h) + params["b2"][None], 0.0)
    feat_cnn = h2.mean(axis=2).reshape(B, T, C)
    xm = feat_cnn * mask[:, :, None]

    def run(wx, wh, b, reverse):
        hh = jnp.zeros((B, H)); cc = jnp.zeros((B, H))
        out = jnp.zeros((B, T, H))
        order = range(T - 1, -1, -1) if reverse else range(T)
        for t in order:
            g = xm[:, t] @ wx + hh @ wh + b
            i = jax.nn.sigmoid(g[:, 0:H]); f = jax.nn.sigmoid(g[:, H:2 * H])
            gg = jnp.tanh(g[:, 2 * H:3 * H]); o = jax.nn.sigmoid(g[:, 3 * H:4 * H])
            cc = f * cc + i * gg
            hh = o * jnp.tanh(cc)
            out = out.at[:, t].set(hh)
        return out

    of = run(params["wxf"], params["whf"], params["bf"], False)
    ob = run(params["wxb"], params["whb"], params["bb"], True)
    out = jnp.concatenate([of, ob], axis=-1) * mask[:, :, None]
    sm = jnp.maximum(mask.sum(axis=1, keepdims=True), 1.0)
    return out.sum(axis=1) / sm


# --------------------------------- main ------------------------------------ #

if __name__ == "__main__":
    B, T, N, F = 2, 8, 16, 8          # batch, frames, landmarks, per-landmark feats
    CNN_OUT, H = 32, 32               # cnn_out, lstm_hidden (bidirectional)

    key = jax.random.PRNGKey(0)
    kx, kp = jax.random.split(key)
    x = jax.random.normal(kx, (B, T, N, F), jnp.float32)
    lengths = jnp.array([6, 8], dtype=jnp.int32)
    mask = (jnp.arange(T)[None, :] < lengths[:, None]).astype(jnp.float32)   # (B, T)

    params = init_params(kp, in_dim=F, cnn_out=CNN_OUT, lstm_hidden=H)

    feat = landmark_branch_forward(x, mask, params)
    feat = jax.block_until_ready(feat)

    ref = reference_forward(x, mask, params)
    assert feat.shape == (B, 2 * H), feat.shape
    assert jnp.allclose(feat, ref, atol=1e-4, rtol=1e-4), float(jnp.max(jnp.abs(feat - ref)))

    print("KERNEL_OK")
</pallas_src>

<mosaic_0001>
module attributes {stable_mosaic.version = 11 : i64} {
  func.func @landmark_kernel(%arg0: i32, %arg1: memref<1024x8xf32, #tpu.memory_space<vmem>>, %arg2: memref<8x64xf32, #tpu.memory_space<vmem>>, %arg3: memref<1x64xf32, #tpu.memory_space<vmem>>, %arg4: memref<64x32xf32, #tpu.memory_space<vmem>>, %arg5: memref<1x32xf32, #tpu.memory_space<vmem>>, %arg6: memref<64x1xf32, #tpu.memory_space<vmem>>, %arg7: memref<32x256xf32, #tpu.memory_space<vmem>>, %arg8: memref<1x256xf32, #tpu.memory_space<vmem>>, %arg9: memref<64x256xf32, #tpu.memory_space<vmem>>, %arg10: memref<8x1xf32, #tpu.memory_space<vmem>>, %arg11: memref<8x64xf32, #tpu.memory_space<vmem>>, %arg12: memref<64x256xf32, #tpu.memory_space<vmem>>) attributes {dimension_semantics = [#tpu.dimension_semantics<parallel>], iteration_bounds = array<i64: 1>, scalar_prefetch = 0 : i64, scratch_operands = 1 : i64, tpu.core_type = #tpu.core_type<tc>, window_params = [{transform_indices = @transform_0, window_bounds = array<i64: 1024, 8>}, {pipeline_mode = #tpu.pipeline_mode<synchronous>, transform_indices = @transform_1, window_bounds = array<i64: 8, 64>}, {pipeline_mode = #tpu.pipeline_mode<synchronous>, transform_indices = @transform_2, window_bounds = array<i64: 1, 64>}, {pipeline_mode = #tpu.pipeline_mode<synchronous>, transform_indices = @transform_3, window_bounds = array<i64: 64, 32>}, {pipeline_mode = #tpu.pipeline_mode<synchronous>, transform_indices = @transform_4, window_bounds = array<i64: 1, 32>}, {transform_indices = @transform_5, window_bounds = array<i64: 64, 1>}, {pipeline_mode = #tpu.pipeline_mode<synchronous>, transform_indices = @transform_6, window_bounds = array<i64: 32, 256>}, {pipeline_mode = #tpu.pipeline_mode<synchronous>, transform_indices = @transform_7, window_bounds = array<i64: 1, 256>}, {pipeline_mode = #tpu.pipeline_mode<synchronous>, transform_indices = @transform_8, window_bounds = array<i64: 64, 256>}, {transform_indices = @transform_9, window_bounds = array<i64: 8, 1>}, {transform_indices = @transform_10, window_bounds = array<i64: 8, 64>}]} {
    %c0 = arith.constant 0 : index
    %c0_0 = arith.constant 0 : index
    %0 = vector.load %arg2[%c0, %c0_0] : memref<8x64xf32, #tpu.memory_space<vmem>>, vector<8x64xf32>
    %c0_1 = arith.constant 0 : index
    %c0_2 = arith.constant 0 : index
    %1 = vector.load %arg4[%c0_1, %c0_2] : memref<64x32xf32, #tpu.memory_space<vmem>>, vector<64x32xf32>
    %c0_3 = arith.constant 0 : index
    %c0_4 = arith.constant 0 : index
    %2 = vector.load %arg7[%c0_3, %c0_4] : memref<32x256xf32, #tpu.memory_space<vmem>>, vector<32x256xf32>
    %c0_5 = arith.constant 0 : index
    %c0_6 = arith.constant 0 : index
    %3 = vector.load %arg9[%c0_5, %c0_6] : memref<64x256xf32, #tpu.memory_space<vmem>>, vector<64x256xf32>
    %c0_7 = arith.constant 0 : index
    %c0_8 = arith.constant 0 : index
    %4 = vector.load %arg1[%c0_7, %c0_8] : memref<1024x8xf32, #tpu.memory_space<vmem>>, vector<1024x8xf32>
    %cst = arith.constant dense<0.000000e+00> : vector<1024x64xf32>
    %5 = tpu.matmul %4, %0, %cst {dimension_numbers = #tpu.dot_dimension_numbers<[1], [0], [0], [1], [0, 0, 1, 1], [], []>} : vector<1024x8xf32>, vector<8x64xf32>, vector<1024x64xf32> -> vector<1024x64xf32>
    %c0_9 = arith.constant 0 : index
    %c0_10 = arith.constant 0 : index
    %6 = vector.load %arg3[%c0_9, %c0_10] : memref<1x64xf32, #tpu.memory_space<vmem>>, vector<1x64xf32>
    %7 = vector.broadcast %6 : vector<1x64xf32> to vector<1024x64xf32>
    %8 = arith.addf %5, %7 : vector<1024x64xf32>
    %cst_11 = arith.constant 0.000000e+00 : f32
    %9 = vector.broadcast %cst_11 : f32 to vector<1024x64xf32>
    %10 = arith.maximumf %8, %9 : vector<1024x64xf32>
    %cst_12 = arith.constant dense<0.000000e+00> : vector<1024x32xf32>
    %11 = tpu.matmul %10, %1, %cst_12 {dimension_numbers = #tpu.dot_dimension_numbers<[1], [0], [0], [1], [0, 0, 1, 1], [], []>} : vector<1024x64xf32>, vector<64x32xf32>, vector<1024x32xf32> -> vector<1024x32xf32>
    %c0_13 = arith.constant 0 : index
    %c0_14 = arith.constant 0 : index
    %12 = vector.load %arg5[%c0_13, %c0_14] : memref<1x32xf32, #tpu.memory_space<vmem>>, vector<1x32xf32>
    %13 = vector.broadcast %12 : vector<1x32xf32> to vector<1024x32xf32>
    %14 = arith.addf %11, %13 : vector<1024x32xf32>
    %cst_15 = arith.constant 0.000000e+00 : f32
    %15 = vector.broadcast %cst_15 : f32 to vector<1024x32xf32>
    %16 = arith.maximumf %14, %15 : vector<1024x32xf32>
    %17 = vector.shape_cast %16 : vector<1024x32xf32> to vector<64x16x32xf32>
    %cst_16 = arith.constant dense<0.000000e+00> : vector<64x32xf32>
    %18 = vector.multi_reduction <add>, %17, %cst_16 [1] : vector<64x16x32xf32> to vector<64x32xf32>
    %cst_17 = arith.constant 6.250000e-02 : f32
    %19 = vector.broadcast %cst_17 : f32 to vector<64x32xf32>
    %20 = arith.mulf %18, %19 : vector<64x32xf32>
    %c0_18 = arith.constant 0 : index
    %c0_19 = arith.constant 0 : index
    %21 = vector.load %arg6[%c0_18, %c0_19] : memref<64x1xf32, #tpu.memory_space<vmem>>, vector<64x1xf32>
    %22 = vector.broadcast %21 : vector<64x1xf32> to vector<64x32xf32>
    %23 = arith.mulf %20, %22 : vector<64x32xf32>
    %cst_20 = arith.constant dense<0.000000e+00> : vector<64x256xf32>
    %24 = tpu.matmul %23, %2, %cst_20 {dimension_numbers = #tpu.dot_dimension_numbers<[1], [0], [0], [1], [0, 0, 1, 1], [], []>} : vector<64x32xf32>, vector<32x256xf32>, vector<64x256xf32> -> vector<64x256xf32>
    %c0_21 = arith.constant 0 : index
    %c0_22 = arith.constant 0 : index
    %25 = vector.load %arg8[%c0_21, %c0_22] : memref<1x256xf32, #tpu.memory_space<vmem>>, vector<1x256xf32>
    %26 = vector.broadcast %25 : vector<1x256xf32> to vector<64x256xf32>
    %27 = arith.addf %24, %26 : vector<64x256xf32>
    %c0_23 = arith.constant 0 : index
    %c0_24 = arith.constant 0 : index
    %28 = vector.load %arg12[%c0_23, %c0_24] : memref<64x256xf32, #tpu.memory_space<vmem>>, vector<64x256xf32>
    tpu.vector_store %arg12[%c0_23, %c0_24], %27 {strides = array<i32>} : memref<64x256xf32, #tpu.memory_space<vmem>>, vector<64x256xf32>,
    %c0_25 = arith.constant 0 : index
    %c0_26 = arith.constant 0 : index
    %29 = vector.load %arg10[%c0_25, %c0_26] : memref<8x1xf32, #tpu.memory_space<vmem>>, vector<8x1xf32>
    %cst_27 = arith.constant 1.000000e+00 : f32
    %30 = vector.broadcast %cst_27 : f32 to vector<8x1xf32>
    %31 = arith.divf %30, %29 : vector<8x1xf32>
    %cst_28 = arith.constant 0.000000e+00 : f32
    %32 = vector.broadcast %cst_28 : f32 to vector<8x64xf32>
    %cst_29 = arith.constant 0.000000e+00 : f32
    %33 = vector.broadcast %cst_29 : f32 to vector<8x32xf32>
    %c0_i32 = arith.constant 0 : i32
    %c8_i32 = arith.constant 8 : i32
    %34 = arith.muli %c0_i32, %c8_i32 : i32
    %35 = tpu.assume_multiple %34, 8 : i32
    %c7_i32 = arith.constant 7 : i32
    %36 = arith.subi %c7_i32, %c0_i32 : i32
    %c8_i32_30 = arith.constant 8 : i32
    %37 = arith.muli %36, %c8_i32_30 : i32
    %38 = tpu.assume_multiple %37, 8 : i32
    %39 = arith.index_cast %35 : i32 to index
    %c0_31 = arith.constant 0 : index
    %40 = vector.load %arg12[%39, %c0_31] : memref<64x256xf32, #tpu.memory_space<vmem>>, vector<8x256xf32>
    %41 = arith.index_cast %38 : i32 to index
    %c0_32 = arith.constant 0 : index
    %42 = vector.load %arg12[%41, %c0_32] : memref<64x256xf32, #tpu.memory_space<vmem>>, vector<8x256xf32>
    %43 = vector.extract_strided_slice %40 {offsets = [0, 0], sizes = [8, 128], strides = [1, 1]} : vector<8x256xf32> to vector<8x128xf32>
    %44 = vector.extract_strided_slice %42 {offsets = [0, 128], sizes = [8, 128], strides = [1, 1]} : vector<8x256xf32> to vector<8x128xf32>
    %45 = tpu.concatenate %43, %44 in 1 : vector<8x128xf32>, vector<8x128xf32> -> vector<8x256xf32>
    %cst_33 = arith.constant dense<0.000000e+00> : vector<8x256xf32>
    %46 = tpu.matmul %32, %3, %cst_33 {dimension_numbers = #tpu.dot_dimension_numbers<[1], [0], [0], [1], [0, 0, 1, 1], [], []>} : vector<8x64xf32>, vector<64x256xf32>, vector<8x256xf32> -> vector<8x256xf32>
    %47 = arith.addf %45, %46 : vector<8x256xf32>
    %48 = vector.extract_strided_slice %47 {offsets = [0, 0], sizes = [8, 32], strides = [1, 1]} : vector<8x256xf32> to vector<8x32xf32>
    %49 = vector.extract_strided_slice %47 {offsets = [0, 128], sizes = [8, 32], strides = [1, 1]} : vector<8x256xf32> to vector<8x32xf32>
    %50 = tpu.concatenate %48, %49 in 1 : vector<8x32xf32>, vector<8x32xf32> -> vector<8x64xf32>
    %cst_34 = arith.constant 5.000000e-01 : f32
    %51 = vector.broadcast %cst_34 : f32 to vector<8x64xf32>
    %52 = arith.mulf %51, %50 : vector<8x64xf32>
    %53 = math.tanh %52 : vector<8x64xf32>
    %cst_35 = arith.constant 5.000000e-01 : f32
    %54 = vector.broadcast %cst_35 : f32 to vector<8x64xf32>
    %55 = arith.mulf %54, %53 : vector<8x64xf32>
    %cst_36 = arith.constant 5.000000e-01 : f32
    %56 = vector.broadcast %cst_36 : f32 to vector<8x64xf32>
    %57 = arith.addf %55, %56 : vector<8x64xf32>
    %58 = vector.extract_strided_slice %47 {offsets = [0, 32], sizes = [8, 32], strides = [1, 1]} : vector<8x256xf32> to vector<8x32xf32>
    %59 = vector.extract_strided_slice %47 {offsets = [0, 160], sizes = [8, 32], strides = [1, 1]} : vector<8x256xf32> to vector<8x32xf32>
    %60 = tpu.concatenate %58, %59 in 1 : vector<8x32xf32>, vector<8x32xf32> -> vector<8x64xf32>
    %cst_37 = arith.constant 5.000000e-01 : f32
    %61 = vector.broadcast %cst_37 : f32 to vector<8x64xf32>
    %62 = arith.mulf %61, %60 : vector<8x64xf32>
    %63 = math.tanh %62 : vector<8x64xf32>
    %cst_38 = arith.constant 5.000000e-01 : f32
    %64 = vector.broadcast %cst_38 : f32 to vector<8x64xf32>
    %65 = arith.mulf %64, %63 : vector<8x64xf32>
    %cst_39 = arith.constant 5.000000e-01 : f32
    %66 = vector.broadcast %cst_39 : f32 to vector<8x64xf32>
    %67 = arith.addf %65, %66 : vector<8x64xf32>
    %68 = vector.extract_strided_slice %47 {offsets = [0, 64], sizes = [8, 32], strides = [1, 1]} : vector<8x256xf32> to vector<8x32xf32>
    %69 = vector.extract_strided_slice %47 {offsets = [0, 192], sizes = [8, 32], strides = [1, 1]} : vector<8x256xf32> to vector<8x32xf32>
    %70 = tpu.concatenate %68, %69 in 1 : vector<8x32xf32>, vector<8x32xf32> -> vector<8x64xf32>
    %71 = math.tanh %70 : vector<8x64xf32>
    %72 = vector.extract_strided_slice %47 {offsets = [0, 96], sizes = [8, 32], strides = [1, 1]} : vector<8x256xf32> to vector<8x32xf32>
    %73 = vector.extract_strided_slice %47 {offsets = [0, 224], sizes = [8, 32], strides = [1, 1]} : vector<8x256xf32> to vector<8x32xf32>
    %74 = tpu.concatenate %72, %73 in 1 : vector<8x32xf32>, vector<8x32xf32> -> vector<8x64xf32>
    %cst_40 = arith.constant 5.000000e-01 : f32
    %75 = vector.broadcast %cst_40 : f32 to vector<8x64xf32>
    %76 = arith.mulf %75, %74 : vector<8x64xf32>
    %77 = math.tanh %76 : vector<8x64xf32>
    %cst_41 = arith.constant 5.000000e-01 : f32
    %78 = vector.broadcast %cst_41 : f32 to vector<8x64xf32>
    %79 = arith.mulf %78, %77 : vector<8x64xf32>
    %cst_42 = arith.constant 5.000000e-01 : f32
    %80 = vector.broadcast %cst_42 : f32 to vector<8x64xf32>
    %81 = arith.addf %79, %80 : vector<8x64xf32>
    %82 = arith.mulf %67, %32 : vector<8x64xf32>
    %83 = arith.mulf %57, %71 : vector<8x64xf32>
    %84 = arith.addf %82, %83 : vector<8x64xf32>
    %85 = math.tanh %84 : vector<8x64xf32>
    %86 = arith.mulf %81, %85 : vector<8x64xf32>
    %87 = arith.index_cast %35 : i32 to index
    %c0_43 = arith.constant 0 : index
    %88 = vector.load %arg6[%87, %c0_43] : memref<64x1xf32, #tpu.memory_space<vmem>>, vector<8x1xf32>
    %89 = arith.index_cast %38 : i32 to index
    %c0_44 = arith.constant 0 : index
    %90 = vector.load %arg6[%89, %c0_44] : memref<64x1xf32, #tpu.memory_space<vmem>>, vector<8x1xf32>
    %91 = vector.extract_strided_slice %86 {offsets = [0, 0], sizes = [8, 32], strides = [1, 1]} : vector<8x64xf32> to vector<8x32xf32>
    %92 = vector.broadcast %88 : vector<8x1xf32> to vector<8x32xf32>
    %93 = arith.mulf %92, %91 : vector<8x32xf32>
    %94 = arith.addf %33, %93 : vector<8x32xf32>
    %95 = vector.extract_strided_slice %86 {offsets = [0, 32], sizes = [8, 32], strides = [1, 1]} : vector<8x64xf32> to vector<8x32xf32>
    %96 = vector.broadcast %90 : vector<8x1xf32> to vector<8x32xf32>
    %97 = arith.mulf %96, %95 : vector<8x32xf32>
    %98 = arith.addf %33, %97 : vector<8x32xf32>
    %c1_i32 = arith.constant 1 : i32
    %c8_i32_45 = arith.constant 8 : i32
    %99 = arith.muli %c1_i32, %c8_i32_45 : i32
    %100 = tpu.assume_multiple %99, 8 : i32
    %c7_i32_46 = arith.constant 7 : i32
    %101 = arith.subi %c7_i32_46, %c1_i32 : i32
    %c8_i32_47 = arith.constant 8 : i32
    %102 = arith.muli %101, %c8_i32_47 : i32
    %103 = tpu.assume_multiple %102, 8 : i32
    %104 = arith.index_cast %100 : i32 to index
    %c0_48 = arith.constant 0 : index
    %105 = vector.load %arg12[%104, %c0_48] : memref<64x256xf32, #tpu.memory_space<vmem>>, vector<8x256xf32>
    %106 = arith.index_cast %103 : i32 to index
    %c0_49 = arith.constant 0 : index
    %107 = vector.load %arg12[%106, %c0_49] : memref<64x256xf32, #tpu.memory_space<vmem>>, vector<8x256xf32>
    %108 = vector.extract_strided_slice %105 {offsets = [0, 0], sizes = [8, 128], strides = [1, 1]} : vector<8x256xf32> to vector<8x128xf32>
    %109 = vector.extract_strided_slice %107 {offsets = [0, 128], sizes = [8, 128], strides = [1, 1]} : vector<8x256xf32> to vector<8x128xf32>
    %110 = tpu.concatenate %108, %109 in 1 : vector<8x128xf32>, vector<8x128xf32> -> vector<8x256xf32>
    %cst_50 = arith.constant dense<0.000000e+00> : vector<8x256xf32>
    %111 = tpu.matmul %86, %3, %cst_50 {dimension_numbers = #tpu.dot_dimension_numbers<[1], [0], [0], [1], [0, 0, 1, 1], [], []>} : vector<8x64xf32>, vector<64x256xf32>, vector<8x256xf32> -> vector<8x256xf32>
    %112 = arith.addf %110, %111 : vector<8x256xf32>
    %113 = vector.extract_strided_slice %112 {offsets = [0, 0], sizes = [8, 32], strides = [1, 1]} : vector<8x256xf32> to vector<8x32xf32>
    %114 = vector.extract_strided_slice %112 {offsets = [0, 128], sizes = [8, 32], strides = [1, 1]} : vector<8x256xf32> to vector<8x32xf32>
    %115 = tpu.concatenate %113, %114 in 1 : vector<8x32xf32>, vector<8x32xf32> -> vector<8x64xf32>
    %cst_51 = arith.constant 5.000000e-01 : f32
    %116 = vector.broadcast %cst_51 : f32 to vector<8x64xf32>
    %117 = arith.mulf %116, %115 : vector<8x64xf32>
    %118 = math.tanh %117 : vector<8x64xf32>
    %cst_52 = arith.constant 5.000000e-01 : f32
    %119 = vector.broadcast %cst_52 : f32 to vector<8x64xf32>
    %120 = arith.mulf %119, %118 : vector<8x64xf32>
    %cst_53 = arith.constant 5.000000e-01 : f32
    %121 = vector.broadcast %cst_53 : f32 to vector<8x64xf32>
    %122 = arith.addf %120, %121 : vector<8x64xf32>
    %123 = vector.extract_strided_slice %112 {offsets = [0, 32], sizes = [8, 32], strides = [1, 1]} : vector<8x256xf32> to vector<8x32xf32>
    %124 = vector.extract_strided_slice %112 {offsets = [0, 160], sizes = [8, 32], strides = [1, 1]} : vector<8x256xf32> to vector<8x32xf32>
    %125 = tpu.concatenate %123, %124 in 1 : vector<8x32xf32>, vector<8x32xf32> -> vector<8x64xf32>
    %cst_54 = arith.constant 5.000000e-01 : f32
    %126 = vector.broadcast %cst_54 : f32 to vector<8x64xf32>
    %127 = arith.mulf %126, %125 : vector<8x64xf32>
    %128 = math.tanh %127 : vector<8x64xf32>
    %cst_55 = arith.constant 5.000000e-01 : f32
    %129 = vector.broadcast %cst_55 : f32 to vector<8x64xf32>
    %130 = arith.mulf %129, %128 : vector<8x64xf32>
    %cst_56 = arith.constant 5.000000e-01 : f32
    %131 = vector.broadcast %cst_56 : f32 to vector<8x64xf32>
    %132 = arith.addf %130, %131 : vector<8x64xf32>
    %133 = vector.extract_strided_slice %112 {offsets = [0, 64], sizes = [8, 32], strides = [1, 1]} : vector<8x256xf32> to vector<8x32xf32>
    %134 = vector.extract_strided_slice %112 {offsets = [0, 192], sizes = [8, 32], strides = [1, 1]} : vector<8x256xf32> to vector<8x32xf32>
    %135 = tpu.concatenate %133, %134 in 1 : vector<8x32xf32>, vector<8x32xf32> -> vector<8x64xf32>
    %136 = math.tanh %135 : vector<8x64xf32>
    %137 = vector.extract_strided_slice %112 {offsets = [0, 96], sizes = [8, 32], strides = [1, 1]} : vector<8x256xf32> to vector<8x32xf32>
    %138 = vector.extract_strided_slice %112 {offsets = [0, 224], sizes = [8, 32], strides = [1, 1]} : vector<8x256xf32> to vector<8x32xf32>
    %139 = tpu.concatenate %137, %138 in 1 : vector<8x32xf32>, vector<8x32xf32> -> vector<8x64xf32>
    %cst_57 = arith.constant 5.000000e-01 : f32
    %140 = vector.broadcast %cst_57 : f32 to vector<8x64xf32>
    %141 = arith.mulf %140, %139 : vector<8x64xf32>
    %142 = math.tanh %141 : vector<8x64xf32>
    %cst_58 = arith.constant 5.000000e-01 : f32
    %143 = vector.broadcast %cst_58 : f32 to vector<8x64xf32>
    %144 = arith.mulf %143, %142 : vector<8x64xf32>
    %cst_59 = arith.constant 5.000000e-01 : f32
    %145 = vector.broadcast %cst_59 : f32 to vector<8x64xf32>
    %146 = arith.addf %144, %145 : vector<8x64xf32>
    %147 = arith.mulf %132, %84 : vector<8x64xf32>
    %148 = arith.mulf %122, %136 : vector<8x64xf32>
    %149 = arith.addf %147, %148 : vector<8x64xf32>
    %150 = math.tanh %149 : vector<8x64xf32>
    %151 = arith.mulf %146, %150 : vector<8x64xf32>
    %152 = arith.index_cast %100 : i32 to index
    %c0_60 = arith.constant 0 : index
    %153 = vector.load %arg6[%152, %c0_60] : memref<64x1xf32, #tpu.memory_space<vmem>>, vector<8x1xf32>
    %154 = arith.index_cast %103 : i32 to index
    %c0_61 = arith.constant 0 : index
    %155 = vector.load %arg6[%154, %c0_61] : memref<64x1xf32, #tpu.memory_space<vmem>>, vector<8x1xf32>
    %156 = vector.extract_strided_slice %151 {offsets = [0, 0], sizes = [8, 32], strides = [1, 1]} : vector<8x64xf32> to vector<8x32xf32>
    %157 = vector.broadcast %153 : vector<8x1xf32> to vector<8x32xf32>
    %158 = arith.mulf %157, %156 : vector<8x32xf32>
    %159 = arith.addf %94, %158 : vector<8x32xf32>
    %160 = vector.extract_strided_slice %151 {offsets = [0, 32], sizes = [8, 32], strides = [1, 1]} : vector<8x64xf32> to vector<8x32xf32>
    %161 = vector.broadcast %155 : vector<8x1xf32> to vector<8x32xf32>
    %162 = arith.mulf %161, %160 : vector<8x32xf32>
    %163 = arith.addf %98, %162 : vector<8x32xf32>
    %c2_i32 = arith.constant 2 : i32
    %c8_i32_62 = arith.constant 8 : i32
    %164 = arith.muli %c2_i32, %c8_i32_62 : i32
    %165 = tpu.assume_multiple %164, 8 : i32
    %c7_i32_63 = arith.constant 7 : i32
    %166 = arith.subi %c7_i32_63, %c2_i32 : i32
    %c8_i32_64 = arith.constant 8 : i32
    %167 = arith.muli %166, %c8_i32_64 : i32
    %168 = tpu.assume_multiple %167, 8 : i32
    %169 = arith.index_cast %165 : i32 to index
    %c0_65 = arith.constant 0 : index
    %170 = vector.load %arg12[%169, %c0_65] : memref<64x256xf32, #tpu.memory_space<vmem>>, vector<8x256xf32>
    %171 = arith.index_cast %168 : i32 to index
    %c0_66 = arith.constant 0 : index
    %172 = vector.load %arg12[%171, %c0_66] : memref<64x256xf32, #tpu.memory_space<vmem>>, vector<8x256xf32>
    %173 = vector.extract_strided_slice %170 {offsets = [0, 0], sizes = [8, 128], strides = [1, 1]} : vector<8x256xf32> to vector<8x128xf32>
    %174 = vector.extract_strided_slice %172 {offsets = [0, 128], sizes = [8, 128], strides = [1, 1]} : vector<8x256xf32> to vector<8x128xf32>
    %175 = tpu.concatenate %173, %174 in 1 : vector<8x128xf32>, vector<8x128xf32> -> vector<8x256xf32>
    %cst_67 = arith.constant dense<0.000000e+00> : vector<8x256xf32>
    %176 = tpu.matmul %151, %3, %cst_67 {dimension_numbers = #tpu.dot_dimension_numbers<[1], [0], [0], [1], [0, 0, 1, 1], [], []>} : vector<8x64xf32>, vector<64x256xf32>, vector<8x256xf32> -> vector<8x256xf32>
    %177 = arith.addf %175, %176 : vector<8x256xf32>
    %178 = vector.extract_strided_slice %177 {offsets = [0, 0], sizes = [8, 32], strides = [1, 1]} : vector<8x256xf32> to vector<8x32xf32>
    %179 = vector.extract_strided_slice %177 {offsets = [0, 128], sizes = [8, 32], strides = [1, 1]} : vector<8x256xf32> to vector<8x32xf32>
    %180 = tpu.concatenate %178, %179 in 1 : vector<8x32xf32>, vector<8x32xf32> -> vector<8x64xf32>
    %cst_68 = arith.constant 5.000000e-01 : f32
    %181 = vector.broadcast %cst_68 : f32 to vector<8x64xf32>
    %182 = arith.mulf %181, %180 : vector<8x64xf32>
    %183 = math.tanh %182 : vector<8x64xf32>
    %cst_69 = arith.constant 5.000000e-01 : f32
    %184 = vector.broadcast %cst_69 : f32 to vector<8x64xf32>
    %185 = arith.mulf %184, %183 : vector<8x64xf32>
    %cst_70 = arith.constant 5.000000e-01 : f32
    %186 = vector.broadcast %cst_70 : f32 to vector<8x64xf32>
    %187 = arith.addf %185, %186 : vector<8x64xf32>
    %188 = vector.extract_strided_slice %177 {offsets = [0, 32], sizes = [8, 32], strides = [1, 1]} : vector<8x256xf32> to vector<8x32xf32>
    %189 = vector.extract_strided_slice %177 {offsets = [0, 160], sizes = [8, 32], strides = [1, 1]} : vector<8x256xf32> to vector<8x32xf32>
    %190 = tpu.concatenate %188, %189 in 1 : vector<8x32xf32>, vector<8x32xf32> -> vector<8x64xf32>
    %cst_71 = arith.constant 5.000000e-01 : f32
    %191 = vector.broadcast %cst_71 : f32 to vector<8x64xf32>
    %192 = arith.mulf %191, %190 : vector<8x64xf32>
    %193 = math.tanh %192 : vector<8x64xf32>
    %cst_72 = arith.constant 5.000000e-01 : f32
    %194 = vector.broadcast %cst_72 : f32 to vector<8x64xf32>
    %195 = arith.mulf %194, %193 : vector<8x64xf32>
    %cst_73 = arith.constant 5.000000e-01 : f32
    %196 = vector.broadcast %cst_73 : f32 to vector<8x64xf32>
    %197 = arith.addf %195, %196 : vector<8x64xf32>
    %198 = vector.extract_strided_slice %177 {offsets = [0, 64], sizes = [8, 32], strides = [1, 1]} : vector<8x256xf32> to vector<8x32xf32>
    %199 = vector.extract_strided_slice %177 {offsets = [0, 192], sizes = [8, 32], strides = [1, 1]} : vector<8x256xf32> to vector<8x32xf32>
    %200 = tpu.concatenate %198, %199 in 1 : vector<8x32xf32>, vector<8x32xf32> -> vector<8x64xf32>
    %201 = math.tanh %200 : vector<8x64xf32>
    %202 = vector.extract_strided_slice %177 {offsets = [0, 96], sizes = [8, 32], strides = [1, 1]} : vector<8x256xf32> to vector<8x32xf32>
    %203 = vector.extract_strided_slice %177 {offsets = [0, 224], sizes = [8, 32], strides = [1, 1]} : vector<8x256xf32> to vector<8x32xf32>
    %204 = tpu.concatenate %202, %203 in 1 : vector<8x32xf32>, vector<8x32xf32> -> vector<8x64xf32>
    %cst_74 = arith.constant 5.000000e-01 : f32
    %205 = vector.broadcast %cst_74 : f32 to vector<8x64xf32>
    %206 = arith.mulf %205, %204 : vector<8x64xf32>
    %207 = math.tanh %206 : vector<8x64xf32>
    %cst_75 = arith.constant 5.000000e-01 : f32
    %208 = vector.broadcast %cst_75 : f32 to vector<8x64xf32>
    %209 = arith.mulf %208, %207 : vector<8x64xf32>
    %cst_76 = arith.constant 5.000000e-01 : f32
    %210 = vector.broadcast %cst_76 : f32 to vector<8x64xf32>
    %211 = arith.addf %209, %210 : vector<8x64xf32>
    %212 = arith.mulf %197, %149 : vector<8x64xf32>
    %213 = arith.mulf %187, %201 : vector<8x64xf32>
    %214 = arith.addf %212, %213 : vector<8x64xf32>
    %215 = math.tanh %214 : vector<8x64xf32>
    %216 = arith.mulf %211, %215 : vector<8x64xf32>
    %217 = arith.index_cast %165 : i32 to index
    %c0_77 = arith.constant 0 : index
    %218 = vector.load %arg6[%217, %c0_77] : memref<64x1xf32, #tpu.memory_space<vmem>>, vector<8x1xf32>
    %219 = arith.index_cast %168 : i32 to index
    %c0_78 = arith.constant 0 : index
    %220 = vector.load %arg6[%219, %c0_78] : memref<64x1xf32, #tpu.memory_space<vmem>>, vector<8x1xf32>
    %221 = vector.extract_strided_slice %216 {offsets = [0, 0], sizes = [8, 32], strides = [1, 1]} : vector<8x64xf32> to vector<8x32xf32>
    %222 = vector.broadcast %218 : vector<8x1xf32> to vector<8x32xf32>
    %223 = arith.mulf %222, %221 : vector<8x32xf32>
    %224 = arith.addf %159, %223 : vector<8x32xf32>
    %225 = vector.extract_strided_slice %216 {offsets = [0, 32], sizes = [8, 32], strides = [1, 1]} : vector<8x64xf32> to vector<8x32xf32>
    %226 = vector.broadcast %220 : vector<8x1xf32> to vector<8x32xf32>
    %227 = arith.mulf %226, %225 : vector<8x32xf32>
    %228 = arith.addf %163, %227 : vector<8x32xf32>
    %c3_i32 = arith.constant 3 : i32
    %c8_i32_79 = arith.constant 8 : i32
    %229 = arith.muli %c3_i32, %c8_i32_79 : i32
    %230 = tpu.assume_multiple %229, 8 : i32
    %c7_i32_80 = arith.constant 7 : i32
    %231 = arith.subi %c7_i32_80, %c3_i32 : i32
    %c8_i32_81 = arith.constant 8 : i32
    %232 = arith.muli %231, %c8_i32_81 : i32
    %233 = tpu.assume_multiple %232, 8 : i32
    %234 = arith.index_cast %230 : i32 to index
    %c0_82 = arith.constant 0 : index
    %235 = vector.load %arg12[%234, %c0_82] : memref<64x256xf32, #tpu.memory_space<vmem>>, vector<8x256xf32>
    %236 = arith.index_cast %233 : i32 to index
    %c0_83 = arith.constant 0 : index
    %237 = vector.load %arg12[%236, %c0_83] : memref<64x256xf32, #tpu.memory_space<vmem>>, vector<8x256xf32>
    %238 = vector.extract_strided_slice %235 {offsets = [0, 0], sizes = [8, 128], strides = [1, 1]} : vector<8x256xf32> to vector<8x128xf32>
    %239 = vector.extract_strided_slice %237 {offsets = [0, 128], sizes = [8, 128], strides = [1, 1]} : vector<8x256xf32> to vector<8x128xf32>
    %240 = tpu.concatenate %238, %239 in 1 : vector<8x128xf32>, vector<8x128xf32> -> vector<8x256xf32>
    %cst_84 = arith.constant dense<0.000000e+00> : vector<8x256xf32>
    %241 = tpu.matmul %216, %3, %cst_84 {dimension_numbers = #tpu.dot_dimension_numbers<[1], [0], [0], [1], [0, 0, 1, 1], [], []>} : vector<8x64xf32>, vector<64x256xf32>, vector<8x256xf32> -> vector<8x256xf32>
    %242 = arith.addf %240, %241 : vector<8x256xf32>
    %243 = vector.extract_strided_slice %242 {offsets = [0, 0], sizes = [8, 32], strides = [1, 1]} : vector<8x256xf32> to vector<8x32xf32>
    %244 = vector.extract_strided_slice %242 {offsets = [0, 128], sizes = [8, 32], strides = [1, 1]} : vector<8x256xf32> to vector<8x32xf32>
    %245 = tpu.concatenate %243, %244 in 1 : vector<8x32xf32>, vector<8x32xf32> -> vector<8x64xf32>
    %cst_85 = arith.constant 5.000000e-01 : f32
    %246 = vector.broadcast %cst_85 : f32 to vector<8x64xf32>
    %247 = arith.mulf %246, %245 : vector<8x64xf32>
    %248 = math.tanh %247 : vector<8x64xf32>
    %cst_86 = arith.constant 5.000000e-01 : f32
    %249 = vector.broadcast %cst_86 : f32 to vector<8x64xf32>
    %250 = arith.mulf %249, %248 : vector<8x64xf32>
    %cst_87 = arith.constant 5.000000e-01 : f32
    %251 = vector.broadcast %cst_87 : f32 to vector<8x64xf32>
    %252 = arith.addf %250, %251 : vector<8x64xf32>
    %253 = vector.extract_strided_slice %242 {offsets = [0, 32], sizes = [8, 32], strides = [1, 1]} : vector<8x256xf32> to vector<8x32xf32>
    %254 = vector.extract_strided_slice %242 {offsets = [0, 160], sizes = [8, 32], strides = [1, 1]} : vector<8x256xf32> to vector<8x32xf32>
    %255 = tpu.concatenate %253, %254 in 1 : vector<8x32xf32>, vector<8x32xf32> -> vector<8x64xf32>
    %cst_88 = arith.constant 5.000000e-01 : f32
    %256 = vector.broadcast %cst_88 : f32 to vector<8x64xf32>
    %257 = arith.mulf %256, %255 : vector<8x64xf32>
    %258 = math.tanh %257 : vector<8x64xf32>
    %cst_89 = arith.constant 5.000000e-01 : f32
    %259 = vector.broadcast %cst_89 : f32 to vector<8x64xf32>
    %260 = arith.mulf %259, %258 : vector<8x64xf32>
    %cst_90 = arith.constant 5.000000e-01 : f32
    %261 = vector.broadcast %cst_90 : f32 to vector<8x64xf32>
    %262 = arith.addf %260, %261 : vector<8x64xf32>
    %263 = vector.extract_strided_slice %242 {offsets = [0, 64], sizes = [8, 32], strides = [1, 1]} : vector<8x256xf32> to vector<8x32xf32>
    %264 = vector.extract_strided_slice %242 {offsets = [0, 192], sizes = [8, 32], strides = [1, 1]} : vector<8x256xf32> to vector<8x32xf32>
    %265 = tpu.concatenate %263, %264 in 1 : vector<8x32xf32>, vector<8x32xf32> -> vector<8x64xf32>
    %266 = math.tanh %265 : vector<8x64xf32>
    %267 = vector.extract_strided_slice %242 {offsets = [0, 96], sizes = [8, 32], strides = [1, 1]} : vector<8x256xf32> to vector<8x32xf32>
    %268 = vector.extract_strided_slice %242 {offsets = [0, 224], sizes = [8, 32], strides = [1, 1]} : vector<8x256xf32> to vector<8x32xf32>
    %269 = tpu.concatenate %267, %268 in 1 : vector<8x32xf32>, vector<8x32xf32> -> vector<8x64xf32>
    %cst_91 = arith.constant 5.000000e-01 : f32
    %270 = vector.broadcast %cst_91 : f32 to vector<8x64xf32>
    %271 = arith.mulf %270, %269 : vector<8x64xf32>
    %272 = math.tanh %271 : vector<8x64xf32>
    %cst_92 = arith.constant 5.000000e-01 : f32
    %273 = vector.broadcast %cst_92 : f32 to vector<8x64xf32>
    %274 = arith.mulf %273, %272 : vector<8x64xf32>
    %cst_93 = arith.constant 5.000000e-01 : f32
    %275 = vector.broadcast %cst_93 : f32 to vector<8x64xf32>
    %276 = arith.addf %274, %275 : vector<8x64xf32>
    %277 = arith.mulf %262, %214 : vector<8x64xf32>
    %278 = arith.mulf %252, %266 : vector<8x64xf32>
    %279 = arith.addf %277, %278 : vector<8x64xf32>
    %280 = math.tanh %279 : vector<8x64xf32>
    %281 = arith.mulf %276, %280 : vector<8x64xf32>
    %282 = arith.index_cast %230 : i32 to index
    %c0_94 = arith.constant 0 : index
    %283 = vector.load %arg6[%282, %c0_94] : memref<64x1xf32, #tpu.memory_space<vmem>>, vector<8x1xf32>
    %284 = arith.index_cast %233 : i32 to index
    %c0_95 = arith.constant 0 : index
    %285 = vector.load %arg6[%284, %c0_95] : memref<64x1xf32, #tpu.memory_space<vmem>>, vector<8x1xf32>
    %286 = vector.extract_strided_slice %281 {offsets = [0, 0], sizes = [8, 32], strides = [1, 1]} : vector<8x64xf32> to vector<8x32xf32>
    %287 = vector.broadcast %283 : vector<8x1xf32> to vector<8x32xf32>
    %288 = arith.mulf %287, %286 : vector<8x32xf32>
    %289 = arith.addf %224, %288 : vector<8x32xf32>
    %290 = vector.extract_strided_slice %281 {offsets = [0, 32], sizes = [8, 32], strides = [1, 1]} : vector<8x64xf32> to vector<8x32xf32>
    %291 = vector.broadcast %285 : vector<8x1xf32> to vector<8x32xf32>
    %292 = arith.mulf %291, %290 : vector<8x32xf32>
    %293 = arith.addf %228, %292 : vector<8x32xf32>
    %c4_i32 = arith.constant 4 : i32
    %c8_i32_96 = arith.constant 8 : i32
    %294 = arith.muli %c4_i32, %c8_i32_96 : i32
    %295 = tpu.assume_multiple %294, 8 : i32
    %c7_i32_97 = arith.constant 7 : i32
    %296 = arith.subi %c7_i32_97, %c4_i32 : i32
    %c8_i32_98 = arith.constant 8 : i32
    %297 = arith.muli %296, %c8_i32_98 : i32
    %298 = tpu.assume_multiple %297, 8 : i32
    %299 = arith.index_cast %295 : i32 to index
    %c0_99 = arith.constant 0 : index
    %300 = vector.load %arg12[%299, %c0_99] : memref<64x256xf32, #tpu.memory_space<vmem>>, vector<8x256xf32>
    %301 = arith.index_cast %298 : i32 to index
    %c0_100 = arith.constant 0 : index
    %302 = vector.load %arg12[%301, %c0_100] : memref<64x256xf32, #tpu.memory_space<vmem>>, vector<8x256xf32>
    %303 = vector.extract_strided_slice %300 {offsets = [0, 0], sizes = [8, 128], strides = [1, 1]} : vector<8x256xf32> to vector<8x128xf32>
    %304 = vector.extract_strided_slice %302 {offsets = [0, 128], sizes = [8, 128], strides = [1, 1]} : vector<8x256xf32> to vector<8x128xf32>
    %305 = tpu.concatenate %303, %304 in 1 : vector<8x128xf32>, vector<8x128xf32> -> vector<8x256xf32>
    %cst_101 = arith.constant dense<0.000000e+00> : vector<8x256xf32>
    %306 = tpu.matmul %281, %3, %cst_101 {dimension_numbers = #tpu.dot_dimension_numbers<[1], [0], [0], [1], [0, 0, 1, 1], [], []>} : vector<8x64xf32>, vector<64x256xf32>, vector<8x256xf32> -> vector<8x256xf32>
    %307 = arith.addf %305, %306 : vector<8x256xf32>
    %308 = vector.extract_strided_slice %307 {offsets = [0, 0], sizes = [8, 32], strides = [1, 1]} : vector<8x256xf32> to vector<8x32xf32>
    %309 = vector.extract_strided_slice %307 {offsets = [0, 128], sizes = [8, 32], strides = [1, 1]} : vector<8x256xf32> to vector<8x32xf32>
    %310 = tpu.concatenate %308, %309 in 1 : vector<8x32xf32>, vector<8x32xf32> -> vector<8x64xf32>
    %cst_102 = arith.constant 5.000000e-01 : f32
    %311 = vector.broadcast %cst_102 : f32 to vector<8x64xf32>
    %312 = arith.mulf %311, %310 : vector<8x64xf32>
    %313 = math.tanh %312 : vector<8x64xf32>
    %cst_103 = arith.constant 5.000000e-01 : f32
    %314 = vector.broadcast %cst_103 : f32 to vector<8x64xf32>
    %315 = arith.mulf %314, %313 : vector<8x64xf32>
    %cst_104 = arith.constant 5.000000e-01 : f32
    %316 = vector.broadcast %cst_104 : f32 to vector<8x64xf32>
    %317 = arith.addf %315, %316 : vector<8x64xf32>
    %318 = vector.extract_strided_slice %307 {offsets = [0, 32], sizes = [8, 32], strides = [1, 1]} : vector<8x256xf32> to vector<8x32xf32>
    %319 = vector.extract_strided_slice %307 {offsets = [0, 160], sizes = [8, 32], strides = [1, 1]} : vector<8x256xf32> to vector<8x32xf32>
    %320 = tpu.concatenate %318, %319 in 1 : vector<8x32xf32>, vector<8x32xf32> -> vector<8x64xf32>
    %cst_105 = arith.constant 5.000000e-01 : f32
    %321 = vector.broadcast %cst_105 : f32 to vector<8x64xf32>
    %322 = arith.mulf %321, %320 : vector<8x64xf32>
    %323 = math.tanh %322 : vector<8x64xf32>
    %cst_106 = arith.constant 5.000000e-01 : f32
    %324 = vector.broadcast %cst_106 : f32 to vector<8x64xf32>
    %325 = arith.mulf %324, %323 : vector<8x64xf32>
    %cst_107 = arith.constant 5.000000e-01 : f32
    %326 = vector.broadcast %cst_107 : f32 to vector<8x64xf32>
    %327 = arith.addf %325, %326 : vector<8x64xf32>
    %328 = vector.extract_strided_slice %307 {offsets = [0, 64], sizes = [8, 32], strides = [1, 1]} : vector<8x256xf32> to vector<8x32xf32>
    %329 = vector.extract_strided_slice %307 {offsets = [0, 192], sizes = [8, 32], strides = [1, 1]} : vector<8x256xf32> to vector<8x32xf32>
    %330 = tpu.concatenate %328, %329 in 1 : vector<8x32xf32>, vector<8x32xf32> -> vector<8x64xf32>
    %331 = math.tanh %330 : vector<8x64xf32>
    %332 = vector.extract_strided_slice %307 {offsets = [0, 96], sizes = [8, 32], strides = [1, 1]} : vector<8x256xf32> to vector<8x32xf32>
    %333 = vector.extract_strided_slice %307 {offsets = [0, 224], sizes = [8, 32], strides = [1, 1]} : vector<8x256xf32> to vector<8x32xf32>
    %334 = tpu.concatenate %332, %333 in 1 : vector<8x32xf32>, vector<8x32xf32> -> vector<8x64xf32>
    %cst_108 = arith.constant 5.000000e-01 : f32
    %335 = vector.broadcast %cst_108 : f32 to vector<8x64xf32>
    %336 = arith.mulf %335, %334 : vector<8x64xf32>
    %337 = math.tanh %336 : vector<8x64xf32>
    %cst_109 = arith.constant 5.000000e-01 : f32
    %338 = vector.broadcast %cst_109 : f32 to vector<8x64xf32>
    %339 = arith.mulf %338, %337 : vector<8x64xf32>
    %cst_110 = arith.constant 5.000000e-01 : f32
    %340 = vector.broadcast %cst_110 : f32 to vector<8x64xf32>
    %341 = arith.addf %339, %340 : vector<8x64xf32>
    %342 = arith.mulf %327, %279 : vector<8x64xf32>
    %343 = arith.mulf %317, %331 : vector<8x64xf32>
    %344 = arith.addf %342, %343 : vector<8x64xf32>
    %345 = math.tanh %344 : vector<8x64xf32>
    %346 = arith.mulf %341, %345 : vector<8x64xf32>
    %347 = arith.index_cast %295 : i32 to index
    %c0_111 = arith.constant 0 : index
    %348 = vector.load %arg6[%347, %c0_111] : memref<64x1xf32, #tpu.memory_space<vmem>>, vector<8x1xf32>
    %349 = arith.index_cast %298 : i32 to index
    %c0_112 = arith.constant 0 : index
    %350 = vector.load %arg6[%349, %c0_112] : memref<64x1xf32, #tpu.memory_space<vmem>>, vector<8x1xf32>
    %351 = vector.extract_strided_slice %346 {offsets = [0, 0], sizes = [8, 32], strides = [1, 1]} : vector<8x64xf32> to vector<8x32xf32>
    %352 = vector.broadcast %348 : vector<8x1xf32> to vector<8x32xf32>
    %353 = arith.mulf %352, %351 : vector<8x32xf32>
    %354 = arith.addf %289, %353 : vector<8x32xf32>
    %355 = vector.extract_strided_slice %346 {offsets = [0, 32], sizes = [8, 32], strides = [1, 1]} : vector<8x64xf32> to vector<8x32xf32>
    %356 = vector.broadcast %350 : vector<8x1xf32> to vector<8x32xf32>
    %357 = arith.mulf %356, %355 : vector<8x32xf32>
    %358 = arith.addf %293, %357 : vector<8x32xf32>
    %c5_i32 = arith.constant 5 : i32
    %c8_i32_113 = arith.constant 8 : i32
    %359 = arith.muli %c5_i32, %c8_i32_113 : i32
    %360 = tpu.assume_multiple %359, 8 : i32
    %c7_i32_114 = arith.constant 7 : i32
    %361 = arith.subi %c7_i32_114, %c5_i32 : i32
    %c8_i32_115 = arith.constant 8 : i32
    %362 = arith.muli %361, %c8_i32_115 : i32
    %363 = tpu.assume_multiple %362, 8 : i32
    %364 = arith.index_cast %360 : i32 to index
    %c0_116 = arith.constant 0 : index
    %365 = vector.load %arg12[%364, %c0_116] : memref<64x256xf32, #tpu.memory_space<vmem>>, vector<8x256xf32>
    %366 = arith.index_cast %363 : i32 to index
    %c0_117 = arith.constant 0 : index
    %367 = vector.load %arg12[%366, %c0_117] : memref<64x256xf32, #tpu.memory_space<vmem>>, vector<8x256xf32>
    %368 = vector.extract_strided_slice %365 {offsets = [0, 0], sizes = [8, 128], strides = [1, 1]} : vector<8x256xf32> to vector<8x128xf32>
    %369 = vector.extract_strided_slice %367 {offsets = [0, 128], sizes = [8, 128], strides = [1, 1]} : vector<8x256xf32> to vector<8x128xf32>
    %370 = tpu.concatenate %368, %369 in 1 : vector<8x128xf32>, vector<8x128xf32> -> vector<8x256xf32>
    %cst_118 = arith.constant dense<0.000000e+00> : vector<8x256xf32>
    %371 = tpu.matmul %346, %3, %cst_118 {dimension_numbers = #tpu.dot_dimension_numbers<[1], [0], [0], [1], [0, 0, 1, 1], [], []>} : vector<8x64xf32>, vector<64x256xf32>, vector<8x256xf32> -> vector<8x256xf32>
    %372 = arith.addf %370, %371 : vector<8x256xf32>
    %373 = vector.extract_strided_slice %372 {offsets = [0, 0], sizes = [8, 32], strides = [1, 1]} : vector<8x256xf32> to vector<8x32xf32>
    %374 = vector.extract_strided_slice %372 {offsets = [0, 128], sizes = [8, 32], strides = [1, 1]} : vector<8x256xf32> to vector<8x32xf32>
    %375 = tpu.concatenate %373, %374 in 1 : vector<8x32xf32>, vector<8x32xf32> -> vector<8x64xf32>
    %cst_119 = arith.constant 5.000000e-01 : f32
    %376 = vector.broadcast %cst_119 : f32 to vector<8x64xf32>
    %377 = arith.mulf %376, %375 : vector<8x64xf32>
    %378 = math.tanh %377 : vector<8x64xf32>
    %cst_120 = arith.constant 5.000000e-01 : f32
    %379 = vector.broadcast %cst_120 : f32 to vector<8x64xf32>
    %380 = arith.mulf %379, %378 : vector<8x64xf32>
    %cst_121 = arith.constant 5.000000e-01 : f32
    %381 = vector.broadcast %cst_121 : f32 to vector<8x64xf32>
    %382 = arith.addf %380, %381 : vector<8x64xf32>
    %383 = vector.extract_strided_slice %372 {offsets = [0, 32], sizes = [8, 32], strides = [1, 1]} : vector<8x256xf32> to vector<8x32xf32>
    %384 = vector.extract_strided_slice %372 {offsets = [0, 160], sizes = [8, 32], strides = [1, 1]} : vector<8x256xf32> to vector<8x32xf32>
    %385 = tpu.concatenate %383, %384 in 1 : vector<8x32xf32>, vector<8x32xf32> -> vector<8x64xf32>
    %cst_122 = arith.constant 5.000000e-01 : f32
    %386 = vector.broadcast %cst_122 : f32 to vector<8x64xf32>
    %387 = arith.mulf %386, %385 : vector<8x64xf32>
    %388 = math.tanh %387 : vector<8x64xf32>
    %cst_123 = arith.constant 5.000000e-01 : f32
    %389 = vector.broadcast %cst_123 : f32 to vector<8x64xf32>
    %390 = arith.mulf %389, %388 : vector<8x64xf32>
    %cst_124 = arith.constant 5.000000e-01 : f32
    %391 = vector.broadcast %cst_124 : f32 to vector<8x64xf32>
    %392 = arith.addf %390, %391 : vector<8x64xf32>
    %393 = vector.extract_strided_slice %372 {offsets = [0, 64], sizes = [8, 32], strides = [1, 1]} : vector<8x256xf32> to vector<8x32xf32>
    %394 = vector.extract_strided_slice %372 {offsets = [0, 192], sizes = [8, 32], strides = [1, 1]} : vector<8x256xf32> to vector<8x32xf32>
    %395 = tpu.concatenate %393, %394 in 1 : vector<8x32xf32>, vector<8x32xf32> -> vector<8x64xf32>
    %396 = math.tanh %395 : vector<8x64xf32>
    %397 = vector.extract_strided_slice %372 {offsets = [0, 96], sizes = [8, 32], strides = [1, 1]} : vector<8x256xf32> to vector<8x32xf32>
    %398 = vector.extract_strided_slice %372 {offsets = [0, 224], sizes = [8, 32], strides = [1, 1]} : vector<8x256xf32> to vector<8x32xf32>
    %399 = tpu.concatenate %397, %398 in 1 : vector<8x32xf32>, vector<8x32xf32> -> vector<8x64xf32>
    %cst_125 = arith.constant 5.000000e-01 : f32
    %400 = vector.broadcast %cst_125 : f32 to vector<8x64xf32>
    %401 = arith.mulf %400, %399 : vector<8x64xf32>
    %402 = math.tanh %401 : vector<8x64xf32>
    %cst_126 = arith.constant 5.000000e-01 : f32
    %403 = vector.broadcast %cst_126 : f32 to vector<8x64xf32>
    %404 = arith.mulf %403, %402 : vector<8x64xf32>
    %cst_127 = arith.constant 5.000000e-01 : f32
    %405 = vector.broadcast %cst_127 : f32 to vector<8x64xf32>
    %406 = arith.addf %404, %405 : vector<8x64xf32>
    %407 = arith.mulf %392, %344 : vector<8x64xf32>
    %408 = arith.mulf %382, %396 : vector<8x64xf32>
    %409 = arith.addf %407, %408 : vector<8x64xf32>
    %410 = math.tanh %409 : vector<8x64xf32>
    %411 = arith.mulf %406, %410 : vector<8x64xf32>
    %412 = arith.index_cast %360 : i32 to index
    %c0_128 = arith.constant 0 : index
    %413 = vector.load %arg6[%412, %c0_128] : memref<64x1xf32, #tpu.memory_space<vmem>>, vector<8x1xf32>
    %414 = arith.index_cast %363 : i32 to index
    %c0_129 = arith.constant 0 : index
    %415 = vector.load %arg6[%414, %c0_129] : memref<64x1xf32, #tpu.memory_space<vmem>>, vector<8x1xf32>
    %416 = vector.extract_strided_slice %411 {offsets = [0, 0], sizes = [8, 32], strides = [1, 1]} : vector<8x64xf32> to vector<8x32xf32>
    %417 = vector.broadcast %413 : vector<8x1xf32> to vector<8x32xf32>
    %418 = arith.mulf %417, %416 : vector<8x32xf32>
    %419 = arith.addf %354, %418 : vector<8x32xf32>
    %420 = vector.extract_strided_slice %411 {offsets = [0, 32], sizes = [8, 32], strides = [1, 1]} : vector<8x64xf32> to vector<8x32xf32>
    %421 = vector.broadcast %415 : vector<8x1xf32> to vector<8x32xf32>
    %422 = arith.mulf %421, %420 : vector<8x32xf32>
    %423 = arith.addf %358, %422 : vector<8x32xf32>
    %c6_i32 = arith.constant 6 : i32
    %c8_i32_130 = arith.constant 8 : i32
    %424 = arith.muli %c6_i32, %c8_i32_130 : i32
    %425 = tpu.assume_multiple %424, 8 : i32
    %c7_i32_131 = arith.constant 7 : i32
    %426 = arith.subi %c7_i32_131, %c6_i32 : i32
    %c8_i32_132 = arith.constant 8 : i32
    %427 = arith.muli %426, %c8_i32_132 : i32
    %428 = tpu.assume_multiple %427, 8 : i32
    %429 = arith.index_cast %425 : i32 to index
    %c0_133 = arith.constant 0 : index
    %430 = vector.load %arg12[%429, %c0_133] : memref<64x256xf32, #tpu.memory_space<vmem>>, vector<8x256xf32>
    %431 = arith.index_cast %428 : i32 to index
    %c0_134 = arith.constant 0 : index
    %432 = vector.load %arg12[%431, %c0_134] : memref<64x256xf32, #tpu.memory_space<vmem>>, vector<8x256xf32>
    %433 = vector.extract_strided_slice %430 {offsets = [0, 0], sizes = [8, 128], strides = [1, 1]} : vector<8x256xf32> to vector<8x128xf32>
    %434 = vector.extract_strided_slice %432 {offsets = [0, 128], sizes = [8, 128], strides = [1, 1]} : vector<8x256xf32> to vector<8x128xf32>
    %435 = tpu.concatenate %433, %434 in 1 : vector<8x128xf32>, vector<8x128xf32> -> vector<8x256xf32>
    %cst_135 = arith.constant dense<0.000000e+00> : vector<8x256xf32>
    %436 = tpu.matmul %411, %3, %cst_135 {dimension_numbers = #tpu.dot_dimension_numbers<[1], [0], [0], [1], [0, 0, 1, 1], [], []>} : vector<8x64xf32>, vector<64x256xf32>, vector<8x256xf32> -> vector<8x256xf32>
    %437 = arith.addf %435, %436 : vector<8x256xf32>
    %438 = vector.extract_strided_slice %437 {offsets = [0, 0], sizes = [8, 32], strides = [1, 1]} : vector<8x256xf32> to vector<8x32xf32>
    %439 = vector.extract_strided_slice %437 {offsets = [0, 128], sizes = [8, 32], strides = [1, 1]} : vector<8x256xf32> to vector<8x32xf32>
    %440 = tpu.concatenate %438, %439 in 1 : vector<8x32xf32>, vector<8x32xf32> -> vector<8x64xf32>
    %cst_136 = arith.constant 5.000000e-01 : f32
    %441 = vector.broadcast %cst_136 : f32 to vector<8x64xf32>
    %442 = arith.mulf %441, %440 : vector<8x64xf32>
    %443 = math.tanh %442 : vector<8x64xf32>
    %cst_137 = arith.constant 5.000000e-01 : f32
    %444 = vector.broadcast %cst_137 : f32 to vector<8x64xf32>
    %445 = arith.mulf %444, %443 : vector<8x64xf32>
    %cst_138 = arith.constant 5.000000e-01 : f32
    %446 = vector.broadcast %cst_138 : f32 to vector<8x64xf32>
    %447 = arith.addf %445, %446 : vector<8x64xf32>
    %448 = vector.extract_strided_slice %437 {offsets = [0, 32], sizes = [8, 32], strides = [1, 1]} : vector<8x256xf32> to vector<8x32xf32>
    %449 = vector.extract_strided_slice %437 {offsets = [0, 160], sizes = [8, 32], strides = [1, 1]} : vector<8x256xf32> to vector<8x32xf32>
    %450 = tpu.concatenate %448, %449 in 1 : vector<8x32xf32>, vector<8x32xf32> -> vector<8x64xf32>
    %cst_139 = arith.constant 5.000000e-01 : f32
    %451 = vector.broadcast %cst_139 : f32 to vector<8x64xf32>
    %452 = arith.mulf %451, %450 : vector<8x64xf32>
    %453 = math.tanh %452 : vector<8x64xf32>
    %cst_140 = arith.constant 5.000000e-01 : f32
    %454 = vector.broadcast %cst_140 : f32 to vector<8x64xf32>
    %455 = arith.mulf %454, %453 : vector<8x64xf32>
    %cst_141 = arith.constant 5.000000e-01 : f32
    %456 = vector.broadcast %cst_141 : f32 to vector<8x64xf32>
    %457 = arith.addf %455, %456 : vector<8x64xf32>
    %458 = vector.extract_strided_slice %437 {offsets = [0, 64], sizes = [8, 32], strides = [1, 1]} : vector<8x256xf32> to vector<8x32xf32>
    %459 = vector.extract_strided_slice %437 {offsets = [0, 192], sizes = [8, 32], strides = [1, 1]} : vector<8x256xf32> to vector<8x32xf32>
    %460 = tpu.concatenate %458, %459 in 1 : vector<8x32xf32>, vector<8x32xf32> -> vector<8x64xf32>
    %461 = math.tanh %460 : vector<8x64xf32>
    %462 = vector.extract_strided_slice %437 {offsets = [0, 96], sizes = [8, 32], strides = [1, 1]} : vector<8x256xf32> to vector<8x32xf32>
    %463 = vector.extract_strided_slice %437 {offsets = [0, 224], sizes = [8, 32], strides = [1, 1]} : vector<8x256xf32> to vector<8x32xf32>
    %464 = tpu.concatenate %462, %463 in 1 : vector<8x32xf32>, vector<8x32xf32> -> vector<8x64xf32>
    %cst_142 = arith.constant 5.000000e-01 : f32
    %465 = vector.broadcast %cst_142 : f32 to vector<8x64xf32>
    %466 = arith.mulf %465, %464 : vector<8x64xf32>
    %467 = math.tanh %466 : vector<8x64xf32>
    %cst_143 = arith.constant 5.000000e-01 : f32
    %468 = vector.broadcast %cst_143 : f32 to vector<8x64xf32>
    %469 = arith.mulf %468, %467 : vector<8x64xf32>
    %cst_144 = arith.constant 5.000000e-01 : f32
    %470 = vector.broadcast %cst_144 : f32 to vector<8x64xf32>
    %471 = arith.addf %469, %470 : vector<8x64xf32>
    %472 = arith.mulf %457, %409 : vector<8x64xf32>
    %473 = arith.mulf %447, %461 : vector<8x64xf32>
    %474 = arith.addf %472, %473 : vector<8x64xf32>
    %475 = math.tanh %474 : vector<8x64xf32>
    %476 = arith.mulf %471, %475 : vector<8x64xf32>
    %477 = arith.index_cast %425 : i32 to index
    %c0_145 = arith.constant 0 : index
    %478 = vector.load %arg6[%477, %c0_145] : memref<64x1xf32, #tpu.memory_space<vmem>>, vector<8x1xf32>
    %479 = arith.index_cast %428 : i32 to index
    %c0_146 = arith.constant 0 : index
    %480 = vector.load %arg6[%479, %c0_146] : memref<64x1xf32, #tpu.memory_space<vmem>>, vector<8x1xf32>
    %481 = vector.extract_strided_slice %476 {offsets = [0, 0], sizes = [8, 32], strides = [1, 1]} : vector<8x64xf32> to vector<8x32xf32>
    %482 = vector.broadcast %478 : vector<8x1xf32> to vector<8x32xf32>
    %483 = arith.mulf %482, %481 : vector<8x32xf32>
    %484 = arith.addf %419, %483 : vector<8x32xf32>
    %485 = vector.extract_strided_slice %476 {offsets = [0, 32], sizes = [8, 32], strides = [1, 1]} : vector<8x64xf32> to vector<8x32xf32>
    %486 = vector.broadcast %480 : vector<8x1xf32> to vector<8x32xf32>
    %487 = arith.mulf %486, %485 : vector<8x32xf32>
    %488 = arith.addf %423, %487 : vector<8x32xf32>
    %c7_i32_147 = arith.constant 7 : i32
    %c8_i32_148 = arith.constant 8 : i32
    %489 = arith.muli %c7_i32_147, %c8_i32_148 : i32
    %490 = tpu.assume_multiple %489, 8 : i32
    %c7_i32_149 = arith.constant 7 : i32
    %491 = arith.subi %c7_i32_149, %c7_i32_147 : i32
    %c8_i32_150 = arith.constant 8 : i32
    %492 = arith.muli %491, %c8_i32_150 : i32
    %493 = tpu.assume_multiple %492, 8 : i32
    %494 = arith.index_cast %490 : i32 to index
    %c0_151 = arith.constant 0 : index
    %495 = vector.load %arg12[%494, %c0_151] : memref<64x256xf32, #tpu.memory_space<vmem>>, vector<8x256xf32>
    %496 = arith.index_cast %493 : i32 to index
    %c0_152 = arith.constant 0 : index
    %497 = vector.load %arg12[%496, %c0_152] : memref<64x256xf32, #tpu.memory_space<vmem>>, vector<8x256xf32>
    %498 = vector.extract_strided_slice %495 {offsets = [0, 0], sizes = [8, 128], strides = [1, 1]} : vector<8x256xf32> to vector<8x128xf32>
    %499 = vector.extract_strided_slice %497 {offsets = [0, 128], sizes = [8, 128], strides = [1, 1]} : vector<8x256xf32> to vector<8x128xf32>
    %500 = tpu.concatenate %498, %499 in 1 : vector<8x128xf32>, vector<8x128xf32> -> vector<8x256xf32>
    %cst_153 = arith.constant dense<0.000000e+00> : vector<8x256xf32>
    %501 = tpu.matmul %476, %3, %cst_153 {dimension_numbers = #tpu.dot_dimension_numbers<[1], [0], [0], [1], [0, 0, 1, 1], [], []>} : vector<8x64xf32>, vector<64x256xf32>, vector<8x256xf32> -> vector<8x256xf32>
    %502 = arith.addf %500, %501 : vector<8x256xf32>
    %503 = vector.extract_strided_slice %502 {offsets = [0, 0], sizes = [8, 32], strides = [1, 1]} : vector<8x256xf32> to vector<8x32xf32>
    %504 = vector.extract_strided_slice %502 {offsets = [0, 128], sizes = [8, 32], strides = [1, 1]} : vector<8x256xf32> to vector<8x32xf32>
    %505 = tpu.concatenate %503, %504 in 1 : vector<8x32xf32>, vector<8x32xf32> -> vector<8x64xf32>
    %cst_154 = arith.constant 5.000000e-01 : f32
    %506 = vector.broadcast %cst_154 : f32 to vector<8x64xf32>
    %507 = arith.mulf %506, %505 : vector<8x64xf32>
    %508 = math.tanh %507 : vector<8x64xf32>
    %cst_155 = arith.constant 5.000000e-01 : f32
    %509 = vector.broadcast %cst_155 : f32 to vector<8x64xf32>
    %510 = arith.mulf %509, %508 : vector<8x64xf32>
    %cst_156 = arith.constant 5.000000e-01 : f32
    %511 = vector.broadcast %cst_156 : f32 to vector<8x64xf32>
    %512 = arith.addf %510, %511 : vector<8x64xf32>
    %513 = vector.extract_strided_slice %502 {offsets = [0, 32], sizes = [8, 32], strides = [1, 1]} : vector<8x256xf32> to vector<8x32xf32>
    %514 = vector.extract_strided_slice %502 {offsets = [0, 160], sizes = [8, 32], strides = [1, 1]} : vector<8x256xf32> to vector<8x32xf32>
    %515 = tpu.concatenate %513, %514 in 1 : vector<8x32xf32>, vector<8x32xf32> -> vector<8x64xf32>
    %cst_157 = arith.constant 5.000000e-01 : f32
    %516 = vector.broadcast %cst_157 : f32 to vector<8x64xf32>
    %517 = arith.mulf %516, %515 : vector<8x64xf32>
    %518 = math.tanh %517 : vector<8x64xf32>
    %cst_158 = arith.constant 5.000000e-01 : f32
    %519 = vector.broadcast %cst_158 : f32 to vector<8x64xf32>
    %520 = arith.mulf %519, %518 : vector<8x64xf32>
    %cst_159 = arith.constant 5.000000e-01 : f32
    %521 = vector.broadcast %cst_159 : f32 to vector<8x64xf32>
    %522 = arith.addf %520, %521 : vector<8x64xf32>
    %523 = vector.extract_strided_slice %502 {offsets = [0, 64], sizes = [8, 32], strides = [1, 1]} : vector<8x256xf32> to vector<8x32xf32>
    %524 = vector.extract_strided_slice %502 {offsets = [0, 192], sizes = [8, 32], strides = [1, 1]} : vector<8x256xf32> to vector<8x32xf32>
    %525 = tpu.concatenate %523, %524 in 1 : vector<8x32xf32>, vector<8x32xf32> -> vector<8x64xf32>
    %526 = math.tanh %525 : vector<8x64xf32>
    %527 = vector.extract_strided_slice %502 {offsets = [0, 96], sizes = [8, 32], strides = [1, 1]} : vector<8x256xf32> to vector<8x32xf32>
    %528 = vector.extract_strided_slice %502 {offsets = [0, 224], sizes = [8, 32], strides = [1, 1]} : vector<8x256xf32> to vector<8x32xf32>
    %529 = tpu.concatenate %527, %528 in 1 : vector<8x32xf32>, vector<8x32xf32> -> vector<8x64xf32>
    %cst_160 = arith.constant 5.000000e-01 : f32
    %530 = vector.broadcast %cst_160 : f32 to vector<8x64xf32>
    %531 = arith.mulf %530, %529 : vector<8x64xf32>
    %532 = math.tanh %531 : vector<8x64xf32>
    %cst_161 = arith.constant 5.000000e-01 : f32
    %533 = vector.broadcast %cst_161 : f32 to vector<8x64xf32>
    %534 = arith.mulf %533, %532 : vector<8x64xf32>
    %cst_162 = arith.constant 5.000000e-01 : f32
    %535 = vector.broadcast %cst_162 : f32 to vector<8x64xf32>
    %536 = arith.addf %534, %535 : vector<8x64xf32>
    %537 = arith.mulf %522, %474 : vector<8x64xf32>
    %538 = arith.mulf %512, %526 : vector<8x64xf32>
    %539 = arith.addf %537, %538 : vector<8x64xf32>
    %540 = math.tanh %539 : vector<8x64xf32>
    %541 = arith.mulf %536, %540 : vector<8x64xf32>
    %542 = arith.index_cast %490 : i32 to index
    %c0_163 = arith.constant 0 : index
    %543 = vector.load %arg6[%542, %c0_163] : memref<64x1xf32, #tpu.memory_space<vmem>>, vector<8x1xf32>
    %544 = arith.index_cast %493 : i32 to index
    %c0_164 = arith.constant 0 : index
    %545 = vector.load %arg6[%544, %c0_164] : memref<64x1xf32, #tpu.memory_space<vmem>>, vector<8x1xf32>
    %546 = vector.extract_strided_slice %541 {offsets = [0, 0], sizes = [8, 32], strides = [1, 1]} : vector<8x64xf32> to vector<8x32xf32>
    %547 = vector.broadcast %543 : vector<8x1xf32> to vector<8x32xf32>
    %548 = arith.mulf %547, %546 : vector<8x32xf32>
    %549 = arith.addf %484, %548 : vector<8x32xf32>
    %550 = vector.extract_strided_slice %541 {offsets = [0, 32], sizes = [8, 32], strides = [1, 1]} : vector<8x64xf32> to vector<8x32xf32>
    %551 = vector.broadcast %545 : vector<8x1xf32> to vector<8x32xf32>
    %552 = arith.mulf %551, %550 : vector<8x32xf32>
    %553 = arith.addf %488, %552 : vector<8x32xf32>
    %c8_i32_165 = arith.constant 8 : i32
    %554 = tpu.concatenate %549, %553 in 1 : vector<8x32xf32>, vector<8x32xf32> -> vector<8x64xf32>
    %555 = vector.broadcast %31 : vector<8x1xf32> to vector<8x64xf32>
    %556 = arith.mulf %554, %555 : vector<8x64xf32>
    %c0_166 = arith.constant 0 : index
    %c0_167 = arith.constant 0 : index
    %557 = vector.load %arg11[%c0_166, %c0_167] : memref<8x64xf32, #tpu.memory_space<vmem>>, vector<8x64xf32>
    tpu.vector_store %arg11[%c0_166, %c0_167], %556 {strides = array<i32>} : memref<8x64xf32, #tpu.memory_space<vmem>>, vector<8x64xf32>,
    return
  }
  func.func @transform_0(%arg0: i32) -> (i32, i32) {
    %c0_i32 = arith.constant 0 : i32
    %c0_i32_0 = arith.constant 0 : i32
    return %arg0, %c0_i32 : i32, i32
  }
  func.func @transform_1(%arg0: i32) -> (i32, i32) {
    %c0_i32 = arith.constant 0 : i32
    %c0_i32_0 = arith.constant 0 : i32
    %c0_i32_1 = arith.constant 0 : i32
    return %c0_i32, %c0_i32_0 : i32, i32
  }
  func.func @transform_2(%arg0: i32) -> (i32, i32) {
    %c0_i32 = arith.constant 0 : i32
    %c0_i32_0 = arith.constant 0 : i32
    %c0_i32_1 = arith.constant 0 : i32
    return %c0_i32, %c0_i32_0 : i32, i32
  }
  func.func @transform_3(%arg0: i32) -> (i32, i32) {
    %c0_i32 = arith.constant 0 : i32
    %c0_i32_0 = arith.constant 0 : i32
    %c0_i32_1 = arith.constant 0 : i32
    return %c0_i32, %c0_i32_0 : i32, i32
  }
  func.func @transform_4(%arg0: i32) -> (i32, i32) {
    %c0_i32 = arith.constant 0 : i32
    %c0_i32_0 = arith.constant 0 : i32
    %c0_i32_1 = arith.constant 0 : i32
    return %c0_i32, %c0_i32_0 : i32, i32
  }
  func.func @transform_5(%arg0: i32) -> (i32, i32) {
    %c0_i32 = arith.constant 0 : i32
    %c0_i32_0 = arith.constant 0 : i32
    return %arg0, %c0_i32 : i32, i32
  }
  func.func @transform_6(%arg0: i32) -> (i32, i32) {
    %c0_i32 = arith.constant 0 : i32
    %c0_i32_0 = arith.constant 0 : i32
    %c0_i32_1 = arith.constant 0 : i32
    return %c0_i32, %c0_i32_0 : i32, i32
  }
  func.func @transform_7(%arg0: i32) -> (i32, i32) {
    %c0_i32 = arith.constant 0 : i32
    %c0_i32_0 = arith.constant 0 : i32
    %c0_i32_1 = arith.constant 0 : i32
    return %c0_i32, %c0_i32_0 : i32, i32
  }
  func.func @transform_8(%arg0: i32) -> (i32, i32) {
    %c0_i32 = arith.constant 0 : i32
    %c0_i32_0 = arith.constant 0 : i32
    %c0_i32_1 = arith.constant 0 : i32
    return %c0_i32, %c0_i32_0 : i32, i32
  }
  func.func @transform_9(%arg0: i32) -> (i32, i32) {
    %c0_i32 = arith.constant 0 : i32
    %c0_i32_0 = arith.constant 0 : i32
    return %arg0, %c0_i32 : i32, i32
  }
  func.func @transform_10(%arg0: i32) -> (i32, i32) {
    %c0_i32 = arith.constant 0 : i32
    %c0_i32_0 = arith.constant 0 : i32
    return %arg0, %c0_i32 : i32, i32
  }
}

</mosaic_0001>

<llo_original>
// kernel: tpu_custom_call.1
$region0: #{tpu_custom_call.1}
  #allocation0 [shape = 'u32[]', space=smem, size = 0x4, offset = 0x4, fixed_abs, tag = 'smem constant byte address 0x4 - core index']
  #allocation1 [shape = 'u32[144,128]{1,0:T(1,128)}', space=vmem, size = 0x12000, scoped, tag = 'internal scratch']
  #allocation2 [shape = 'f32[64,256]{1,0:T(8,128)}', space=vmem, size = 0x10000, scoped, tag = 'scratch operand']
  %s0 = inlined_call_operand.vmem [shape: f32[1024,8], index: 0, kind: input, shape index: {}]
  %s1 = inlined_call_operand.vmem [shape: f32[8,64], index: 1, kind: input, shape index: {}]
  %s2 = inlined_call_operand.vmem [shape: f32[1,64], index: 2, kind: input, shape index: {}]
  %s3 = inlined_call_operand.vmem [shape: f32[64,32], index: 3, kind: input, shape index: {}]
  %s4 = inlined_call_operand.vmem [shape: f32[1,32], index: 4, kind: input, shape index: {}]
  %s5 = inlined_call_operand.vmem [shape: f32[64,1], index: 5, kind: input, shape index: {}]
  %s6 = inlined_call_operand.vmem [shape: f32[32,256], index: 6, kind: input, shape index: {}]
  %s7 = inlined_call_operand.vmem [shape: f32[1,256], index: 7, kind: input, shape index: {}]
  %s8 = inlined_call_operand.vmem [shape: f32[64,256], index: 8, kind: input, shape index: {}]
  %s9 = inlined_call_operand.vmem [shape: f32[8,1], index: 9, kind: input, shape index: {}]
  %s10 = inlined_call_operand.hbm [shape: f32[8,64], index: 10, kind: output, shape index: {}]
  %s11 = sld [smem:[#allocation0]]
  $region50: #{tpu_custom_call.1} parent=0
    _
  %s13 = ssub.s32 1, %s11
  %s14 = scalar_select 0, %s13, %s11
  $region1: #{tpu_custom_call.1} parent=0
    #allocation3 [shape = 'u8[4096]{0}', space=vmem, size = 0x1000, scoped, tag = 'output window, operand 0, single buffered']
    #allocation4 [shape = 's32[1]{0}', space=sflag, size = 0x4, scoped, tag = 'scoped memory for tpu_custom_call.1']
    %15 = vsyncpa [#allocation4], 0
    // Predicated region
    $region2: #{tpu_custom_call.1} parent=1 // pred_check
      _
    $region3: #{tpu_custom_call.1} parent=1 // pred_check_branch
      %17 = sbr.rel (0) target = $region5
    $region4: #{tpu_custom_call.1} parent=1 // pred_region
      _
    $region5: #{tpu_custom_call.1} parent=1 // pred_fallthru
      _
    // Predicated region
    $region6: #{tpu_custom_call.1} parent=1 // pred_check
      _
    $region7: #{tpu_custom_call.1} parent=1 // pred_check_branch
      %19 = sbr.rel (0) target = $region9
    $region8: #{tpu_custom_call.1} parent=1 // pred_region
      _
    $region9: #{tpu_custom_call.1} parent=1 // pred_fallthru
      _
    // Predicated region
    $region10: #{tpu_custom_call.1} parent=1 // pred_check
      _
    $region11: #{tpu_custom_call.1} parent=1 // pred_check_branch
      %21 = sbr.rel (0) target = $region13
    $region12: #{tpu_custom_call.1} parent=1 // pred_region
      _
    $region13: #{tpu_custom_call.1} parent=1 // pred_fallthru
      _
    // Predicated region
    $region14: #{tpu_custom_call.1} parent=1 // pred_check
      _
    $region15: #{tpu_custom_call.1} parent=1 // pred_check_branch
      %23 = sbr.rel (0) target = $region17
    $region16: #{tpu_custom_call.1} parent=1 // pred_region
      _
    $region17: #{tpu_custom_call.1} parent=1 // pred_fallthru
      _
    // Predicated region
    $region18: #{tpu_custom_call.1} parent=1 // pred_check
      _
    $region19: #{tpu_custom_call.1} parent=1 // pred_check_branch
      %25 = sbr.rel (0) target = $region21
    $region20: #{tpu_custom_call.1} parent=1 // pred_region
      _
    $region21: #{tpu_custom_call.1} parent=1 // pred_fallthru
      _
    // Predicated region
    $region22: #{tpu_custom_call.1} parent=1 // pred_check
      _
    $region23: #{tpu_custom_call.1} parent=1 // pred_check_branch
      %27 = sbr.rel (0) target = $region25
    $region24: #{tpu_custom_call.1} parent=1 // pred_region
      _
    $region25: #{tpu_custom_call.1} parent=1 // pred_fallthru
      _
    // Predicated region
    $region26: #{tpu_custom_call.1} parent=1 // pred_check
      _
    $region27: #{tpu_custom_call.1} parent=1 // pred_check_branch
      %29 = sbr.rel (0) target = $region29
    $region28: #{tpu_custom_call.1} parent=1 // pred_region
      _
    $region29: #{tpu_custom_call.1} parent=1 // pred_fallthru
      _
    // Predicated region
    $region30: #{tpu_custom_call.1} parent=1 // pred_check
      _
    $region31: #{tpu_custom_call.1} parent=1 // pred_check_branch
      %31 = sbr.rel (0) target = $region33
    $region32: #{tpu_custom_call.1} parent=1 // pred_region
      _
    $region33: #{tpu_custom_call.1} parent=1 // pred_fallthru
      _
    // Predicated region
    $region34: #{tpu_custom_call.1} parent=1 // pred_check
      _
    $region35: #{tpu_custom_call.1} parent=1 // pred_check_branch
      %33 = sbr.rel (0) target = $region37
    $region36: #{tpu_custom_call.1} parent=1 // pred_region
      _
    $region37: #{tpu_custom_call.1} parent=1 // pred_fallthru
      _
    // Predicated region
    $region38: #{tpu_custom_call.1} parent=1 // pred_check
      _
    $region39: #{tpu_custom_call.1} parent=1 // pred_check_branch
      %35 = sbr.rel (0) target = $region41
    $region40: #{tpu_custom_call.1} parent=1 // pred_region
      _
    $region41: #{tpu_custom_call.1} parent=1 // pred_fallthru
      _
    %v36 = vld [vmem:[%s1] sm:$0xff]
    %v37 = vld [vmem:[%s3] sm:$0xff]
    %v38 = vld [vmem:[%s3 + $0x8] sm:$0xff]
    %v39 = vld [vmem:[%s3 + $0x10] sm:$0xff]
    %v40 = vld [vmem:[%s3 + $0x18] sm:$0xff]
    %v41 = vld [vmem:[%s3 + $0x20] sm:$0xff]
    %v42 = vld [vmem:[%s3 + $0x28] sm:$0xff]
    %v43 = vld [vmem:[%s3 + $0x30] sm:$0xff]
    %v44 = vld [vmem:[%s3 + $0x38] sm:$0xff]
    %v45 = vld [vmem:[%s6] sm:$0xff]
    %v46 = vld [vmem:[%s6 + $0x8] sm:$0xff]
    %v47 = vld [vmem:[%s6 + $0x10] sm:$0xff]
    %v48 = vld [vmem:[%s6 + $0x18] sm:$0xff]
    %v49 = vld [vmem:[%s6 + $0x20] sm:$0xff]
    %v50 = vld [vmem:[%s6 + $0x28] sm:$0xff]
    %v51 = vld [vmem:[%s6 + $0x30] sm:$0xff]
    %v52 = vld [vmem:[%s6 + $0x38] sm:$0xff]
    %v53 = vld [vmem:[%s8] sm:$0xff]
    %v54 = vld [vmem:[%s8 + $0x8] sm:$0xff]
    %v55 = vld [vmem:[%s8 + $0x10] sm:$0xff]
    %v56 = vld [vmem:[%s8 + $0x18] sm:$0xff]
    %v57 = vld [vmem:[%s8 + $0x20] sm:$0xff]
    %v58 = vld [vmem:[%s8 + $0x28] sm:$0xff]
    %v59 = vld [vmem:[%s8 + $0x30] sm:$0xff]
    %v60 = vld [vmem:[%s8 + $0x38] sm:$0xff]
    %v61 = vld [vmem:[%s8 + $0x40] sm:$0xff]
    %v62 = vld [vmem:[%s8 + $0x48] sm:$0xff]
    %v63 = vld [vmem:[%s8 + $0x50] sm:$0xff]
    %v64 = vld [vmem:[%s8 + $0x58] sm:$0xff]
    %v65 = vld [vmem:[%s8 + $0x60] sm:$0xff]
    %v66 = vld [vmem:[%s8 + $0x68] sm:$0xff]
    %v67 = vld [vmem:[%s8 + $0x70] sm:$0xff]
    %v68 = vld [vmem:[%s8 + $0x78] sm:$0xff]
    %v69 = vld [vmem:[%s0] sm:$0xff]
    %v70 = vld [vmem:[%s0 + $0x8] sm:$0xff]
    %v71 = vld [vmem:[%s0 + $0x10] sm:$0xff]
    %v72 = vld [vmem:[%s0 + $0x18] sm:$0xff]
    %v73 = vld [vmem:[%s0 + $0x20] sm:$0xff]
    %v74 = vld [vmem:[%s0 + $0x28] sm:$0xff]
    %v75 = vld [vmem:[%s0 + $0x30] sm:$0xff]
    %v76 = vld [vmem:[%s0 + $0x38] sm:$0xff]
    %v77 = vld [vmem:[%s0 + $0x40] sm:$0xff]
    %v78 = vld [vmem:[%s0 + $0x48] sm:$0xff]
    %v79 = vld [vmem:[%s0 + $0x50] sm:$0xff]
    %v80 = vld [vmem:[%s0 + $0x58] sm:$0xff]
    %v81 = vld [vmem:[%s0 + $0x60] sm:$0xff]
    %v82 = vld [vmem:[%s0 + $0x68] sm:$0xff]
    %v83 = vld [vmem:[%s0 + $0x70] sm:$0xff]
    %v84 = vld [vmem:[%s0 + $0x78] sm:$0xff]
    %v85 = vld [vmem:[%s0 + $0x80] sm:$0xff]
    %v86 = vld [vmem:[%s0 + $0x88] sm:$0xff]
    %v87 = vld [vmem:[%s0 + $0x90] sm:$0xff]
    %v88 = vld [vmem:[%s0 + $0x98] sm:$0xff]
    %v89 = vld [vmem:[%s0 + $0xa0] sm:$0xff]
    %v90 = vld [vmem:[%s0 + $0xa8] sm:$0xff]
    %v91 = vld [vmem:[%s0 + $0xb0] sm:$0xff]
    %v92 = vld [vmem:[%s0 + $0xb8] sm:$0xff]
    %v93 = vld [vmem:[%s0 + $0xc0] sm:$0xff]
    %v94 = vld [vmem:[%s0 + $0xc8] sm:$0xff]
    %v95 = vld [vmem:[%s0 + $0xd0] sm:$0xff]
    %v96 = vld [vmem:[%s0 + $0xd8] sm:$0xff]
    %v97 = vld [vmem:[%s0 + $0xe0] sm:$0xff]
    %v98 = vld [vmem:[%s0 + $0xe8] sm:$0xff]
    %v99 = vld [vmem:[%s0 + $0xf0] sm:$0xff]
    %v100 = vld [vmem:[%s0 + $0xf8] sm:$0xff]
    %v101 = vld [vmem:[%s0 + $0x100] sm:$0xff]
    %v102 = vld [vmem:[%s0 + $0x108] sm:$0xff]
    %v103 = vld [vmem:[%s0 + $0x110] sm:$0xff]
    %v104 = vld [vmem:[%s0 + $0x118] sm:$0xff]
    %v105 = vld [vmem:[%s0 + $0x120] sm:$0xff]
    %v106 = vld [vmem:[%s0 + $0x128] sm:$0xff]
    %v107 = vld [vmem:[%s0 + $0x130] sm:$0xff]
    %v108 = vld [vmem:[%s0 + $0x138] sm:$0xff]
    %v109 = vld [vmem:[%s0 + $0x140] sm:$0xff]
    %v110 = vld [vmem:[%s0 + $0x148] sm:$0xff]
    %v111 = vld [vmem:[%s0 + $0x150] sm:$0xff]
    %v112 = vld [vmem:[%s0 + $0x158] sm:$0xff]
    %v113 = vld [vmem:[%s0 + $0x160] sm:$0xff]
    %v114 = vld [vmem:[%s0 + $0x168] sm:$0xff]
    %v115 = vld [vmem:[%s0 + $0x170] sm:$0xff]
    %v116 = vld [vmem:[%s0 + $0x178] sm:$0xff]
    %v117 = vld [vmem:[%s0 + $0x180] sm:$0xff]
    %v118 = vld [vmem:[%s0 + $0x188] sm:$0xff]
    %v119 = vld [vmem:[%s0 + $0x190] sm:$0xff]
    %v120 = vld [vmem:[%s0 + $0x198] sm:$0xff]
    %v121 = vld [vmem:[%s0 + $0x1a0] sm:$0xff]
    %v122 = vld [vmem:[%s0 + $0x1a8] sm:$0xff]
    %v123 = vld [vmem:[%s0 + $0x1b0] sm:$0xff]
    %v124 = vld [vmem:[%s0 + $0x1b8] sm:$0xff]
    %v125 = vld [vmem:[%s0 + $0x1c0] sm:$0xff]
    %v126 = vld [vmem:[%s0 + $0x1c8] sm:$0xff]
    %v127 = vld [vmem:[%s0 + $0x1d0] sm:$0xff]
    %v128 = vld [vmem:[%s0 + $0x1d8] sm:$0xff]
    %v129 = vld [vmem:[%s0 + $0x1e0] sm:$0xff]
    %v130 = vld [vmem:[%s0 + $0x1e8] sm:$0xff]
    %v131 = vld [vmem:[%s0 + $0x1f0] sm:$0xff]
    %v132 = vld [vmem:[%s0 + $0x1f8] sm:$0xff]
    %v133 = vld [vmem:[%s0 + $0x200] sm:$0xff]
    %v134 = vld [vmem:[%s0 + $0x208] sm:$0xff]
    %v135 = vld [vmem:[%s0 + $0x210] sm:$0xff]
    %v136 = vld [vmem:[%s0 + $0x218] sm:$0xff]
    %v137 = vld [vmem:[%s0 + $0x220] sm:$0xff]
    %v138 = vld [vmem:[%s0 + $0x228] sm:$0xff]
    %v139 = vld [vmem:[%s0 + $0x230] sm:$0xff]
    %v140 = vld [vmem:[%s0 + $0x238] sm:$0xff]
    %v141 = vld [vmem:[%s0 + $0x240] sm:$0xff]
    %v142 = vld [vmem:[%s0 + $0x248] sm:$0xff]
    %v143 = vld [vmem:[%s0 + $0x250] sm:$0xff]
    %v144 = vld [vmem:[%s0 + $0x258] sm:$0xff]
    %v145 = vld [vmem:[%s0 + $0x260] sm:$0xff]
    %v146 = vld [vmem:[%s0 + $0x268] sm:$0xff]
    %v147 = vld [vmem:[%s0 + $0x270] sm:$0xff]
    %v148 = vld [vmem:[%s0 + $0x278] sm:$0xff]
    %v149 = vld [vmem:[%s0 + $0x280] sm:$0xff]
    %v150 = vld [vmem:[%s0 + $0x288] sm:$0xff]
    %v151 = vld [vmem:[%s0 + $0x290] sm:$0xff]
    %v152 = vld [vmem:[%s0 + $0x298] sm:$0xff]
    %v153 = vld [vmem:[%s0 + $0x2a0] sm:$0xff]
    %v154 = vld [vmem:[%s0 + $0x2a8] sm:$0xff]
    %v155 = vld [vmem:[%s0 + $0x2b0] sm:$0xff]
    %v156 = vld [vmem:[%s0 + $0x2b8] sm:$0xff]
    %v157 = vld [vmem:[%s0 + $0x2c0] sm:$0xff]
    %v158 = vld [vmem:[%s0 + $0x2c8] sm:$0xff]
    %v159 = vld [vmem:[%s0 + $0x2d0] sm:$0xff]
    %v160 = vld [vmem:[%s0 + $0x2d8] sm:$0xff]
    %v161 = vld [vmem:[%s0 + $0x2e0] sm:$0xff]
    %v162 = vld [vmem:[%s0 + $0x2e8] sm:$0xff]
    %v163 = vld [vmem:[%s0 + $0x2f0] sm:$0xff]
    %v164 = vld [vmem:[%s0 + $0x2f8] sm:$0xff]
    %v165 = vld [vmem:[%s0 + $0x300] sm:$0xff]
    %v166 = vld [vmem:[%s0 + $0x308] sm:$0xff]
    %v167 = vld [vmem:[%s0 + $0x310] sm:$0xff]
    %v168 = vld [vmem:[%s0 + $0x318] sm:$0xff]
    %v169 = vld [vmem:[%s0 + $0x320] sm:$0xff]
    %v170 = vld [vmem:[%s0 + $0x328] sm:$0xff]
    %v171 = vld [vmem:[%s0 + $0x330] sm:$0xff]
    %v172 = vld [vmem:[%s0 + $0x338] sm:$0xff]
    %v173 = vld [vmem:[%s0 + $0x340] sm:$0xff]
    %v174 = vld [vmem:[%s0 + $0x348] sm:$0xff]
    %v175 = vld [vmem:[%s0 + $0x350] sm:$0xff]
    %v176 = vld [vmem:[%s0 + $0x358] sm:$0xff]
    %v177 = vld [vmem:[%s0 + $0x360] sm:$0xff]
    %v178 = vld [vmem:[%s0 + $0x368] sm:$0xff]
    %v179 = vld [vmem:[%s0 + $0x370] sm:$0xff]
    %v180 = vld [vmem:[%s0 + $0x378] sm:$0xff]
    %v181 = vld [vmem:[%s0 + $0x380] sm:$0xff]
    %v182 = vld [vmem:[%s0 + $0x388] sm:$0xff]
    %v183 = vld [vmem:[%s0 + $0x390] sm:$0xff]
    %v184 = vld [vmem:[%s0 + $0x398] sm:$0xff]
    %v185 = vld [vmem:[%s0 + $0x3a0] sm:$0xff]
    %v186 = vld [vmem:[%s0 + $0x3a8] sm:$0xff]
    %v187 = vld [vmem:[%s0 + $0x3b0] sm:$0xff]
    %v188 = vld [vmem:[%s0 + $0x3b8] sm:$0xff]
    %v189 = vld [vmem:[%s0 + $0x3c0] sm:$0xff]
    %v190 = vld [vmem:[%s0 + $0x3c8] sm:$0xff]
    %v191 = vld [vmem:[%s0 + $0x3d0] sm:$0xff]
    %v192 = vld [vmem:[%s0 + $0x3d8] sm:$0xff]
    %v193 = vld [vmem:[%s0 + $0x3e0] sm:$0xff]
    %v194 = vld [vmem:[%s0 + $0x3e8] sm:$0xff]
    %v195 = vld [vmem:[%s0 + $0x3f0] sm:$0xff]
    %v196 = vld [vmem:[%s0 + $0x3f8] sm:$0xff]
    %v197 = vld [vmem:[%s2] sm:$0x1]
    %v199 = vlaneseq
    %v200 = vshrl.u32 %v199, 7
    %v201 = vsub.s32 0, %v200
    %v202 = vrot.slane %v197, %v201
    %vm204 = vcmask 64512
    %v206 = vsel %vm204, %v69, 0
    %v209 = vsel %vm204, %v70, 0
    %v212 = vsel %vm204, %v71, 0
    %v215 = vsel %vm204, %v72, 0
    %v218 = vsel %vm204, %v73, 0
    %v221 = vsel %vm204, %v74, 0
    %v224 = vsel %vm204, %v75, 0
    %v227 = vsel %vm204, %v76, 0
    %v230 = vsel %vm204, %v77, 0
    %v233 = vsel %vm204, %v78, 0
    %v236 = vsel %vm204, %v79, 0
    %v239 = vsel %vm204, %v80, 0
    %v242 = vsel %vm204, %v81, 0
    %v245 = vsel %vm204, %v82, 0
    %v248 = vsel %vm204, %v83, 0
    %v251 = vsel %vm204, %v84, 0
    %v254 = vsel %vm204, %v85, 0
    %v257 = vsel %vm204, %v86, 0
    %v260 = vsel %vm204, %v87, 0
    %v263 = vsel %vm204, %v88, 0
    %v266 = vsel %vm204, %v89, 0
    %v269 = vsel %vm204, %v90, 0
    %v272 = vsel %vm204, %v91, 0
    %v275 = vsel %vm204, %v92, 0
    %v278 = vsel %vm204, %v93, 0
    %v281 = vsel %vm204, %v94, 0
    %v284 = vsel %vm204, %v95, 0
    %v287 = vsel %vm204, %v96, 0
    %v290 = vsel %vm204, %v97, 0
    %v293 = vsel %vm204, %v98, 0
    %v296 = vsel %vm204, %v99, 0
    %v299 = vsel %vm204, %v100, 0
    %v302 = vsel %vm204, %v101, 0
    %v305 = vsel %vm204, %v102, 0
    %v308 = vsel %vm204, %v103, 0
    %v311 = vsel %vm204, %v104, 0
    %v314 = vsel %vm204, %v105, 0
    %v317 = vsel %vm204, %v106, 0
    %v320 = vsel %vm204, %v107, 0
    %v323 = vsel %vm204, %v108, 0
    %v326 = vsel %vm204, %v109, 0
    %v329 = vsel %vm204, %v110, 0
    %v332 = vsel %vm204, %v111, 0
    %v335 = vsel %vm204, %v112, 0
    %v338 = vsel %vm204, %v113, 0
    %v341 = vsel %vm204, %v114, 0
    %v344 = vsel %vm204, %v115, 0
    %v347 = vsel %vm204, %v116, 0
    %v350 = vsel %vm204, %v117, 0
    %v353 = vsel %vm204, %v118, 0
    %v356 = vsel %vm204, %v119, 0
    %v359 = vsel %vm204, %v120, 0
    %v362 = vsel %vm204, %v121, 0
    %v365 = vsel %vm204, %v122, 0
    %v368 = vsel %vm204, %v123, 0
    %v371 = vsel %vm204, %v124, 0
    %v374 = vsel %vm204, %v125, 0
    %v377 = vsel %vm204, %v126, 0
    %v380 = vsel %vm204, %v127, 0
    %v383 = vsel %vm204, %v128, 0
    %v386 = vsel %vm204, %v129, 0
    %v389 = vsel %vm204, %v130, 0
    %v392 = vsel %vm204, %v131, 0
    %v395 = vsel %vm204, %v132, 0
    %v398 = vsel %vm204, %v133, 0
    %v401 = vsel %vm204, %v134, 0
    %v404 = vsel %vm204, %v135, 0
    %v407 = vsel %vm204, %v136, 0
    %v410 = vsel %vm204, %v137, 0
    %v413 = vsel %vm204, %v138, 0
    %v416 = vsel %vm204, %v139, 0
    %v419 = vsel %vm204, %v140, 0
    %v422 = vsel %vm204, %v141, 0
    %v425 = vsel %vm204, %v142, 0
    %v428 = vsel %vm204, %v143, 0
    %v431 = vsel %vm204, %v144, 0
    %v434 = vsel %vm204, %v145, 0
    %v437 = vsel %vm204, %v146, 0
    %v440 = vsel %vm204, %v147, 0
    %v443 = vsel %vm204, %v148, 0
    %v446 = vsel %vm204, %v149, 0
    %v449 = vsel %vm204, %v150, 0
    %v452 = vsel %vm204, %v151, 0
    %v455 = vsel %vm204, %v152, 0
    %v458 = vsel %vm204, %v153, 0
    %v461 = vsel %vm204, %v154, 0
    %v464 = vsel %vm204, %v155, 0
    %v467 = vsel %vm204, %v156, 0
    %v470 = vsel %vm204, %v157, 0
    %v473 = vsel %vm204, %v158, 0
    %v476 = vsel %vm204, %v159, 0
    %v479 = vsel %vm204, %v160, 0
    %v482 = vsel %vm204, %v161, 0
    %v485 = vsel %vm204, %v162, 0
    %v488 = vsel %vm204, %v163, 0
    %v491 = vsel %vm204, %v164, 0
    %v494 = vsel %vm204, %v165, 0
    %v497 = vsel %vm204, %v166, 0
    %v500 = vsel %vm204, %v167, 0
    %v503 = vsel %vm204, %v168, 0
    %v506 = vsel %vm204, %v169, 0
    %v509 = vsel %vm204, %v170, 0
    %v512 = vsel %vm204, %v171, 0
    %v515 = vsel %vm204, %v172, 0
    %v518 = vsel %vm204, %v173, 0
    %v521 = vsel %vm204, %v174, 0
    %v524 = vsel %vm204, %v175, 0
    %v527 = vsel %vm204, %v176, 0
    %v530 = vsel %vm204, %v177, 0
    %v533 = vsel %vm204, %v178, 0
    %v536 = vsel %vm204, %v179, 0
    %v539 = vsel %vm204, %v180, 0
    %v542 = vsel %vm204, %v181, 0
    %v545 = vsel %vm204, %v182, 0
    %v548 = vsel %vm204, %v183, 0
    %v551 = vsel %vm204, %v184, 0
    %v554 = vsel %vm204, %v185, 0
    %v557 = vsel %vm204, %v186, 0
    %v560 = vsel %vm204, %v187, 0
    %v563 = vsel %vm204, %v188, 0
    %v566 = vsel %vm204, %v189, 0
    %v569 = vsel %vm204, %v190, 0
    %v572 = vsel %vm204, %v191, 0
    %v575 = vsel %vm204, %v192, 0
    %v578 = vsel %vm204, %v193, 0
    %v581 = vsel %vm204, %v194, 0
    %v584 = vsel %vm204, %v195, 0
    %v587 = vsel %vm204, %v196, 0
    %589 = vmatprep.subr.mxu0 0.0
    %590 = vmatpush1.msra.mxu0 %v36
    %591 = vmatprep.subr.mxu0 0.0
    %592 = vmatpush1.msra.mxu0 0.0
    %593 = vmatprep.subr.mxu0 0.0
    %594 = vmatpush1.msra.mxu0 0.0
    %595 = vmatprep.subr.mxu0 0.0
    %596 = vmatpush1.msra.mxu0 0.0
    %597 = vmatprep.subr.mxu0 0.0
    %598 = vmatpush1.msra.mxu0 0.0
    %599 = vmatprep.subr.mxu0 0.0
    %600 = vmatpush1.msra.mxu0 0.0
    %601 = vmatprep.subr.mxu0 0.0
    %602 = vmatpush1.msra.mxu0 0.0
    %603 = vmatprep.subr.mxu0 0.0
    %604 = vmatpush1.msra.mxu0 0.0
    %605 = vmatprep.subr.mxu0 0.0
    %606 = vmatpush1.msra.mxu0 0.0
    %607 = vmatprep.subr.mxu0 0.0
    %608 = vmatpush1.msra.mxu0 0.0
    %609 = vmatprep.subr.mxu0 0.0
    %610 = vmatpush1.msra.mxu0 0.0
    %611 = vmatprep.subr.mxu0 0.0
    %612 = vmatpush1.msra.mxu0 0.0
    %613 = vmatprep.subr.mxu0 0.0
    %614 = vmatpush1.msra.mxu0 0.0
    %615 = vmatprep.subr.mxu0 0.0
    %616 = vmatpush1.msra.mxu0 0.0
    %617 = vmatprep.subr.mxu0 0.0
    %618 = vmatpush1.msra.mxu0 0.0
    %619 = vmatprep.subr.mxu0 0.0
    %620 = vmatpush1.msra.mxu0 0.0
    %621 = vmatprep.subr.mxu0 0.0
    %622 = vmatpush1.msra.mxu0 0.0
    %623 = vmatprep.subr.mxu0 0.0
    %624 = vmatpush1.msra.mxu0 0.0
    %625 = vmatprep.subr.mxu0 0.0
    %626 = vmatpush1.msra.mxu0 0.0
    %627 = vmatprep.subr.mxu0 0.0
    %628 = vmatpush1.msra.mxu0 0.0
    %629 = vmatprep.subr.mxu0 0.0
    %630 = vmatpush1.msra.mxu0 0.0
    %631 = vmatprep.subr.mxu0 0.0
    %632 = vmatpush1.msra.mxu0 0.0
    %633 = vmatprep.subr.mxu0 0.0
    %634 = vmatpush1.msra.mxu0 0.0
    %635 = vmatprep.subr.mxu0 0.0
    %636 = vmatpush1.msra.mxu0 0.0
    %637 = vmatprep.subr.mxu0 0.0
    %638 = vmatpush1.msra.mxu0 0.0
    %639 = vmatprep.subr.mxu0 0.0
    %640 = vmatpush1.msra.mxu0 0.0
    %641 = vmatprep.subr.mxu0 0.0
    %642 = vmatpush1.msra.mxu0 0.0
    %643 = vmatprep.subr.mxu0 0.0
    %644 = vmatpush1.msra.mxu0 0.0
    %645 = vmatprep.subr.mxu0 0.0
    %646 = vmatpush1.msra.mxu0 0.0
    %647 = vmatprep.subr.mxu0 0.0
    %648 = vmatpush1.msra.mxu0 0.0
    %649 = vmatprep.subr.mxu0 0.0
    %650 = vmatpush1.msra.mxu0 0.0
    %651 = vmatprep.subr.mxu0 0.0
    %652 = vmatpush1.msra.mxu0 0.0
    %653 = vmatprep.mubr.f32.mxu0 0.0
    %654 = vmatmul.mubr.f32.gmra.mrb[0].mxu0 %v206
    %v655 = vpop.f32.mrb[0].mxu0
    %v656 = vadd.f32 %v202, %v655
    %v657 = vpop.f32.mrb[0].mxu0
    %658 = vmatprep.mubr.f32.mxu0 0.0
    %659 = vmatmul.mubr.f32.gmra.mrb[0].mxu0 %v209
    %v660 = vpop.f32.mrb[0].mxu0
    %v661 = vadd.f32 %v202, %v660
    %v662 = vpop.f32.mrb[0].mxu0
    %663 = vmatprep.mubr.f32.mxu0 0.0
    %664 = vmatmul.mubr.f32.gmra.mrb[0].mxu0 %v212
    %v665 = vpop.f32.mrb[0].mxu0
    %v666 = vadd.f32 %v202, %v665
    %v667 = vpop.f32.mrb[0].mxu0
    %668 = vmatprep.mubr.f32.mxu0 0.0
    %669 = vmatmul.mubr.f32.gmra.mrb[0].mxu0 %v215
    %v670 = vpop.f32.mrb[0].mxu0
    %v671 = vadd.f32 %v202, %v670
    %v672 = vpop.f32.mrb[0].mxu0
    %673 = vmatprep.mubr.f32.mxu0 0.0
    %674 = vmatmul.mubr.f32.gmra.mrb[0].mxu0 %v218
    %v675 = vpop.f32.mrb[0].mxu0
    %v676 = vadd.f32 %v202, %v675
    %v677 = vpop.f32.mrb[0].mxu0
    %678 = vmatprep.mubr.f32.mxu0 0.0
    %679 = vmatmul.mubr.f32.gmra.mrb[0].mxu0 %v221
    %v680 = vpop.f32.mrb[0].mxu0
    %v681 = vadd.f32 %v202, %v680
    %v682 = vpop.f32.mrb[0].mxu0
    %683 = vmatprep.mubr.f32.mxu0 0.0
    %684 = vmatmul.mubr.f32.gmra.mrb[0].mxu0 %v224
    %v685 = vpop.f32.mrb[0].mxu0
    %v686 = vadd.f32 %v202, %v685
    %v687 = vpop.f32.mrb[0].mxu0
    %688 = vmatprep.mubr.f32.mxu0 0.0
    %689 = vmatmul.mubr.f32.gmra.mrb[0].mxu0 %v227
    %v690 = vpop.f32.mrb[0].mxu0
    %v691 = vadd.f32 %v202, %v690
    %v692 = vpop.f32.mrb[0].mxu0
    %693 = vmatprep.mubr.f32.mxu0 0.0
    %694 = vmatmul.mubr.f32.gmra.mrb[0].mxu0 %v230
    %v695 = vpop.f32.mrb[0].mxu0
    %v696 = vadd.f32 %v202, %v695
    %v697 = vpop.f32.mrb[0].mxu0
    %698 = vmatprep.mubr.f32.mxu0 0.0
    %699 = vmatmul.mubr.f32.gmra.mrb[0].mxu0 %v233
    %v700 = vpop.f32.mrb[0].mxu0
    %v701 = vadd.f32 %v202, %v700
    %v702 = vpop.f32.mrb[0].mxu0
    %703 = vmatprep.mubr.f32.mxu0 0.0
    %704 = vmatmul.mubr.f32.gmra.mrb[0].mxu0 %v236
    %v705 = vpop.f32.mrb[0].mxu0
    %v706 = vadd.f32 %v202, %v705
    %v707 = vpop.f32.mrb[0].mxu0
    %708 = vmatprep.mubr.f32.mxu0 0.0
    %709 = vmatmul.mubr.f32.gmra.mrb[0].mxu0 %v239
    %v710 = vpop.f32.mrb[0].mxu0
    %v711 = vadd.f32 %v202, %v710
    %v712 = vpop.f32.mrb[0].mxu0
    %713 = vmatprep.mubr.f32.mxu0 0.0
    %714 = vmatmul.mubr.f32.gmra.mrb[0].mxu0 %v242
    %v715 = vpop.f32.mrb[0].mxu0
    %v716 = vadd.f32 %v202, %v715
    %v717 = vpop.f32.mrb[0].mxu0
    %718 = vmatprep.mubr.f32.mxu0 0.0
    %719 = vmatmul.mubr.f32.gmra.mrb[0].mxu0 %v245
    %v720 = vpop.f32.mrb[0].mxu0
    %v721 = vadd.f32 %v202, %v720
    %v722 = vpop.f32.mrb[0].mxu0
    %723 = vmatprep.mubr.f32.mxu0 0.0
    %724 = vmatmul.mubr.f32.gmra.mrb[0].mxu0 %v248
    %v725 = vpop.f32.mrb[0].mxu0
    %v726 = vadd.f32 %v202, %v725
    %v727 = vpop.f32.mrb[0].mxu0
    %728 = vmatprep.mubr.f32.mxu0 0.0
    %729 = vmatmul.mubr.f32.gmra.mrb[0].mxu0 %v251
    %v730 = vpop.f32.mrb[0].mxu0
    %v731 = vadd.f32 %v202, %v730
    %v732 = vpop.f32.mrb[0].mxu0
    %733 = vmatprep.mubr.f32.mxu0 0.0
    %734 = vmatmul.mubr.f32.gmra.mrb[0].mxu0 %v254
    %v735 = vpop.f32.mrb[0].mxu0
    %v736 = vadd.f32 %v202, %v735
    %v737 = vpop.f32.mrb[0].mxu0
    %738 = vmatprep.mubr.f32.mxu0 0.0
    %739 = vmatmul.mubr.f32.gmra.mrb[0].mxu0 %v257
    %v740 = vpop.f32.mrb[0].mxu0
    %v741 = vadd.f32 %v202, %v740
    %v742 = vpop.f32.mrb[0].mxu0
    %743 = vmatprep.mubr.f32.mxu0 0.0
    %744 = vmatmul.mubr.f32.gmra.mrb[0].mxu0 %v260
    %v745 = vpop.f32.mrb[0].mxu0
    %v746 = vadd.f32 %v202, %v745
    %v747 = vpop.f32.mrb[0].mxu0
    %748 = vmatprep.mubr.f32.mxu0 0.0
    %749 = vmatmul.mubr.f32.gmra.mrb[0].mxu0 %v263
    %v750 = vpop.f32.mrb[0].mxu0
    %v751 = vadd.f32 %v202, %v750
    %v752 = vpop.f32.mrb[0].mxu0
    %753 = vmatprep.mubr.f32.mxu0 0.0
    %754 = vmatmul.mubr.f32.gmra.mrb[0].mxu0 %v266
    %v755 = vpop.f32.mrb[0].mxu0
    %v756 = vadd.f32 %v202, %v755
    %v757 = vpop.f32.mrb[0].mxu0
    %758 = vmatprep.mubr.f32.mxu0 0.0
    %759 = vmatmul.mubr.f32.gmra.mrb[0].mxu0 %v269
    %v760 = vpop.f32.mrb[0].mxu0
    %v761 = vadd.f32 %v202, %v760
    %v762 = vpop.f32.mrb[0].mxu0
    %763 = vmatprep.mubr.f32.mxu0 0.0
    %764 = vmatmul.mubr.f32.gmra.mrb[0].mxu0 %v272
    %v765 = vpop.f32.mrb[0].mxu0
    %v766 = vadd.f32 %v202, %v765
    %v767 = vpop.f32.mrb[0].mxu0
    %768 = vmatprep.mubr.f32.mxu0 0.0
    %769 = vmatmul.mubr.f32.gmra.mrb[0].mxu0 %v275
    %v770 = vpop.f32.mrb[0].mxu0
    %v771 = vadd.f32 %v202, %v770
    %v772 = vpop.f32.mrb[0].mxu0
    %773 = vmatprep.mubr.f32.mxu0 0.0
    %774 = vmatmul.mubr.f32.gmra.mrb[0].mxu0 %v278
    %v775 = vpop.f32.mrb[0].mxu0
    %v776 = vadd.f32 %v202, %v775
    %v777 = vpop.f32.mrb[0].mxu0
    %778 = vmatprep.mubr.f32.mxu0 0.0
    %779 = vmatmul.mubr.f32.gmra.mrb[0].mxu0 %v281
    %v780 = vpop.f32.mrb[0].mxu0
    %v781 = vadd.f32 %v202, %v780
    %v782 = vpop.f32.mrb[0].mxu0
    %783 = vmatprep.mubr.f32.mxu0 0.0
    %784 = vmatmul.mubr.f32.gmra.mrb[0].mxu0 %v284
    %v785 = vpop.f32.mrb[0].mxu0
    %v786 = vadd.f32 %v202, %v785
    %v787 = vpop.f32.mrb[0].mxu0
    %788 = vmatprep.mubr.f32.mxu0 0.0
    %789 = vmatmul.mubr.f32.gmra.mrb[0].mxu0 %v287
    %v790 = vpop.f32.mrb[0].mxu0
    %v791 = vadd.f32 %v202, %v790
    %v792 = vpop.f32.mrb[0].mxu0
    %793 = vmatprep.mubr.f32.mxu0 0.0
    %794 = vmatmul.mubr.f32.gmra.mrb[0].mxu0 %v290
    %v795 = vpop.f32.mrb[0].mxu0
    %v796 = vadd.f32 %v202, %v795
    %v797 = vpop.f32.mrb[0].mxu0
    %798 = vmatprep.mubr.f32.mxu0 0.0
    %799 = vmatmul.mubr.f32.gmra.mrb[0].mxu0 %v293
    %v800 = vpop.f32.mrb[0].mxu0
    %v801 = vadd.f32 %v202, %v800
    %v802 = vpop.f32.mrb[0].mxu0
    %803 = vmatprep.mubr.f32.mxu0 0.0
    %804 = vmatmul.mubr.f32.gmra.mrb[0].mxu0 %v296
    %v805 = vpop.f32.mrb[0].mxu0
    %v806 = vadd.f32 %v202, %v805
    %v807 = vpop.f32.mrb[0].mxu0
    %808 = vmatprep.mubr.f32.mxu0 0.0
    %809 = vmatmul.mubr.f32.gmra.mrb[0].mxu0 %v299
    %v810 = vpop.f32.mrb[0].mxu0
    %v811 = vadd.f32 %v202, %v810
    %v812 = vpop.f32.mrb[0].mxu0
    %813 = vmatprep.mubr.f32.mxu0 0.0
    %814 = vmatmul.mubr.f32.gmra.mrb[0].mxu0 %v302
    %v815 = vpop.f32.mrb[0].mxu0
    %v816 = vadd.f32 %v202, %v815
    %v817 = vpop.f32.mrb[0].mxu0
    %818 = vmatprep.mubr.f32.mxu0 0.0
    %819 = vmatmul.mubr.f32.gmra.mrb[0].mxu0 %v305
    %v820 = vpop.f32.mrb[0].mxu0
    %v821 = vadd.f32 %v202, %v820
    %v822 = vpop.f32.mrb[0].mxu0
    %823 = vmatprep.mubr.f32.mxu0 0.0
    %824 = vmatmul.mubr.f32.gmra.mrb[0].mxu0 %v308
    %v825 = vpop.f32.mrb[0].mxu0
    %v826 = vadd.f32 %v202, %v825
    %v827 = vpop.f32.mrb[0].mxu0
    %828 = vmatprep.mubr.f32.mxu0 0.0
    %829 = vmatmul.mubr.f32.gmra.mrb[0].mxu0 %v311
    %v830 = vpop.f32.mrb[0].mxu0
    %v831 = vadd.f32 %v202, %v830
    %v832 = vpop.f32.mrb[0].mxu0
    %833 = vmatprep.mubr.f32.mxu0 0.0
    %834 = vmatmul.mubr.f32.gmra.mrb[0].mxu0 %v314
    %v835 = vpop.f32.mrb[0].mxu0
    %v836 = vadd.f32 %v202, %v835
    %v837 = vpop.f32.mrb[0].mxu0
    %838 = vmatprep.mubr.f32.mxu0 0.0
    %839 = vmatmul.mubr.f32.gmra.mrb[0].mxu0 %v317
    %v840 = vpop.f32.mrb[0].mxu0
    %v841 = vadd.f32 %v202, %v840
    %v842 = vpop.f32.mrb[0].mxu0
    %843 = vmatprep.mubr.f32.mxu0 0.0
    %844 = vmatmul.mubr.f32.gmra.mrb[0].mxu0 %v320
    %v845 = vpop.f32.mrb[0].mxu0
    %v846 = vadd.f32 %v202, %v845
    %v847 = vpop.f32.mrb[0].mxu0
    %848 = vmatprep.mubr.f32.mxu0 0.0
    %849 = vmatmul.mubr.f32.gmra.mrb[0].mxu0 %v323
    %v850 = vpop.f32.mrb[0].mxu0
    %v851 = vadd.f32 %v202, %v850
    %v852 = vpop.f32.mrb[0].mxu0
    %853 = vmatprep.mubr.f32.mxu0 0.0
    %854 = vmatmul.mubr.f32.gmra.mrb[0].mxu0 %v326
    %v855 = vpop.f32.mrb[0].mxu0
    %v856 = vadd.f32 %v202, %v855
    %v857 = vpop.f32.mrb[0].mxu0
    %858 = vmatprep.mubr.f32.mxu0 0.0
    %859 = vmatmul.mubr.f32.gmra.mrb[0].mxu0 %v329
    %v860 = vpop.f32.mrb[0].mxu0
    %v861 = vadd.f32 %v202, %v860
    %v862 = vpop.f32.mrb[0].mxu0
    %863 = vmatprep.mubr.f32.mxu0 0.0
    %864 = vmatmul.mubr.f32.gmra.mrb[0].mxu0 %v332
    %v865 = vpop.f32.mrb[0].mxu0
    %v866 = vadd.f32 %v202, %v865
    %v867 = vpop.f32.mrb[0].mxu0
    %868 = vmatprep.mubr.f32.mxu0 0.0
    %869 = vmatmul.mubr.f32.gmra.mrb[0].mxu0 %v335
    %v870 = vpop.f32.mrb[0].mxu0
    %v871 = vadd.f32 %v202, %v870
    %v872 = vpop.f32.mrb[0].mxu0
    %873 = vmatprep.mubr.f32.mxu0 0.0
    %874 = vmatmul.mubr.f32.gmra.mrb[0].mxu0 %v338
    %v875 = vpop.f32.mrb[0].mxu0
    %v876 = vadd.f32 %v202, %v875
    %v877 = vpop.f32.mrb[0].mxu0
    %878 = vmatprep.mubr.f32.mxu0 0.0
    %879 = vmatmul.mubr.f32.gmra.mrb[0].mxu0 %v341
    %v880 = vpop.f32.mrb[0].mxu0
    %v881 = vadd.f32 %v202, %v880
    %v882 = vpop.f32.mrb[0].mxu0
    %883 = vmatprep.mubr.f32.mxu0 0.0
    %884 = vmatmul.mubr.f32.gmra.mrb[0].mxu0 %v344
    %v885 = vpop.f32.mrb[0].mxu0
    %v886 = vadd.f32 %v202, %v885
    %v887 = vpop.f32.mrb[0].mxu0
    %888 = vmatprep.mubr.f32.mxu0 0.0
    %889 = vmatmul.mubr.f32.gmra.mrb[0].mxu0 %v347
    %v890 = vpop.f32.mrb[0].mxu0
    %v891 = vadd.f32 %v202, %v890
    %v892 = vpop.f32.mrb[0].mxu0
    %893 = vmatprep.mubr.f32.mxu0 0.0
    %894 = vmatmul.mubr.f32.gmra.mrb[0].mxu0 %v350
    %v895 = vpop.f32.mrb[0].mxu0
    %v896 = vadd.f32 %v202, %v895
    %v897 = vpop.f32.mrb[0].mxu0
    %898 = vmatprep.mubr.f32.mxu0 0.0
    %899 = vmatmul.mubr.f32.gmra.mrb[0].mxu0 %v353
    %v900 = vpop.f32.mrb[0].mxu0
    %v901 = vadd.f32 %v202, %v900
    %v902 = vpop.f32.mrb[0].mxu0
    %903 = vmatprep.mubr.f32.mxu0 0.0
    %904 = vmatmul.mubr.f32.gmra.mrb[0].mxu0 %v356
    %v905 = vpop.f32.mrb[0].mxu0
    %v906 = vadd.f32 %v202, %v905
    %v907 = vpop.f32.mrb[0].mxu0
    %908 = vmatprep.mubr.f32.mxu0 0.0
    %909 = vmatmul.mubr.f32.gmra.mrb[0].mxu0 %v359
    %v910 = vpop.f32.mrb[0].mxu0
    %v911 = vadd.f32 %v202, %v910
    %v912 = vpop.f32.mrb[0].mxu0
    %913 = vmatprep.mubr.f32.mxu0 0.0
    %914 = vmatmul.mubr.f32.gmra.mrb[0].mxu0 %v362
    %v915 = vpop.f32.mrb[0].mxu0
    %v916 = vadd.f32 %v202, %v915
    %v917 = vpop.f32.mrb[0].mxu0
    %918 = vmatprep.mubr.f32.mxu0 0.0
    %919 = vmatmul.mubr.f32.gmra.mrb[0].mxu0 %v365
    %v920 = vpop.f32.mrb[0].mxu0
    %v921 = vadd.f32 %v202, %v920
    %v922 = vpop.f32.mrb[0].mxu0
    %923 = vmatprep.mubr.f32.mxu0 0.0
    %924 = vmatmul.mubr.f32.gmra.mrb[0].mxu0 %v368
    %v925 = vpop.f32.mrb[0].mxu0
    %v926 = vadd.f32 %v202, %v925
    %v927 = vpop.f32.mrb[0].mxu0
    %928 = vmatprep.mubr.f32.mxu0 0.0
    %929 = vmatmul.mubr.f32.gmra.mrb[0].mxu0 %v371
    %v930 = vpop.f32.mrb[0].mxu0
    %v931 = vadd.f32 %v202, %v930
    %v932 = vpop.f32.mrb[0].mxu0
    %933 = vmatprep.mubr.f32.mxu0 0.0
    %934 = vmatmul.mubr.f32.gmra.mrb[0].mxu0 %v374
    %v935 = vpop.f32.mrb[0].mxu0
    %v936 = vadd.f32 %v202, %v935
    %v937 = vpop.f32.mrb[0].mxu0
    %938 = vmatprep.mubr.f32.mxu0 0.0
    %939 = vmatmul.mubr.f32.gmra.mrb[0].mxu0 %v377
    %v940 = vpop.f32.mrb[0].mxu0
    %v941 = vadd.f32 %v202, %v940
    %v942 = vpop.f32.mrb[0].mxu0
    %943 = vmatprep.mubr.f32.mxu0 0.0
    %944 = vmatmul.mubr.f32.gmra.mrb[0].mxu0 %v380
    %v945 = vpop.f32.mrb[0].mxu0
    %v946 = vadd.f32 %v202, %v945
    %v947 = vpop.f32.mrb[0].mxu0
    %948 = vmatprep.mubr.f32.mxu0 0.0
    %949 = vmatmul.mubr.f32.gmra.mrb[0].mxu0 %v383
    %v950 = vpop.f32.mrb[0].mxu0
    %v951 = vadd.f32 %v202, %v950
    %v952 = vpop.f32.mrb[0].mxu0
    %953 = vmatprep.mubr.f32.mxu0 0.0
    %954 = vmatmul.mubr.f32.gmra.mrb[0].mxu0 %v386
    %v955 = vpop.f32.mrb[0].mxu0
    %v956 = vadd.f32 %v202, %v955
    %v957 = vpop.f32.mrb[0].mxu0
    %958 = vmatprep.mubr.f32.mxu0 0.0
    %959 = vmatmul.mubr.f32.gmra.mrb[0].mxu0 %v389
    %v960 = vpop.f32.mrb[0].mxu0
    %v961 = vadd.f32 %v202, %v960
    %v962 = vpop.f32.mrb[0].mxu0
    %963 = vmatprep.mubr.f32.mxu0 0.0
    %964 = vmatmul.mubr.f32.gmra.mrb[0].mxu0 %v392
    %v965 = vpop.f32.mrb[0].mxu0
    %v966 = vadd.f32 %v202, %v965
    %v967 = vpop.f32.mrb[0].mxu0
    %968 = vmatprep.mubr.f32.mxu0 0.0
    %969 = vmatmul.mubr.f32.gmra.mrb[0].mxu0 %v395
    %v970 = vpop.f32.mrb[0].mxu0
    %v971 = vadd.f32 %v202, %v970
    %v972 = vpop.f32.mrb[0].mxu0
    %973 = vmatprep.mubr.f32.mxu0 0.0
    %974 = vmatmul.mubr.f32.gmra.mrb[0].mxu0 %v398
    %v975 = vpop.f32.mrb[0].mxu0
    %v976 = vadd.f32 %v202, %v975
    %v977 = vpop.f32.mrb[0].mxu0
    %978 = vmatprep.mubr.f32.mxu0 0.0
    %979 = vmatmul.mubr.f32.gmra.mrb[0].mxu0 %v401
    %v980 = vpop.f32.mrb[0].mxu0
    %v981 = vadd.f32 %v202, %v980
    %v982 = vpop.f32.mrb[0].mxu0
    %983 = vmatprep.mubr.f32.mxu0 0.0
    %984 = vmatmul.mubr.f32.gmra.mrb[0].mxu0 %v404
    %v985 = vpop.f32.mrb[0].mxu0
    %v986 = vadd.f32 %v202, %v985
    %v987 = vpop.f32.mrb[0].mxu0
    %988 = vmatprep.mubr.f32.mxu0 0.0
    %989 = vmatmul.mubr.f32.gmra.mrb[0].mxu0 %v407
    %v990 = vpop.f32.mrb[0].mxu0
    %v991 = vadd.f32 %v202, %v990
    %v992 = vpop.f32.mrb[0].mxu0
    %993 = vmatprep.mubr.f32.mxu0 0.0
    %994 = vmatmul.mubr.f32.gmra.mrb[0].mxu0 %v410
    %v995 = vpop.f32.mrb[0].mxu0
    %v996 = vadd.f32 %v202, %v995
    %v997 = vpop.f32.mrb[0].mxu0
    %998 = vmatprep.mubr.f32.mxu0 0.0
    %999 = vmatmul.mubr.f32.gmra.mrb[0].mxu0 %v413
    %v1000 = vpop.f32.mrb[0].mxu0
    %v1001 = vadd.f32 %v202, %v1000
    %v1002 = vpop.f32.mrb[0].mxu0
    %1003 = vmatprep.mubr.f32.mxu0 0.0
    %1004 = vmatmul.mubr.f32.gmra.mrb[0].mxu0 %v416
    %v1005 = vpop.f32.mrb[0].mxu0
    %v1006 = vadd.f32 %v202, %v1005
    %v1007 = vpop.f32.mrb[0].mxu0
    %1008 = vmatprep.mubr.f32.mxu0 0.0
    %1009 = vmatmul.mubr.f32.gmra.mrb[0].mxu0 %v419
    %v1010 = vpop.f32.mrb[0].mxu0
    %v1011 = vadd.f32 %v202, %v1010
    %v1012 = vpop.f32.mrb[0].mxu0
    %1013 = vmatprep.mubr.f32.mxu0 0.0
    %1014 = vmatmul.mubr.f32.gmra.mrb[0].mxu0 %v422
    %v1015 = vpop.f32.mrb[0].mxu0
    %v1016 = vadd.f32 %v202, %v1015
    %v1017 = vpop.f32.mrb[0].mxu0
    %1018 = vmatprep.mubr.f32.mxu0 0.0
    %1019 = vmatmul.mubr.f32.gmra.mrb[0].mxu0 %v425
    %v1020 = vpop.f32.mrb[0].mxu0
    %v1021 = vadd.f32 %v202, %v1020
    %v1022 = vpop.f32.mrb[0].mxu0
    %1023 = vmatprep.mubr.f32.mxu0 0.0
    %1024 = vmatmul.mubr.f32.gmra.mrb[0].mxu0 %v428
    %v1025 = vpop.f32.mrb[0].mxu0
    %v1026 = vadd.f32 %v202, %v1025
    %v1027 = vpop.f32.mrb[0].mxu0
    %1028 = vmatprep.mubr.f32.mxu0 0.0
    %1029 = vmatmul.mubr.f32.gmra.mrb[0].mxu0 %v431
    %v1030 = vpop.f32.mrb[0].mxu0
    %v1031 = vadd.f32 %v202, %v1030
    %v1032 = vpop.f32.mrb[0].mxu0
    %1033 = vmatprep.mubr.f32.mxu0 0.0
    %1034 = vmatmul.mubr.f32.gmra.mrb[0].mxu0 %v434
    %v1035 = vpop.f32.mrb[0].mxu0
    %v1036 = vadd.f32 %v202, %v1035
    %v1037 = vpop.f32.mrb[0].mxu0
    %1038 = vmatprep.mubr.f32.mxu0 0.0
    %1039 = vmatmul.mubr.f32.gmra.mrb[0].mxu0 %v437
    %v1040 = vpop.f32.mrb[0].mxu0
    %v1041 = vadd.f32 %v202, %v1040
    %v1042 = vpop.f32.mrb[0].mxu0
    %1043 = vmatprep.mubr.f32.mxu0 0.0
    %1044 = vmatmul.mubr.f32.gmra.mrb[0].mxu0 %v440
    %v1045 = vpop.f32.mrb[0].mxu0
    %v1046 = vadd.f32 %v202, %v1045
    %v1047 = vpop.f32.mrb[0].mxu0
    %1048 = vmatprep.mubr.f32.mxu0 0.0
    %1049 = vmatmul.mubr.f32.gmra.mrb[0].mxu0 %v443
    %v1050 = vpop.f32.mrb[0].mxu0
    %v1051 = vadd.f32 %v202, %v1050
    %v1052 = vpop.f32.mrb[0].mxu0
    %1053 = vmatprep.mubr.f32.mxu0 0.0
    %1054 = vmatmul.mubr.f32.gmra.mrb[0].mxu0 %v446
    %v1055 = vpop.f32.mrb[0].mxu0
    %v1056 = vadd.f32 %v202, %v1055
    %v1057 = vpop.f32.mrb[0].mxu0
    %1058 = vmatprep.mubr.f32.mxu0 0.0
    %1059 = vmatmul.mubr.f32.gmra.mrb[0].mxu0 %v449
    %v1060 = vpop.f32.mrb[0].mxu0
    %v1061 = vadd.f32 %v202, %v1060
    %v1062 = vpop.f32.mrb[0].mxu0
    %1063 = vmatprep.mubr.f32.mxu0 0.0
    %1064 = vmatmul.mubr.f32.gmra.mrb[0].mxu0 %v452
    %v1065 = vpop.f32.mrb[0].mxu0
    %v1066 = vadd.f32 %v202, %v1065
    %v1067 = vpop.f32.mrb[0].mxu0
    %1068 = vmatprep.mubr.f32.mxu0 0.0
    %1069 = vmatmul.mubr.f32.gmra.mrb[0].mxu0 %v455
    %v1070 = vpop.f32.mrb[0].mxu0
    %v1071 = vadd.f32 %v202, %v1070
    %v1072 = vpop.f32.mrb[0].mxu0
    %1073 = vmatprep.mubr.f32.mxu0 0.0
    %1074 = vmatmul.mubr.f32.gmra.mrb[0].mxu0 %v458
    %v1075 = vpop.f32.mrb[0].mxu0
    %v1076 = vadd.f32 %v202, %v1075
    %v1077 = vpop.f32.mrb[0].mxu0
    %1078 = vmatprep.mubr.f32.mxu0 0.0
    %1079 = vmatmul.mubr.f32.gmra.mrb[0].mxu0 %v461
    %v1080 = vpop.f32.mrb[0].mxu0
    %v1081 = vadd.f32 %v202, %v1080
    %v1082 = vpop.f32.mrb[0].mxu0
    %1083 = vmatprep.mubr.f32.mxu0 0.0
    %1084 = vmatmul.mubr.f32.gmra.mrb[0].mxu0 %v464
    %v1085 = vpop.f32.mrb[0].mxu0
    %v1086 = vadd.f32 %v202, %v1085
    %v1087 = vpop.f32.mrb[0].mxu0
    %1088 = vmatprep.mubr.f32.mxu0 0.0
    %1089 = vmatmul.mubr.f32.gmra.mrb[0].mxu0 %v467
    %v1090 = vpop.f32.mrb[0].mxu0
    %v1091 = vadd.f32 %v202, %v1090
    %v1092 = vpop.f32.mrb[0].mxu0
    %1093 = vmatprep.mubr.f32.mxu0 0.0
    %1094 = vmatmul.mubr.f32.gmra.mrb[0].mxu0 %v470
    %v1095 = vpop.f32.mrb[0].mxu0
    %v1096 = vadd.f32 %v202, %v1095
    %v1097 = vpop.f32.mrb[0].mxu0
    %1098 = vmatprep.mubr.f32.mxu0 0.0
    %1099 = vmatmul.mubr.f32.gmra.mrb[0].mxu0 %v473
    %v1100 = vpop.f32.mrb[0].mxu0
    %v1101 = vadd.f32 %v202, %v1100
    %v1102 = vpop.f32.mrb[0].mxu0
    %1103 = vmatprep.mubr.f32.mxu0 0.0
    %1104 = vmatmul.mubr.f32.gmra.mrb[0].mxu0 %v476
    %v1105 = vpop.f32.mrb[0].mxu0
    %v1106 = vadd.f32 %v202, %v1105
    %v1107 = vpop.f32.mrb[0].mxu0
    %1108 = vmatprep.mubr.f32.mxu0 0.0
    %1109 = vmatmul.mubr.f32.gmra.mrb[0].mxu0 %v479
    %v1110 = vpop.f32.mrb[0].mxu0
    %v1111 = vadd.f32 %v202, %v1110
    %v1112 = vpop.f32.mrb[0].mxu0
    %1113 = vmatprep.mubr.f32.mxu0 0.0
    %1114 = vmatmul.mubr.f32.gmra.mrb[0].mxu0 %v482
    %v1115 = vpop.f32.mrb[0].mxu0
    %v1116 = vadd.f32 %v202, %v1115
    %v1117 = vpop.f32.mrb[0].mxu0
    %1118 = vmatprep.mubr.f32.mxu0 0.0
    %1119 = vmatmul.mubr.f32.gmra.mrb[0].mxu0 %v485
    %v1120 = vpop.f32.mrb[0].mxu0
    %v1121 = vadd.f32 %v202, %v1120
    %v1122 = vpop.f32.mrb[0].mxu0
    %1123 = vmatprep.mubr.f32.mxu0 0.0
    %1124 = vmatmul.mubr.f32.gmra.mrb[0].mxu0 %v488
    %v1125 = vpop.f32.mrb[0].mxu0
    %v1126 = vadd.f32 %v202, %v1125
    %v1127 = vpop.f32.mrb[0].mxu0
    %1128 = vmatprep.mubr.f32.mxu0 0.0
    %1129 = vmatmul.mubr.f32.gmra.mrb[0].mxu0 %v491
    %v1130 = vpop.f32.mrb[0].mxu0
    %v1131 = vadd.f32 %v202, %v1130
    %v1132 = vpop.f32.mrb[0].mxu0
    %1133 = vmatprep.mubr.f32.mxu0 0.0
    %1134 = vmatmul.mubr.f32.gmra.mrb[0].mxu0 %v494
    %v1135 = vpop.f32.mrb[0].mxu0
    %v1136 = vadd.f32 %v202, %v1135
    %v1137 = vpop.f32.mrb[0].mxu0
    %1138 = vmatprep.mubr.f32.mxu0 0.0
    %1139 = vmatmul.mubr.f32.gmra.mrb[0].mxu0 %v497
    %v1140 = vpop.f32.mrb[0].mxu0
    %v1141 = vadd.f32 %v202, %v1140
    %v1142 = vpop.f32.mrb[0].mxu0
    %1143 = vmatprep.mubr.f32.mxu0 0.0
    %1144 = vmatmul.mubr.f32.gmra.mrb[0].mxu0 %v500
    %v1145 = vpop.f32.mrb[0].mxu0
    %v1146 = vadd.f32 %v202, %v1145
    %v1147 = vpop.f32.mrb[0].mxu0
    %1148 = vmatprep.mubr.f32.mxu0 0.0
    %1149 = vmatmul.mubr.f32.gmra.mrb[0].mxu0 %v503
    %v1150 = vpop.f32.mrb[0].mxu0
    %v1151 = vadd.f32 %v202, %v1150
    %v1152 = vpop.f32.mrb[0].mxu0
    %1153 = vmatprep.mubr.f32.mxu0 0.0
    %1154 = vmatmul.mubr.f32.gmra.mrb[0].mxu0 %v506
    %v1155 = vpop.f32.mrb[0].mxu0
    %v1156 = vadd.f32 %v202, %v1155
    %v1157 = vpop.f32.mrb[0].mxu0
    %1158 = vmatprep.mubr.f32.mxu0 0.0
    %1159 = vmatmul.mubr.f32.gmra.mrb[0].mxu0 %v509
    %v1160 = vpop.f32.mrb[0].mxu0
    %v1161 = vadd.f32 %v202, %v1160
    %v1162 = vpop.f32.mrb[0].mxu0
    %1163 = vmatprep.mubr.f32.mxu0 0.0
    %1164 = vmatmul.mubr.f32.gmra.mrb[0].mxu0 %v512
    %v1165 = vpop.f32.mrb[0].mxu0
    %v1166 = vadd.f32 %v202, %v1165
    %v1167 = vpop.f32.mrb[0].mxu0
    %1168 = vmatprep.mubr.f32.mxu0 0.0
    %1169 = vmatmul.mubr.f32.gmra.mrb[0].mxu0 %v515
    %v1170 = vpop.f32.mrb[0].mxu0
    %v1171 = vadd.f32 %v202, %v1170
    %v1172 = vpop.f32.mrb[0].mxu0
    %1173 = vmatprep.mubr.f32.mxu0 0.0
    %1174 = vmatmul.mubr.f32.gmra.mrb[0].mxu0 %v518
    %v1175 = vpop.f32.mrb[0].mxu0
    %v1176 = vadd.f32 %v202, %v1175
    %v1177 = vpop.f32.mrb[0].mxu0
    %1178 = vmatprep.mubr.f32.mxu0 0.0
    %1179 = vmatmul.mubr.f32.gmra.mrb[0].mxu0 %v521
    %v1180 = vpop.f32.mrb[0].mxu0
    %v1181 = vadd.f32 %v202, %v1180
    %v1182 = vpop.f32.mrb[0].mxu0
    %1183 = vmatprep.mubr.f32.mxu0 0.0
    %1184 = vmatmul.mubr.f32.gmra.mrb[0].mxu0 %v524
    %v1185 = vpop.f32.mrb[0].mxu0
    %v1186 = vadd.f32 %v202, %v1185
    %v1187 = vpop.f32.mrb[0].mxu0
    %1188 = vmatprep.mubr.f32.mxu0 0.0
    %1189 = vmatmul.mubr.f32.gmra.mrb[0].mxu0 %v527
    %v1190 = vpop.f32.mrb[0].mxu0
    %v1191 = vadd.f32 %v202, %v1190
    %v1192 = vpop.f32.mrb[0].mxu0
    %1193 = vmatprep.mubr.f32.mxu0 0.0
    %1194 = vmatmul.mubr.f32.gmra.mrb[0].mxu0 %v530
    %v1195 = vpop.f32.mrb[0].mxu0
    %v1196 = vadd.f32 %v202, %v1195
    %v1197 = vpop.f32.mrb[0].mxu0
    %1198 = vmatprep.mubr.f32.mxu0 0.0
    %1199 = vmatmul.mubr.f32.gmra.mrb[0].mxu0 %v533
    %v1200 = vpop.f32.mrb[0].mxu0
    %v1201 = vadd.f32 %v202, %v1200
    %v1202 = vpop.f32.mrb[0].mxu0
    %1203 = vmatprep.mubr.f32.mxu0 0.0
    %1204 = vmatmul.mubr.f32.gmra.mrb[0].mxu0 %v536
    %v1205 = vpop.f32.mrb[0].mxu0
    %v1206 = vadd.f32 %v202, %v1205
    %v1207 = vpop.f32.mrb[0].mxu0
    %1208 = vmatprep.mubr.f32.mxu0 0.0
    %1209 = vmatmul.mubr.f32.gmra.mrb[0].mxu0 %v539
    %v1210 = vpop.f32.mrb[0].mxu0
    %v1211 = vadd.f32 %v202, %v1210
    %v1212 = vpop.f32.mrb[0].mxu0
    %1213 = vmatprep.mubr.f32.mxu0 0.0
    %1214 = vmatmul.mubr.f32.gmra.mrb[0].mxu0 %v542
    %v1215 = vpop.f32.mrb[0].mxu0
    %v1216 = vadd.f32 %v202, %v1215
    %v1217 = vpop.f32.mrb[0].mxu0
    %1218 = vmatprep.mubr.f32.mxu0 0.0
    %1219 = vmatmul.mubr.f32.gmra.mrb[0].mxu0 %v545
    %v1220 = vpop.f32.mrb[0].mxu0
    %v1221 = vadd.f32 %v202, %v1220
    %v1222 = vpop.f32.mrb[0].mxu0
    %1223 = vmatprep.mubr.f32.mxu0 0.0
    %1224 = vmatmul.mubr.f32.gmra.mrb[0].mxu0 %v548
    %v1225 = vpop.f32.mrb[0].mxu0
    %v1226 = vadd.f32 %v202, %v1225
    %v1227 = vpop.f32.mrb[0].mxu0
    %1228 = vmatprep.mubr.f32.mxu0 0.0
    %1229 = vmatmul.mubr.f32.gmra.mrb[0].mxu0 %v551
    %v1230 = vpop.f32.mrb[0].mxu0
    %v1231 = vadd.f32 %v202, %v1230
    %v1232 = vpop.f32.mrb[0].mxu0
    %1233 = vmatprep.mubr.f32.mxu0 0.0
    %1234 = vmatmul.mubr.f32.gmra.mrb[0].mxu0 %v554
    %v1235 = vpop.f32.mrb[0].mxu0
    %v1236 = vadd.f32 %v202, %v1235
    %v1237 = vpop.f32.mrb[0].mxu0
    %1238 = vmatprep.mubr.f32.mxu0 0.0
    %1239 = vmatmul.mubr.f32.gmra.mrb[0].mxu0 %v557
    %v1240 = vpop.f32.mrb[0].mxu0
    %v1241 = vadd.f32 %v202, %v1240
    %v1242 = vpop.f32.mrb[0].mxu0
    %1243 = vmatprep.mubr.f32.mxu0 0.0
    %1244 = vmatmul.mubr.f32.gmra.mrb[0].mxu0 %v560
    %v1245 = vpop.f32.mrb[0].mxu0
    %v1246 = vadd.f32 %v202, %v1245
    %v1247 = vpop.f32.mrb[0].mxu0
    %1248 = vmatprep.mubr.f32.mxu0 0.0
    %1249 = vmatmul.mubr.f32.gmra.mrb[0].mxu0 %v563
    %v1250 = vpop.f32.mrb[0].mxu0
    %v1251 = vadd.f32 %v202, %v1250
    %v1252 = vpop.f32.mrb[0].mxu0
    %1253 = vmatprep.mubr.f32.mxu0 0.0
    %1254 = vmatmul.mubr.f32.gmra.mrb[0].mxu0 %v566
    %v1255 = vpop.f32.mrb[0].mxu0
    %v1256 = vadd.f32 %v202, %v1255
    %v1257 = vpop.f32.mrb[0].mxu0
    %1258 = vmatprep.mubr.f32.mxu0 0.0
    %1259 = vmatmul.mubr.f32.gmra.mrb[0].mxu0 %v569
    %v1260 = vpop.f32.mrb[0].mxu0
    %v1261 = vadd.f32 %v202, %v1260
    %v1262 = vpop.f32.mrb[0].mxu0
    %1263 = vmatprep.mubr.f32.mxu0 0.0
    %1264 = vmatmul.mubr.f32.gmra.mrb[0].mxu0 %v572
    %v1265 = vpop.f32.mrb[0].mxu0
    %v1266 = vadd.f32 %v202, %v1265
    %v1267 = vpop.f32.mrb[0].mxu0
    %1268 = vmatprep.mubr.f32.mxu0 0.0
    %1269 = vmatmul.mubr.f32.gmra.mrb[0].mxu0 %v575
    %v1270 = vpop.f32.mrb[0].mxu0
    %v1271 = vadd.f32 %v202, %v1270
    %v1272 = vpop.f32.mrb[0].mxu0
    %1273 = vmatprep.mubr.f32.mxu0 0.0
    %1274 = vmatmul.mubr.f32.gmra.mrb[0].mxu0 %v578
    %v1275 = vpop.f32.mrb[0].mxu0
    %v1276 = vadd.f32 %v202, %v1275
    %v1277 = vpop.f32.mrb[0].mxu0
    %1278 = vmatprep.mubr.f32.mxu0 0.0
    %1279 = vmatmul.mubr.f32.gmra.mrb[0].mxu0 %v581
    %v1280 = vpop.f32.mrb[0].mxu0
    %v1281 = vadd.f32 %v202, %v1280
    %v1282 = vpop.f32.mrb[0].mxu0
    %1283 = vmatprep.mubr.f32.mxu0 0.0
    %1284 = vmatmul.mubr.f32.gmra.mrb[0].mxu0 %v584
    %v1285 = vpop.f32.mrb[0].mxu0
    %v1286 = vadd.f32 %v202, %v1285
    %v1287 = vpop.f32.mrb[0].mxu0
    %1288 = vmatprep.mubr.f32.mxu0 0.0
    %1289 = vmatmul.mubr.f32.gmra.mrb[0].mxu0 %v587
    %v1290 = vpop.f32.mrb[0].mxu0
    %v1291 = vadd.f32 %v202, %v1290
    %v1292 = vpop.f32.mrb[0].mxu0
    %1293 = vdwg.mxu0
    %v1294 = vmax.f32 %v656, 0.0
    %v1295 = vmax.f32 %v661, 0.0
    %v1296 = vmax.f32 %v666, 0.0
    %v1297 = vmax.f32 %v671, 0.0
    %v1298 = vmax.f32 %v676, 0.0
    %v1299 = vmax.f32 %v681, 0.0
    %v1300 = vmax.f32 %v686, 0.0
    %v1301 = vmax.f32 %v691, 0.0
    %v1302 = vmax.f32 %v696, 0.0
    %v1303 = vmax.f32 %v701, 0.0
    %v1304 = vmax.f32 %v706, 0.0
    %v1305 = vmax.f32 %v711, 0.0
    %v1306 = vmax.f32 %v716, 0.0
    %v1307 = vmax.f32 %v721, 0.0
    %v1308 = vmax.f32 %v726, 0.0
    %v1309 = vmax.f32 %v731, 0.0
    %v1310 = vmax.f32 %v736, 0.0
    %v1311 = vmax.f32 %v741, 0.0
    %v1312 = vmax.f32 %v746, 0.0
    %v1313 = vmax.f32 %v751, 0.0
    %v1314 = vmax.f32 %v756, 0.0
    %v1315 = vmax.f32 %v761, 0.0
    %v1316 = vmax.f32 %v766, 0.0
    %v1317 = vmax.f32 %v771, 0.0
    %v1318 = vmax.f32 %v776, 0.0
    %v1319 = vmax.f32 %v781, 0.0
    %v1320 = vmax.f32 %v786, 0.0
    %v1321 = vmax.f32 %v791, 0.0
    %v1322 = vmax.f32 %v796, 0.0
    %v1323 = vmax.f32 %v801, 0.0
    %v1324 = vmax.f32 %v806, 0.0
    %v1325 = vmax.f32 %v811, 0.0
    %v1326 = vmax.f32 %v816, 0.0
    %v1327 = vmax.f32 %v821, 0.0
    %v1328 = vmax.f32 %v826, 0.0
    %v1329 = vmax.f32 %v831, 0.0
    %v1330 = vmax.f32 %v836, 0.0
    %v1331 = vmax.f32 %v841, 0.0
    %v1332 = vmax.f32 %v846, 0.0
    %v1333 = vmax.f32 %v851, 0.0
    %v1334 = vmax.f32 %v856, 0.0
    %v1335 = vmax.f32 %v861, 0.0
    %v1336 = vmax.f32 %v866, 0.0
    %v1337 = vmax.f32 %v871, 0.0
    %v1338 = vmax.f32 %v876, 0.0
    %v1339 = vmax.f32 %v881, 0.0
    %v1340 = vmax.f32 %v886, 0.0
    %v1341 = vmax.f32 %v891, 0.0
    %v1342 = vmax.f32 %v896, 0.0
    %v1343 = vmax.f32 %v901, 0.0
    %v1344 = vmax.f32 %v906, 0.0
    %v1345 = vmax.f32 %v911, 0.0
    %v1346 = vmax.f32 %v916, 0.0
    %v1347 = vmax.f32 %v921, 0.0
    %v1348 = vmax.f32 %v926, 0.0
    %v1349 = vmax.f32 %v931, 0.0
    %v1350 = vmax.f32 %v936, 0.0
    %v1351 = vmax.f32 %v941, 0.0
    %v1352 = vmax.f32 %v946, 0.0
    %v1353 = vmax.f32 %v951, 0.0
    %v1354 = vmax.f32 %v956, 0.0
    %v1355 = vmax.f32 %v961, 0.0
    %v1356 = vmax.f32 %v966, 0.0
    %v1357 = vmax.f32 %v971, 0.0
    %v1358 = vmax.f32 %v976, 0.0
    %v1359 = vmax.f32 %v981, 0.0
    %v1360 = vmax.f32 %v986, 0.0
    %v1361 = vmax.f32 %v991, 0.0
    %v1362 = vmax.f32 %v996, 0.0
    %v1363 = vmax.f32 %v1001, 0.0
    %v1364 = vmax.f32 %v1006, 0.0
    %v1365 = vmax.f32 %v1011, 0.0
    %v1366 = vmax.f32 %v1016, 0.0
    %v1367 = vmax.f32 %v1021, 0.0
    %v1368 = vmax.f32 %v1026, 0.0
    %v1369 = vmax.f32 %v1031, 0.0
    %v1370 = vmax.f32 %v1036, 0.0
    %v1371 = vmax.f32 %v1041, 0.0
    %v1372 = vmax.f32 %v1046, 0.0
    %v1373 = vmax.f32 %v1051, 0.0
    %v1374 = vmax.f32 %v1056, 0.0
    %v1375 = vmax.f32 %v1061, 0.0
    %v1376 = vmax.f32 %v1066, 0.0
    %v1377 = vmax.f32 %v1071, 0.0
    %v1378 = vmax.f32 %v1076, 0.0
    %v1379 = vmax.f32 %v1081, 0.0
    %v1380 = vmax.f32 %v1086, 0.0
    %v1381 = vmax.f32 %v1091, 0.0
    %v1382 = vmax.f32 %v1096, 0.0
    %v1383 = vmax.f32 %v1101, 0.0
    %v1384 = vmax.f32 %v1106, 0.0
    %v1385 = vmax.f32 %v1111, 0.0
    %v1386 = vmax.f32 %v1116, 0.0
    %v1387 = vmax.f32 %v1121, 0.0
    %v1388 = vmax.f32 %v1126, 0.0
    %v1389 = vmax.f32 %v1131, 0.0
    %v1390 = vmax.f32 %v1136, 0.0
    %v1391 = vmax.f32 %v1141, 0.0
    %v1392 = vmax.f32 %v1146, 0.0
    %v1393 = vmax.f32 %v1151, 0.0
    %v1394 = vmax.f32 %v1156, 0.0
    %v1395 = vmax.f32 %v1161, 0.0
    %v1396 = vmax.f32 %v1166, 0.0
    %v1397 = vmax.f32 %v1171, 0.0
    %v1398 = vmax.f32 %v1176, 0.0
    %v1399 = vmax.f32 %v1181, 0.0
    %v1400 = vmax.f32 %v1186, 0.0
    %v1401 = vmax.f32 %v1191, 0.0
    %v1402 = vmax.f32 %v1196, 0.0
    %v1403 = vmax.f32 %v1201, 0.0
    %v1404 = vmax.f32 %v1206, 0.0
    %v1405 = vmax.f32 %v1211, 0.0
    %v1406 = vmax.f32 %v1216, 0.0
    %v1407 = vmax.f32 %v1221, 0.0
    %v1408 = vmax.f32 %v1226, 0.0
    %v1409 = vmax.f32 %v1231, 0.0
    %v1410 = vmax.f32 %v1236, 0.0
    %v1411 = vmax.f32 %v1241, 0.0
    %v1412 = vmax.f32 %v1246, 0.0
    %v1413 = vmax.f32 %v1251, 0.0
    %v1414 = vmax.f32 %v1256, 0.0
    %v1415 = vmax.f32 %v1261, 0.0
    %v1416 = vmax.f32 %v1266, 0.0
    %v1417 = vmax.f32 %v1271, 0.0
    %v1418 = vmax.f32 %v1276, 0.0
    %v1419 = vmax.f32 %v1281, 0.0
    %v1420 = vmax.f32 %v1286, 0.0
    %v1421 = vmax.f32 %v1291, 0.0
    %v1422 = vld [vmem:[%s4] sm:$0x1]
    %v1424 = vlaneseq
    %v1425 = vshrl.u32 %v1424, 7
    %v1426 = vsub.s32 0, %v1425
    %v1427 = vrot.slane %v1422, %v1426
    %vm1429 = vcmask 523264
    %v1431 = vsel %vm1429, %v1294, 0
    %v1434 = vsel %vm1429, %v1295, 0
    %v1437 = vsel %vm1429, %v1296, 0
    %v1440 = vsel %vm1429, %v1297, 0
    %v1443 = vsel %vm1429, %v1298, 0
    %v1446 = vsel %vm1429, %v1299, 0
    %v1449 = vsel %vm1429, %v1300, 0
    %v1452 = vsel %vm1429, %v1301, 0
    %v1455 = vsel %vm1429, %v1302, 0
    %v1458 = vsel %vm1429, %v1303, 0
    %v1461 = vsel %vm1429, %v1304, 0
    %v1464 = vsel %vm1429, %v1305, 0
    %v1467 = vsel %vm1429, %v1306, 0
    %v1470 = vsel %vm1429, %v1307, 0
    %v1473 = vsel %vm1429, %v1308, 0
    %v1476 = vsel %vm1429, %v1309, 0
    %v1479 = vsel %vm1429, %v1310, 0
    %v1482 = vsel %vm1429, %v1311, 0
    %v1485 = vsel %vm1429, %v1312, 0
    %v1488 = vsel %vm1429, %v1313, 0
    %v1491 = vsel %vm1429, %v1314, 0
    %v1494 = vsel %vm1429, %v1315, 0
    %v1497 = vsel %vm1429, %v1316, 0
    %v1500 = vsel %vm1429, %v1317, 0
    %v1503 = vsel %vm1429, %v1318, 0
    %v1506 = vsel %vm1429, %v1319, 0
    %v1509 = vsel %vm1429, %v1320, 0
    %v1512 = vsel %vm1429, %v1321, 0
    %v1515 = vsel %vm1429, %v1322, 0
    %v1518 = vsel %vm1429, %v1323, 0
    %v1521 = vsel %vm1429, %v1324, 0
    %v1524 = vsel %vm1429, %v1325, 0
    %v1527 = vsel %vm1429, %v1326, 0
    %v1530 = vsel %vm1429, %v1327, 0
    %v1533 = vsel %vm1429, %v1328, 0
    %v1536 = vsel %vm1429, %v1329, 0
    %v1539 = vsel %vm1429, %v1330, 0
    %v1542 = vsel %vm1429, %v1331, 0
    %v1545 = vsel %vm1429, %v1332, 0
    %v1548 = vsel %vm1429, %v1333, 0
    %v1551 = vsel %vm1429, %v1334, 0
    %v1554 = vsel %vm1429, %v1335, 0
    %v1557 = vsel %vm1429, %v1336, 0
    %v1560 = vsel %vm1429, %v1337, 0
    %v1563 = vsel %vm1429, %v1338, 0
    %v1566 = vsel %vm1429, %v1339, 0
    %v1569 = vsel %vm1429, %v1340, 0
    %v1572 = vsel %vm1429, %v1341, 0
    %v1575 = vsel %vm1429, %v1342, 0
    %v1578 = vsel %vm1429, %v1343, 0
    %v1581 = vsel %vm1429, %v1344, 0
    %v1584 = vsel %vm1429, %v1345, 0
    %v1587 = vsel %vm1429, %v1346, 0
    %v1590 = vsel %vm1429, %v1347, 0
    %v1593 = vsel %vm1429, %v1348, 0
    %v1596 = vsel %vm1429, %v1349, 0
    %v1599 = vsel %vm1429, %v1350, 0
    %v1602 = vsel %vm1429, %v1351, 0
    %v1605 = vsel %vm1429, %v1352, 0
    %v1608 = vsel %vm1429, %v1353, 0
    %v1611 = vsel %vm1429, %v1354, 0
    %v1614 = vsel %vm1429, %v1355, 0
    %v1617 = vsel %vm1429, %v1356, 0
    %v1620 = vsel %vm1429, %v1357, 0
    %v1623 = vsel %vm1429, %v1358, 0
    %v1626 = vsel %vm1429, %v1359, 0
    %v1629 = vsel %vm1429, %v1360, 0
    %v1632 = vsel %vm1429, %v1361, 0
    %v1635 = vsel %vm1429, %v1362, 0
    %v1638 = vsel %vm1429, %v1363, 0
    %v1641 = vsel %vm1429, %v1364, 0
    %v1644 = vsel %vm1429, %v1365, 0
    %v1647 = vsel %vm1429, %v1366, 0
    %v1650 = vsel %vm1429, %v1367, 0
    %v1653 = vsel %vm1429, %v1368, 0
    %v1656 = vsel %vm1429, %v1369, 0
    %v1659 = vsel %vm1429, %v1370, 0
    %v1662 = vsel %vm1429, %v1371, 0
    %v1665 = vsel %vm1429, %v1372, 0
    %v1668 = vsel %vm1429, %v1373, 0
    %v1671 = vsel %vm1429, %v1374, 0
    %v1674 = vsel %vm1429, %v1375, 0
    %v1677 = vsel %vm1429, %v1376, 0
    %v1680 = vsel %vm1429, %v1377, 0
    %v1683 = vsel %vm1429, %v1378, 0
    %v1686 = vsel %vm1429, %v1379, 0
    %v1689 = vsel %vm1429, %v1380, 0
    %v1692 = vsel %vm1429, %v1381, 0
    %v1695 = vsel %vm1429, %v1382, 0
    %v1698 = vsel %vm1429, %v1383, 0
    %v1701 = vsel %vm1429, %v1384, 0
    %v1704 = vsel %vm1429, %v1385, 0
    %v1707 = vsel %vm1429, %v1386, 0
    %v1710 = vsel %vm1429, %v1387, 0
    %v1713 = vsel %vm1429, %v1388, 0
    %v1716 = vsel %vm1429, %v1389, 0
    %v1719 = vsel %vm1429, %v1390, 0
    %v1722 = vsel %vm1429, %v1391, 0
    %v1725 = vsel %vm1429, %v1392, 0
    %v1728 = vsel %vm1429, %v1393, 0
    %v1731 = vsel %vm1429, %v1394, 0
    %v1734 = vsel %vm1429, %v1395, 0
    %v1737 = vsel %vm1429, %v1396, 0
    %v1740 = vsel %vm1429, %v1397, 0
    %v1743 = vsel %vm1429, %v1398, 0
    %v1746 = vsel %vm1429, %v1399, 0
    %v1749 = vsel %vm1429, %v1400, 0
    %v1752 = vsel %vm1429, %v1401, 0
    %v1755 = vsel %vm1429, %v1402, 0
    %v1758 = vsel %vm1429, %v1403, 0
    %v1761 = vsel %vm1429, %v1404, 0
    %v1764 = vsel %vm1429, %v1405, 0
    %v1767 = vsel %vm1429, %v1406, 0
    %v1770 = vsel %vm1429, %v1407, 0
    %v1773 = vsel %vm1429, %v1408, 0
    %v1776 = vsel %vm1429, %v1409, 0
    %v1779 = vsel %vm1429, %v1410, 0
    %v1782 = vsel %vm1429, %v1411, 0
    %v1785 = vsel %vm1429, %v1412, 0
    %v1788 = vsel %vm1429, %v1413, 0
    %v1791 = vsel %vm1429, %v1414, 0
    %v1794 = vsel %vm1429, %v1415, 0
    %v1797 = vsel %vm1429, %v1416, 0
    %v1800 = vsel %vm1429, %v1417, 0
    %v1803 = vsel %vm1429, %v1418, 0
    %v1806 = vsel %vm1429, %v1419, 0
    %v1809 = vsel %vm1429, %v1420, 0
    %v1812 = vsel %vm1429, %v1421, 0
    %1814 = vmatprep.subr.mxu0 0.0
    %1815 = vmatpush1.msra.mxu0 %v37
    %1816 = vmatprep.subr.mxu0 0.0
    %1817 = vmatpush1.msra.mxu0 %v38
    %1818 = vmatprep.subr.mxu0 0.0
    %1819 = vmatpush1.msra.mxu0 %v39
    %1820 = vmatprep.subr.mxu0 0.0
    %1821 = vmatpush1.msra.mxu0 %v40
    %1822 = vmatprep.subr.mxu0 0.0
    %1823 = vmatpush1.msra.mxu0 %v41
    %1824 = vmatprep.subr.mxu0 0.0
    %1825 = vmatpush1.msra.mxu0 %v42
    %1826 = vmatprep.subr.mxu0 0.0
    %1827 = vmatpush1.msra.mxu0 %v43
    %1828 = vmatprep.subr.mxu0 0.0
    %1829 = vmatpush1.msra.mxu0 %v44
    %1830 = vmatprep.subr.mxu0 0.0
    %1831 = vmatpush1.msra.mxu0 0.0
    %1832 = vmatprep.subr.mxu0 0.0
    %1833 = vmatpush1.msra.mxu0 0.0
    %1834 = vmatprep.subr.mxu0 0.0
    %1835 = vmatpush1.msra.mxu0 0.0
    %1836 = vmatprep.subr.mxu0 0.0
    %1837 = vmatpush1.msra.mxu0 0.0
    %1838 = vmatprep.subr.mxu0 0.0
    %1839 = vmatpush1.msra.mxu0 0.0
    %1840 = vmatprep.subr.mxu0 0.0
    %1841 = vmatpush1.msra.mxu0 0.0
    %1842 = vmatprep.subr.mxu0 0.0
    %1843 = vmatpush1.msra.mxu0 0.0
    %1844 = vmatprep.subr.mxu0 0.0
    %1845 = vmatpush1.msra.mxu0 0.0
    %1846 = vmatprep.subr.mxu0 0.0
    %1847 = vmatpush1.msra.mxu0 0.0
    %1848 = vmatprep.subr.mxu0 0.0
    %1849 = vmatpush1.msra.mxu0 0.0
    %1850 = vmatprep.subr.mxu0 0.0
    %1851 = vmatpush1.msra.mxu0 0.0
    %1852 = vmatprep.subr.mxu0 0.0
    %1853 = vmatpush1.msra.mxu0 0.0
    %1854 = vmatprep.subr.mxu0 0.0
    %1855 = vmatpush1.msra.mxu0 0.0
    %1856 = vmatprep.subr.mxu0 0.0
    %1857 = vmatpush1.msra.mxu0 0.0
    %1858 = vmatprep.subr.mxu0 0.0
    %1859 = vmatpush1.msra.mxu0 0.0
    %1860 = vmatprep.subr.mxu0 0.0
    %1861 = vmatpush1.msra.mxu0 0.0
    %1862 = vmatprep.subr.mxu0 0.0
    %1863 = vmatpush1.msra.mxu0 0.0
    %1864 = vmatprep.subr.mxu0 0.0
    %1865 = vmatpush1.msra.mxu0 0.0
    %1866 = vmatprep.subr.mxu0 0.0
    %1867 = vmatpush1.msra.mxu0 0.0
    %1868 = vmatprep.subr.mxu0 0.0
    %1869 = vmatpush1.msra.mxu0 0.0
    %1870 = vmatprep.subr.mxu0 0.0
    %1871 = vmatpush1.msra.mxu0 0.0
    %1872 = vmatprep.subr.mxu0 0.0
    %1873 = vmatpush1.msra.mxu0 0.0
    %1874 = vmatprep.subr.mxu0 0.0
    %1875 = vmatpush1.msra.mxu0 0.0
    %1876 = vmatprep.subr.mxu0 0.0
    %1877 = vmatpush1.msra.mxu0 0.0
    %1878 = vmatprep.mubr.f32.mxu0 0.0
    %1879 = vmatmul.mubr.f32.gmra.mrb[0].mxu0 %v1431
    %v1880 = vpop.f32.mrb[0].mxu0
    %v1881 = vadd.f32 %v1427, %v1880
    %v1882 = vpop.f32.mrb[0].mxu0
    %1883 = vmatprep.mubr.f32.mxu0 0.0
    %1884 = vmatmul.mubr.f32.gmra.mrb[0].mxu0 %v1434
    %v1885 = vpop.f32.mrb[0].mxu0
    %v1886 = vadd.f32 %v1427, %v1885
    %v1887 = vpop.f32.mrb[0].mxu0
    %1888 = vmatprep.mubr.f32.mxu0 0.0
    %1889 = vmatmul.mubr.f32.gmra.mrb[0].mxu0 %v1437
    %v1890 = vpop.f32.mrb[0].mxu0
    %v1891 = vadd.f32 %v1427, %v1890
    %v1892 = vpop.f32.mrb[0].mxu0
    %1893 = vmatprep.mubr.f32.mxu0 0.0
    %1894 = vmatmul.mubr.f32.gmra.mrb[0].mxu0 %v1440
    %v1895 = vpop.f32.mrb[0].mxu0
    %v1896 = vadd.f32 %v1427, %v1895
    %v1897 = vpop.f32.mrb[0].mxu0
    %1898 = vmatprep.mubr.f32.mxu0 0.0
    %1899 = vmatmul.mubr.f32.gmra.mrb[0].mxu0 %v1443
    %v1900 = vpop.f32.mrb[0].mxu0
    %v1901 = vadd.f32 %v1427, %v1900
    %v1902 = vpop.f32.mrb[0].mxu0
    %1903 = vmatprep.mubr.f32.mxu0 0.0
    %1904 = vmatmul.mubr.f32.gmra.mrb[0].mxu0 %v1446
    %v1905 = vpop.f32.mrb[0].mxu0
    %v1906 = vadd.f32 %v1427, %v1905
    %v1907 = vpop.f32.mrb[0].mxu0
    %1908 = vmatprep.mubr.f32.mxu0 0.0
    %1909 = vmatmul.mubr.f32.gmra.mrb[0].mxu0 %v1449
    %v1910 = vpop.f32.mrb[0].mxu0
    %v1911 = vadd.f32 %v1427, %v1910
    %v1912 = vpop.f32.mrb[0].mxu0
    %1913 = vmatprep.mubr.f32.mxu0 0.0
    %1914 = vmatmul.mubr.f32.gmra.mrb[0].mxu0 %v1452
    %v1915 = vpop.f32.mrb[0].mxu0
    %v1916 = vadd.f32 %v1427, %v1915
    %v1917 = vpop.f32.mrb[0].mxu0
    %1918 = vmatprep.mubr.f32.mxu0 0.0
    %1919 = vmatmul.mubr.f32.gmra.mrb[0].mxu0 %v1455
    %v1920 = vpop.f32.mrb[0].mxu0
    %v1921 = vadd.f32 %v1427, %v1920
    %v1922 = vpop.f32.mrb[0].mxu0
    %1923 = vmatprep.mubr.f32.mxu0 0.0
    %1924 = vmatmul.mubr.f32.gmra.mrb[0].mxu0 %v1458
    %v1925 = vpop.f32.mrb[0].mxu0
    %v1926 = vadd.f32 %v1427, %v1925
    %v1927 = vpop.f32.mrb[0].mxu0
    %1928 = vmatprep.mubr.f32.mxu0 0.0
    %1929 = vmatmul.mubr.f32.gmra.mrb[0].mxu0 %v1461
    %v1930 = vpop.f32.mrb[0].mxu0
    %v1931 = vadd.f32 %v1427, %v1930
    %v1932 = vpop.f32.mrb[0].mxu0
    %1933 = vmatprep.mubr.f32.mxu0 0.0
    %1934 = vmatmul.mubr.f32.gmra.mrb[0].mxu0 %v1464
    %v1935 = vpop.f32.mrb[0].mxu0
    %v1936 = vadd.f32 %v1427, %v1935
    %v1937 = vpop.f32.mrb[0].mxu0
    %1938 = vmatprep.mubr.f32.mxu0 0.0
    %1939 = vmatmul.mubr.f32.gmra.mrb[0].mxu0 %v1467
    %v1940 = vpop.f32.mrb[0].mxu0
    %v1941 = vadd.f32 %v1427, %v1940
    %v1942 = vpop.f32.mrb[0].mxu0
    %1943 = vmatprep.mubr.f32.mxu0 0.0
    %1944 = vmatmul.mubr.f32.gmra.mrb[0].mxu0 %v1470
    %v1945 = vpop.f32.mrb[0].mxu0
    %v1946 = vadd.f32 %v1427, %v1945
    %v1947 = vpop.f32.mrb[0].mxu0
    %1948 = vmatprep.mubr.f32.mxu0 0.0
    %1949 = vmatmul.mubr.f32.gmra.mrb[0].mxu0 %v1473
    %v1950 = vpop.f32.mrb[0].mxu0
    %v1951 = vadd.f32 %v1427, %v1950
    %v1952 = vpop.f32.mrb[0].mxu0
    %1953 = vmatprep.mubr.f32.mxu0 0.0
    %1954 = vmatmul.mubr.f32.gmra.mrb[0].mxu0 %v1476
    %v1955 = vpop.f32.mrb[0].mxu0
    %v1956 = vadd.f32 %v1427, %v1955
    %v1957 = vpop.f32.mrb[0].mxu0
    %1958 = vmatprep.mubr.f32.mxu0 0.0
    %1959 = vmatmul.mubr.f32.gmra.mrb[0].mxu0 %v1479
    %v1960 = vpop.f32.mrb[0].mxu0
    %v1961 = vadd.f32 %v1427, %v1960
    %v1962 = vpop.f32.mrb[0].mxu0
    %1963 = vmatprep.mubr.f32.mxu0 0.0
    %1964 = vmatmul.mubr.f32.gmra.mrb[0].mxu0 %v1482
    %v1965 = vpop.f32.mrb[0].mxu0
    %v1966 = vadd.f32 %v1427, %v1965
    %v1967 = vpop.f32.mrb[0].mxu0
    %1968 = vmatprep.mubr.f32.mxu0 0.0
    %1969 = vmatmul.mubr.f32.gmra.mrb[0].mxu0 %v1485
    %v1970 = vpop.f32.mrb[0].mxu0
    %v1971 = vadd.f32 %v1427, %v1970
    %v1972 = vpop.f32.mrb[0].mxu0
    %1973 = vmatprep.mubr.f32.mxu0 0.0
    %1974 = vmatmul.mubr.f32.gmra.mrb[0].mxu0 %v1488
    %v1975 = vpop.f32.mrb[0].mxu0
    %v1976 = vadd.f32 %v1427, %v1975
    %v1977 = vpop.f32.mrb[0].mxu0
    %1978 = vmatprep.mubr.f32.mxu0 0.0
    %1979 = vmatmul.mubr.f32.gmra.mrb[0].mxu0 %v1491
    %v1980 = vpop.f32.mrb[0].mxu0
    %v1981 = vadd.f32 %v1427, %v1980
    %v1982 = vpop.f32.mrb[0].mxu0
    %1983 = vmatprep.mubr.f32.mxu0 0.0
    %1984 = vmatmul.mubr.f32.gmra.mrb[0].mxu0 %v1494
    %v1985 = vpop.f32.mrb[0].mxu0
    %v1986 = vadd.f32 %v1427, %v1985
    %v1987 = vpop.f32.mrb[0].mxu0
    %1988 = vmatprep.mubr.f32.mxu0 0.0
    %1989 = vmatmul.mubr.f32.gmra.mrb[0].mxu0 %v1497
    %v1990 = vpop.f32.mrb[0].mxu0
    %v1991 = vadd.f32 %v1427, %v1990
    %v1992 = vpop.f32.mrb[0].mxu0
    %1993 = vmatprep.mubr.f32.mxu0 0.0
    %1994 = vmatmul.mubr.f32.gmra.mrb[0].mxu0 %v1500
    %v1995 = vpop.f32.mrb[0].mxu0
    %v1996 = vadd.f32 %v1427, %v1995
    %v1997 = vpop.f32.mrb[0].mxu0
    %1998 = vmatprep.mubr.f32.mxu0 0.0
    %1999 = vmatmul.mubr.f32.gmra.mrb[0].mxu0 %v1503
    %v2000 = vpop.f32.mrb[0].mxu0
    %v2001 = vadd.f32 %v1427, %v2000
    %v2002 = vpop.f32.mrb[0].mxu0
    %2003 = vmatprep.mubr.f32.mxu0 0.0
    %2004 = vmatmul.mubr.f32.gmra.mrb[0].mxu0 %v1506
    %v2005 = vpop.f32.mrb[0].mxu0
    %v2006 = vadd.f32 %v1427, %v2005
    %v2007 = vpop.f32.mrb[0].mxu0
    %2008 = vmatprep.mubr.f32.mxu0 0.0
    %2009 = vmatmul.mubr.f32.gmra.mrb[0].mxu0 %v1509
    %v2010 = vpop.f32.mrb[0].mxu0
    %v2011 = vadd.f32 %v1427, %v2010
    %v2012 = vpop.f32.mrb[0].mxu0
    %2013 = vmatprep.mubr.f32.mxu0 0.0
    %2014 = vmatmul.mubr.f32.gmra.mrb[0].mxu0 %v1512
    %v2015 = vpop.f32.mrb[0].mxu0
    %v2016 = vadd.f32 %v1427, %v2015
    %v2017 = vpop.f32.mrb[0].mxu0
    %2018 = vmatprep.mubr.f32.mxu0 0.0
    %2019 = vmatmul.mubr.f32.gmra.mrb[0].mxu0 %v1515
    %v2020 = vpop.f32.mrb[0].mxu0
    %v2021 = vadd.f32 %v1427, %v2020
    %v2022 = vpop.f32.mrb[0].mxu0
    %2023 = vmatprep.mubr.f32.mxu0 0.0
    %2024 = vmatmul.mubr.f32.gmra.mrb[0].mxu0 %v1518
    %v2025 = vpop.f32.mrb[0].mxu0
    %v2026 = vadd.f32 %v1427, %v2025
    %v2027 = vpop.f32.mrb[0].mxu0
    %2028 = vmatprep.mubr.f32.mxu0 0.0
    %2029 = vmatmul.mubr.f32.gmra.mrb[0].mxu0 %v1521
    %v2030 = vpop.f32.mrb[0].mxu0
    %v2031 = vadd.f32 %v1427, %v2030
    %v2032 = vpop.f32.mrb[0].mxu0
    %2033 = vmatprep.mubr.f32.mxu0 0.0
    %2034 = vmatmul.mubr.f32.gmra.mrb[0].mxu0 %v1524
    %v2035 = vpop.f32.mrb[0].mxu0
    %v2036 = vadd.f32 %v1427, %v2035
    %v2037 = vpop.f32.mrb[0].mxu0
    %2038 = vmatprep.mubr.f32.mxu0 0.0
    %2039 = vmatmul.mubr.f32.gmra.mrb[0].mxu0 %v1527
    %v2040 = vpop.f32.mrb[0].mxu0
    %v2041 = vadd.f32 %v1427, %v2040
    %v2042 = vpop.f32.mrb[0].mxu0
    %2043 = vmatprep.mubr.f32.mxu0 0.0
    %2044 = vmatmul.mubr.f32.gmra.mrb[0].mxu0 %v1530
    %v2045 = vpop.f32.mrb[0].mxu0
    %v2046 = vadd.f32 %v1427, %v2045
    %v2047 = vpop.f32.mrb[0].mxu0
    %2048 = vmatprep.mubr.f32.mxu0 0.0
    %2049 = vmatmul.mubr.f32.gmra.mrb[0].mxu0 %v1533
    %v2050 = vpop.f32.mrb[0].mxu0
    %v2051 = vadd.f32 %v1427, %v2050
    %v2052 = vpop.f32.mrb[0].mxu0
    %2053 = vmatprep.mubr.f32.mxu0 0.0
    %2054 = vmatmul.mubr.f32.gmra.mrb[0].mxu0 %v1536
    %v2055 = vpop.f32.mrb[0].mxu0
    %v2056 = vadd.f32 %v1427, %v2055
    %v2057 = vpop.f32.mrb[0].mxu0
    %2058 = vmatprep.mubr.f32.mxu0 0.0
    %2059 = vmatmul.mubr.f32.gmra.mrb[0].mxu0 %v1539
    %v2060 = vpop.f32.mrb[0].mxu0
    %v2061 = vadd.f32 %v1427, %v2060
    %v2062 = vpop.f32.mrb[0].mxu0
    %2063 = vmatprep.mubr.f32.mxu0 0.0
    %2064 = vmatmul.mubr.f32.gmra.mrb[0].mxu0 %v1542
    %v2065 = vpop.f32.mrb[0].mxu0
    %v2066 = vadd.f32 %v1427, %v2065
    %v2067 = vpop.f32.mrb[0].mxu0
    %2068 = vmatprep.mubr.f32.mxu0 0.0
    %2069 = vmatmul.mubr.f32.gmra.mrb[0].mxu0 %v1545
    %v2070 = vpop.f32.mrb[0].mxu0
    %v2071 = vadd.f32 %v1427, %v2070
    %v2072 = vpop.f32.mrb[0].mxu0
    %2073 = vmatprep.mubr.f32.mxu0 0.0
    %2074 = vmatmul.mubr.f32.gmra.mrb[0].mxu0 %v1548
    %v2075 = vpop.f32.mrb[0].mxu0
    %v2076 = vadd.f32 %v1427, %v2075
    %v2077 = vpop.f32.mrb[0].mxu0
    %2078 = vmatprep.mubr.f32.mxu0 0.0
    %2079 = vmatmul.mubr.f32.gmra.mrb[0].mxu0 %v1551
    %v2080 = vpop.f32.mrb[0].mxu0
    %v2081 = vadd.f32 %v1427, %v2080
    %v2082 = vpop.f32.mrb[0].mxu0
    %2083 = vmatprep.mubr.f32.mxu0 0.0
    %2084 = vmatmul.mubr.f32.gmra.mrb[0].mxu0 %v1554
    %v2085 = vpop.f32.mrb[0].mxu0
    %v2086 = vadd.f32 %v1427, %v2085
    %v2087 = vpop.f32.mrb[0].mxu0
    %2088 = vmatprep.mubr.f32.mxu0 0.0
    %2089 = vmatmul.mubr.f32.gmra.mrb[0].mxu0 %v1557
    %v2090 = vpop.f32.mrb[0].mxu0
    %v2091 = vadd.f32 %v1427, %v2090
    %v2092 = vpop.f32.mrb[0].mxu0
    %2093 = vmatprep.mubr.f32.mxu0 0.0
    %2094 = vmatmul.mubr.f32.gmra.mrb[0].mxu0 %v1560
    %v2095 = vpop.f32.mrb[0].mxu0
    %v2096 = vadd.f32 %v1427, %v2095
    %v2097 = vpop.f32.mrb[0].mxu0
    %2098 = vmatprep.mubr.f32.mxu0 0.0
    %2099 = vmatmul.mubr.f32.gmra.mrb[0].mxu0 %v1563
    %v2100 = vpop.f32.mrb[0].mxu0
    %v2101 = vadd.f32 %v1427, %v2100
    %v2102 = vpop.f32.mrb[0].mxu0
    %2103 = vmatprep.mubr.f32.mxu0 0.0
    %2104 = vmatmul.mubr.f32.gmra.mrb[0].mxu0 %v1566
    %v2105 = vpop.f32.mrb[0].mxu0
    %v2106 = vadd.f32 %v1427, %v2105
    %v2107 = vpop.f32.mrb[0].mxu0
    %2108 = vmatprep.mubr.f32.mxu0 0.0
    %2109 = vmatmul.mubr.f32.gmra.mrb[0].mxu0 %v1569
    %v2110 = vpop.f32.mrb[0].mxu0
    %v2111 = vadd.f32 %v1427, %v2110
    %v2112 = vpop.f32.mrb[0].mxu0
    %2113 = vmatprep.mubr.f32.mxu0 0.0
    %2114 = vmatmul.mubr.f32.gmra.mrb[0].mxu0 %v1572
    %v2115 = vpop.f32.mrb[0].mxu0
    %v2116 = vadd.f32 %v1427, %v2115
    %v2117 = vpop.f32.mrb[0].mxu0
    %2118 = vmatprep.mubr.f32.mxu0 0.0
    %2119 = vmatmul.mubr.f32.gmra.mrb[0].mxu0 %v1575
    %v2120 = vpop.f32.mrb[0].mxu0
    %v2121 = vadd.f32 %v1427, %v2120
    %v2122 = vpop.f32.mrb[0].mxu0
    %2123 = vmatprep.mubr.f32.mxu0 0.0
    %2124 = vmatmul.mubr.f32.gmra.mrb[0].mxu0 %v1578
    %v2125 = vpop.f32.mrb[0].mxu0
    %v2126 = vadd.f32 %v1427, %v2125
    %v2127 = vpop.f32.mrb[0].mxu0
    %2128 = vmatprep.mubr.f32.mxu0 0.0
    %2129 = vmatmul.mubr.f32.gmra.mrb[0].mxu0 %v1581
    %v2130 = vpop.f32.mrb[0].mxu0
    %v2131 = vadd.f32 %v1427, %v2130
    %v2132 = vpop.f32.mrb[0].mxu0
    %2133 = vmatprep.mubr.f32.mxu0 0.0
    %2134 = vmatmul.mubr.f32.gmra.mrb[0].mxu0 %v1584
    %v2135 = vpop.f32.mrb[0].mxu0
    %v2136 = vadd.f32 %v1427, %v2135
    %v2137 = vpop.f32.mrb[0].mxu0
    %2138 = vmatprep.mubr.f32.mxu0 0.0
    %2139 = vmatmul.mubr.f32.gmra.mrb[0].mxu0 %v1587
    %v2140 = vpop.f32.mrb[0].mxu0
    %v2141 = vadd.f32 %v1427, %v2140
    %v2142 = vpop.f32.mrb[0].mxu0
    %2143 = vmatprep.mubr.f32.mxu0 0.0
    %2144 = vmatmul.mubr.f32.gmra.mrb[0].mxu0 %v1590
    %v2145 = vpop.f32.mrb[0].mxu0
    %v2146 = vadd.f32 %v1427, %v2145
    %v2147 = vpop.f32.mrb[0].mxu0
    %2148 = vmatprep.mubr.f32.mxu0 0.0
    %2149 = vmatmul.mubr.f32.gmra.mrb[0].mxu0 %v1593
    %v2150 = vpop.f32.mrb[0].mxu0
    %v2151 = vadd.f32 %v1427, %v2150
    %v2152 = vpop.f32.mrb[0].mxu0
    %2153 = vmatprep.mubr.f32.mxu0 0.0
    %2154 = vmatmul.mubr.f32.gmra.mrb[0].mxu0 %v1596
    %v2155 = vpop.f32.mrb[0].mxu0
    %v2156 = vadd.f32 %v1427, %v2155
    %v2157 = vpop.f32.mrb[0].mxu0
    %2158 = vmatprep.mubr.f32.mxu0 0.0
    %2159 = vmatmul.mubr.f32.gmra.mrb[0].mxu0 %v1599
    %v2160 = vpop.f32.mrb[0].mxu0
    %v2161 = vadd.f32 %v1427, %v2160
    %v2162 = vpop.f32.mrb[0].mxu0
    %2163 = vmatprep.mubr.f32.mxu0 0.0
    %2164 = vmatmul.mubr.f32.gmra.mrb[0].mxu0 %v1602
    %v2165 = vpop.f32.mrb[0].mxu0
    %v2166 = vadd.f32 %v1427, %v2165
    %v2167 = vpop.f32.mrb[0].mxu0
    %2168 = vmatprep.mubr.f32.mxu0 0.0
    %2169 = vmatmul.mubr.f32.gmra.mrb[0].mxu0 %v1605
    %v2170 = vpop.f32.mrb[0].mxu0
    %v2171 = vadd.f32 %v1427, %v2170
    %v2172 = vpop.f32.mrb[0].mxu0
    %2173 = vmatprep.mubr.f32.mxu0 0.0
    %2174 = vmatmul.mubr.f32.gmra.mrb[0].mxu0 %v1608
    %v2175 = vpop.f32.mrb[0].mxu0
    %v2176 = vadd.f32 %v1427, %v2175
    %v2177 = vpop.f32.mrb[0].mxu0
    %2178 = vmatprep.mubr.f32.mxu0 0.0
    %2179 = vmatmul.mubr.f32.gmra.mrb[0].mxu0 %v1611
    %v2180 = vpop.f32.mrb[0].mxu0
    %v2181 = vadd.f32 %v1427, %v2180
    %v2182 = vpop.f32.mrb[0].mxu0
    %2183 = vmatprep.mubr.f32.mxu0 0.0
    %2184 = vmatmul.mubr.f32.gmra.mrb[0].mxu0 %v1614
    %v2185 = vpop.f32.mrb[0].mxu0
    %v2186 = vadd.f32 %v1427, %v2185
    %v2187 = vpop.f32.mrb[0].mxu0
    %2188 = vmatprep.mubr.f32.mxu0 0.0
    %2189 = vmatmul.mubr.f32.gmra.mrb[0].mxu0 %v1617
    %v2190 = vpop.f32.mrb[0].mxu0
    %v2191 = vadd.f32 %v1427, %v2190
    %v2192 = vpop.f32.mrb[0].mxu0
    %2193 = vmatprep.mubr.f32.mxu0 0.0
    %2194 = vmatmul.mubr.f32.gmra.mrb[0].mxu0 %v1620
    %v2195 = vpop.f32.mrb[0].mxu0
    %v2196 = vadd.f32 %v1427, %v2195
    %v2197 = vpop.f32.mrb[0].mxu0
    %2198 = vmatprep.mubr.f32.mxu0 0.0
    %2199 = vmatmul.mubr.f32.gmra.mrb[0].mxu0 %v1623
    %v2200 = vpop.f32.mrb[0].mxu0
    %v2201 = vadd.f32 %v1427, %v2200
    %v2202 = vpop.f32.mrb[0].mxu0
    %2203 = vmatprep.mubr.f32.mxu0 0.0
    %2204 = vmatmul.mubr.f32.gmra.mrb[0].mxu0 %v1626
    %v2205 = vpop.f32.mrb[0].mxu0
    %v2206 = vadd.f32 %v1427, %v2205
    %v2207 = vpop.f32.mrb[0].mxu0
    %2208 = vmatprep.mubr.f32.mxu0 0.0
    %2209 = vmatmul.mubr.f32.gmra.mrb[0].mxu0 %v1629
    %v2210 = vpop.f32.mrb[0].mxu0
    %v2211 = vadd.f32 %v1427, %v2210
    %v2212 = vpop.f32.mrb[0].mxu0
    %2213 = vmatprep.mubr.f32.mxu0 0.0
    %2214 = vmatmul.mubr.f32.gmra.mrb[0].mxu0 %v1632
    %v2215 = vpop.f32.mrb[0].mxu0
    %v2216 = vadd.f32 %v1427, %v2215
    %v2217 = vpop.f32.mrb[0].mxu0
    %2218 = vmatprep.mubr.f32.mxu0 0.0
    %2219 = vmatmul.mubr.f32.gmra.mrb[0].mxu0 %v1635
    %v2220 = vpop.f32.mrb[0].mxu0
    %v2221 = vadd.f32 %v1427, %v2220
    %v2222 = vpop.f32.mrb[0].mxu0
    %2223 = vmatprep.mubr.f32.mxu0 0.0
    %2224 = vmatmul.mubr.f32.gmra.mrb[0].mxu0 %v1638
    %v2225 = vpop.f32.mrb[0].mxu0
    %v2226 = vadd.f32 %v1427, %v2225
    %v2227 = vpop.f32.mrb[0].mxu0
    %2228 = vmatprep.mubr.f32.mxu0 0.0
    %2229 = vmatmul.mubr.f32.gmra.mrb[0].mxu0 %v1641
    %v2230 = vpop.f32.mrb[0].mxu0
    %v2231 = vadd.f32 %v1427, %v2230
    %v2232 = vpop.f32.mrb[0].mxu0
    %2233 = vmatprep.mubr.f32.mxu0 0.0
    %2234 = vmatmul.mubr.f32.gmra.mrb[0].mxu0 %v1644
    %v2235 = vpop.f32.mrb[0].mxu0
    %v2236 = vadd.f32 %v1427, %v2235
    %v2237 = vpop.f32.mrb[0].mxu0
    %2238 = vmatprep.mubr.f32.mxu0 0.0
    %2239 = vmatmul.mubr.f32.gmra.mrb[0].mxu0 %v1647
    %v2240 = vpop.f32.mrb[0].mxu0
    %v2241 = vadd.f32 %v1427, %v2240
    %v2242 = vpop.f32.mrb[0].mxu0
    %2243 = vmatprep.mubr.f32.mxu0 0.0
    %2244 = vmatmul.mubr.f32.gmra.mrb[0].mxu0 %v1650
    %v2245 = vpop.f32.mrb[0].mxu0
    %v2246 = vadd.f32 %v1427, %v2245
    %v2247 = vpop.f32.mrb[0].mxu0
    %2248 = vmatprep.mubr.f32.mxu0 0.0
    %2249 = vmatmul.mubr.f32.gmra.mrb[0].mxu0 %v1653
    %v2250 = vpop.f32.mrb[0].mxu0
    %v2251 = vadd.f32 %v1427, %v2250
    %v2252 = vpop.f32.mrb[0].mxu0
    %2253 = vmatprep.mubr.f32.mxu0 0.0
    %2254 = vmatmul.mubr.f32.gmra.mrb[0].mxu0 %v1656
    %v2255 = vpop.f32.mrb[0].mxu0
    %v2256 = vadd.f32 %v1427, %v2255
    %v2257 = vpop.f32.mrb[0].mxu0
    %2258 = vmatprep.mubr.f32.mxu0 0.0
    %2259 = vmatmul.mubr.f32.gmra.mrb[0].mxu0 %v1659
    %v2260 = vpop.f32.mrb[0].mxu0
    %v2261 = vadd.f32 %v1427, %v2260
    %v2262 = vpop.f32.mrb[0].mxu0
    %2263 = vmatprep.mubr.f32.mxu0 0.0
    %2264 = vmatmul.mubr.f32.gmra.mrb[0].mxu0 %v1662
    %v2265 = vpop.f32.mrb[0].mxu0
    %v2266 = vadd.f32 %v1427, %v2265
    %v2267 = vpop.f32.mrb[0].mxu0
    %2268 = vmatprep.mubr.f32.mxu0 0.0
    %2269 = vmatmul.mubr.f32.gmra.mrb[0].mxu0 %v1665
    %v2270 = vpop.f32.mrb[0].mxu0
    %v2271 = vadd.f32 %v1427, %v2270
    %v2272 = vpop.f32.mrb[0].mxu0
    %2273 = vmatprep.mubr.f32.mxu0 0.0
    %2274 = vmatmul.mubr.f32.gmra.mrb[0].mxu0 %v1668
    %v2275 = vpop.f32.mrb[0].mxu0
    %v2276 = vadd.f32 %v1427, %v2275
    %v2277 = vpop.f32.mrb[0].mxu0
    %2278 = vmatprep.mubr.f32.mxu0 0.0
    %2279 = vmatmul.mubr.f32.gmra.mrb[0].mxu0 %v1671
    %v2280 = vpop.f32.mrb[0].mxu0
    %v2281 = vadd.f32 %v1427, %v2280
    %v2282 = vpop.f32.mrb[0].mxu0
    %2283 = vmatprep.mubr.f32.mxu0 0.0
    %2284 = vmatmul.mubr.f32.gmra.mrb[0].mxu0 %v1674
    %v2285 = vpop.f32.mrb[0].mxu0
    %v2286 = vadd.f32 %v1427, %v2285
    %v2287 = vpop.f32.mrb[0].mxu0
    %2288 = vmatprep.mubr.f32.mxu0 0.0
    %2289 = vmatmul.mubr.f32.gmra.mrb[0].mxu0 %v1677
    %v2290 = vpop.f32.mrb[0].mxu0
    %v2291 = vadd.f32 %v1427, %v2290
    %v2292 = vpop.f32.mrb[0].mxu0
    %2293 = vmatprep.mubr.f32.mxu0 0.0
    %2294 = vmatmul.mubr.f32.gmra.mrb[0].mxu0 %v1680
    %v2295 = vpop.f32.mrb[0].mxu0
    %v2296 = vadd.f32 %v1427, %v2295
    %v2297 = vpop.f32.mrb[0].mxu0
    %2298 = vmatprep.mubr.f32.mxu0 0.0
    %2299 = vmatmul.mubr.f32.gmra.mrb[0].mxu0 %v1683
    %v2300 = vpop.f32.mrb[0].mxu0
    %v2301 = vadd.f32 %v1427, %v2300
    %v2302 = vpop.f32.mrb[0].mxu0
    %2303 = vmatprep.mubr.f32.mxu0 0.0
    %2304 = vmatmul.mubr.f32.gmra.mrb[0].mxu0 %v1686
    %v2305 = vpop.f32.mrb[0].mxu0
    %v2306 = vadd.f32 %v1427, %v2305
    %v2307 = vpop.f32.mrb[0].mxu0
    %2308 = vmatprep.mubr.f32.mxu0 0.0
    %2309 = vmatmul.mubr.f32.gmra.mrb[0].mxu0 %v1689
    %v2310 = vpop.f32.mrb[0].mxu0
    %v2311 = vadd.f32 %v1427, %v2310
    %v2312 = vpop.f32.mrb[0].mxu0
    %2313 = vmatprep.mubr.f32.mxu0 0.0
    %2314 = vmatmul.mubr.f32.gmra.mrb[0].mxu0 %v1692
    %v2315 = vpop.f32.mrb[0].mxu0
    %v2316 = vadd.f32 %v1427, %v2315
    %v2317 = vpop.f32.mrb[0].mxu0
    %2318 = vmatprep.mubr.f32.mxu0 0.0
    %2319 = vmatmul.mubr.f32.gmra.mrb[0].mxu0 %v1695
    %v2320 = vpop.f32.mrb[0].mxu0
    %v2321 = vadd.f32 %v1427, %v2320
    %v2322 = vpop.f32.mrb[0].mxu0
    %2323 = vmatprep.mubr.f32.mxu0 0.0
    %2324 = vmatmul.mubr.f32.gmra.mrb[0].mxu0 %v1698
    %v2325 = vpop.f32.mrb[0].mxu0
    %v2326 = vadd.f32 %v1427, %v2325
    %v2327 = vpop.f32.mrb[0].mxu0
    %2328 = vmatprep.mubr.f32.mxu0 0.0
    %2329 = vmatmul.mubr.f32.gmra.mrb[0].mxu0 %v1701
    %v2330 = vpop.f32.mrb[0].mxu0
    %v2331 = vadd.f32 %v1427, %v2330
    %v2332 = vpop.f32.mrb[0].mxu0
    %2333 = vmatprep.mubr.f32.mxu0 0.0
    %2334 = vmatmul.mubr.f32.gmra.mrb[0].mxu0 %v1704
    %v2335 = vpop.f32.mrb[0].mxu0
    %v2336 = vadd.f32 %v1427, %v2335
    %v2337 = vpop.f32.mrb[0].mxu0
    %2338 = vmatprep.mubr.f32.mxu0 0.0
    %2339 = vmatmul.mubr.f32.gmra.mrb[0].mxu0 %v1707
    %v2340 = vpop.f32.mrb[0].mxu0
    %v2341 = vadd.f32 %v1427, %v2340
    %v2342 = vpop.f32.mrb[0].mxu0
    %2343 = vmatprep.mubr.f32.mxu0 0.0
    %2344 = vmatmul.mubr.f32.gmra.mrb[0].mxu0 %v1710
    %v2345 = vpop.f32.mrb[0].mxu0
    %v2346 = vadd.f32 %v1427, %v2345
    %v2347 = vpop.f32.mrb[0].mxu0
    %2348 = vmatprep.mubr.f32.mxu0 0.0
    %2349 = vmatmul.mubr.f32.gmra.mrb[0].mxu0 %v1713
    %v2350 = vpop.f32.mrb[0].mxu0
    %v2351 = vadd.f32 %v1427, %v2350
    %v2352 = vpop.f32.mrb[0].mxu0
    %2353 = vmatprep.mubr.f32.mxu0 0.0
    %2354 = vmatmul.mubr.f32.gmra.mrb[0].mxu0 %v1716
    %v2355 = vpop.f32.mrb[0].mxu0
    %v2356 = vadd.f32 %v1427, %v2355
    %v2357 = vpop.f32.mrb[0].mxu0
    %2358 = vmatprep.mubr.f32.mxu0 0.0
    %2359 = vmatmul.mubr.f32.gmra.mrb[0].mxu0 %v1719
    %v2360 = vpop.f32.mrb[0].mxu0
    %v2361 = vadd.f32 %v1427, %v2360
    %v2362 = vpop.f32.mrb[0].mxu0
    %2363 = vmatprep.mubr.f32.mxu0 0.0
    %2364 = vmatmul.mubr.f32.gmra.mrb[0].mxu0 %v1722
    %v2365 = vpop.f32.mrb[0].mxu0
    %v2366 = vadd.f32 %v1427, %v2365
    %v2367 = vpop.f32.mrb[0].mxu0
    %2368 = vmatprep.mubr.f32.mxu0 0.0
    %2369 = vmatmul.mubr.f32.gmra.mrb[0].mxu0 %v1725
    %v2370 = vpop.f32.mrb[0].mxu0
    %v2371 = vadd.f32 %v1427, %v2370
    %v2372 = vpop.f32.mrb[0].mxu0
    %2373 = vmatprep.mubr.f32.mxu0 0.0
    %2374 = vmatmul.mubr.f32.gmra.mrb[0].mxu0 %v1728
    %v2375 = vpop.f32.mrb[0].mxu0
    %v2376 = vadd.f32 %v1427, %v2375
    %v2377 = vpop.f32.mrb[0].mxu0
    %2378 = vmatprep.mubr.f32.mxu0 0.0
    %2379 = vmatmul.mubr.f32.gmra.mrb[0].mxu0 %v1731
    %v2380 = vpop.f32.mrb[0].mxu0
    %v2381 = vadd.f32 %v1427, %v2380
    %v2382 = vpop.f32.mrb[0].mxu0
    %2383 = vmatprep.mubr.f32.mxu0 0.0
    %2384 = vmatmul.mubr.f32.gmra.mrb[0].mxu0 %v1734
    %v2385 = vpop.f32.mrb[0].mxu0
    %v2386 = vadd.f32 %v1427, %v2385
    %v2387 = vpop.f32.mrb[0].mxu0
    %2388 = vmatprep.mubr.f32.mxu0 0.0
    %2389 = vmatmul.mubr.f32.gmra.mrb[0].mxu0 %v1737
    %v2390 = vpop.f32.mrb[0].mxu0
    %v2391 = vadd.f32 %v1427, %v2390
    %v2392 = vpop.f32.mrb[0].mxu0
    %2393 = vmatprep.mubr.f32.mxu0 0.0
    %2394 = vmatmul.mubr.f32.gmra.mrb[0].mxu0 %v1740
    %v2395 = vpop.f32.mrb[0].mxu0
    %v2396 = vadd.f32 %v1427, %v2395
    %v2397 = vpop.f32.mrb[0].mxu0
    %2398 = vmatprep.mubr.f32.mxu0 0.0
    %2399 = vmatmul.mubr.f32.gmra.mrb[0].mxu0 %v1743
    %v2400 = vpop.f32.mrb[0].mxu0
    %v2401 = vadd.f32 %v1427, %v2400
    %v2402 = vpop.f32.mrb[0].mxu0
    %2403 = vmatprep.mubr.f32.mxu0 0.0
    %2404 = vmatmul.mubr.f32.gmra.mrb[0].mxu0 %v1746
    %v2405 = vpop.f32.mrb[0].mxu0
    %v2406 = vadd.f32 %v1427, %v2405
    %v2407 = vpop.f32.mrb[0].mxu0
    %2408 = vmatprep.mubr.f32.mxu0 0.0
    %2409 = vmatmul.mubr.f32.gmra.mrb[0].mxu0 %v1749
    %v2410 = vpop.f32.mrb[0].mxu0
    %v2411 = vadd.f32 %v1427, %v2410
    %v2412 = vpop.f32.mrb[0].mxu0
    %2413 = vmatprep.mubr.f32.mxu0 0.0
    %2414 = vmatmul.mubr.f32.gmra.mrb[0].mxu0 %v1752
    %v2415 = vpop.f32.mrb[0].mxu0
    %v2416 = vadd.f32 %v1427, %v2415
    %v2417 = vpop.f32.mrb[0].mxu0
    %2418 = vmatprep.mubr.f32.mxu0 0.0
    %2419 = vmatmul.mubr.f32.gmra.mrb[0].mxu0 %v1755
    %v2420 = vpop.f32.mrb[0].mxu0
    %v2421 = vadd.f32 %v1427, %v2420
    %v2422 = vpop.f32.mrb[0].mxu0
    %2423 = vmatprep.mubr.f32.mxu0 0.0
    %2424 = vmatmul.mubr.f32.gmra.mrb[0].mxu0 %v1758
    %v2425 = vpop.f32.mrb[0].mxu0
    %v2426 = vadd.f32 %v1427, %v2425
    %v2427 = vpop.f32.mrb[0].mxu0
    %2428 = vmatprep.mubr.f32.mxu0 0.0
    %2429 = vmatmul.mubr.f32.gmra.mrb[0].mxu0 %v1761
    %v2430 = vpop.f32.mrb[0].mxu0
    %v2431 = vadd.f32 %v1427, %v2430
    %v2432 = vpop.f32.mrb[0].mxu0
    %2433 = vmatprep.mubr.f32.mxu0 0.0
    %2434 = vmatmul.mubr.f32.gmra.mrb[0].mxu0 %v1764
    %v2435 = vpop.f32.mrb[0].mxu0
    %v2436 = vadd.f32 %v1427, %v2435
    %v2437 = vpop.f32.mrb[0].mxu0
    %2438 = vmatprep.mubr.f32.mxu0 0.0
    %2439 = vmatmul.mubr.f32.gmra.mrb[0].mxu0 %v1767
    %v2440 = vpop.f32.mrb[0].mxu0
    %v2441 = vadd.f32 %v1427, %v2440
    %v2442 = vpop.f32.mrb[0].mxu0
    %2443 = vmatprep.mubr.f32.mxu0 0.0
    %2444 = vmatmul.mubr.f32.gmra.mrb[0].mxu0 %v1770
    %v2445 = vpop.f32.mrb[0].mxu0
    %v2446 = vadd.f32 %v1427, %v2445
    %v2447 = vpop.f32.mrb[0].mxu0
    %2448 = vmatprep.mubr.f32.mxu0 0.0
    %2449 = vmatmul.mubr.f32.gmra.mrb[0].mxu0 %v1773
    %v2450 = vpop.f32.mrb[0].mxu0
    %v2451 = vadd.f32 %v1427, %v2450
    %v2452 = vpop.f32.mrb[0].mxu0
    %2453 = vmatprep.mubr.f32.mxu0 0.0
    %2454 = vmatmul.mubr.f32.gmra.mrb[0].mxu0 %v1776
    %v2455 = vpop.f32.mrb[0].mxu0
    %v2456 = vadd.f32 %v1427, %v2455
    %v2457 = vpop.f32.mrb[0].mxu0
    %2458 = vmatprep.mubr.f32.mxu0 0.0
    %2459 = vmatmul.mubr.f32.gmra.mrb[0].mxu0 %v1779
    %v2460 = vpop.f32.mrb[0].mxu0
    %v2461 = vadd.f32 %v1427, %v2460
    %v2462 = vpop.f32.mrb[0].mxu0
    %2463 = vmatprep.mubr.f32.mxu0 0.0
    %2464 = vmatmul.mubr.f32.gmra.mrb[0].mxu0 %v1782
    %v2465 = vpop.f32.mrb[0].mxu0
    %v2466 = vadd.f32 %v1427, %v2465
    %v2467 = vpop.f32.mrb[0].mxu0
    %2468 = vmatprep.mubr.f32.mxu0 0.0
    %2469 = vmatmul.mubr.f32.gmra.mrb[0].mxu0 %v1785
    %v2470 = vpop.f32.mrb[0].mxu0
    %v2471 = vadd.f32 %v1427, %v2470
    %v2472 = vpop.f32.mrb[0].mxu0
    %2473 = vmatprep.mubr.f32.mxu0 0.0
    %2474 = vmatmul.mubr.f32.gmra.mrb[0].mxu0 %v1788
    %v2475 = vpop.f32.mrb[0].mxu0
    %v2476 = vadd.f32 %v1427, %v2475
    %v2477 = vpop.f32.mrb[0].mxu0
    %2478 = vmatprep.mubr.f32.mxu0 0.0
    %2479 = vmatmul.mubr.f32.gmra.mrb[0].mxu0 %v1791
    %v2480 = vpop.f32.mrb[0].mxu0
    %v2481 = vadd.f32 %v1427, %v2480
    %v2482 = vpop.f32.mrb[0].mxu0
    %2483 = vmatprep.mubr.f32.mxu0 0.0
    %2484 = vmatmul.mubr.f32.gmra.mrb[0].mxu0 %v1794
    %v2485 = vpop.f32.mrb[0].mxu0
    %v2486 = vadd.f32 %v1427, %v2485
    %v2487 = vpop.f32.mrb[0].mxu0
    %2488 = vmatprep.mubr.f32.mxu0 0.0
    %2489 = vmatmul.mubr.f32.gmra.mrb[0].mxu0 %v1797
    %v2490 = vpop.f32.mrb[0].mxu0
    %v2491 = vadd.f32 %v1427, %v2490
    %v2492 = vpop.f32.mrb[0].mxu0
    %2493 = vmatprep.mubr.f32.mxu0 0.0
    %2494 = vmatmul.mubr.f32.gmra.mrb[0].mxu0 %v1800
    %v2495 = vpop.f32.mrb[0].mxu0
    %v2496 = vadd.f32 %v1427, %v2495
    %v2497 = vpop.f32.mrb[0].mxu0
    %2498 = vmatprep.mubr.f32.mxu0 0.0
    %2499 = vmatmul.mubr.f32.gmra.mrb[0].mxu0 %v1803
    %v2500 = vpop.f32.mrb[0].mxu0
    %v2501 = vadd.f32 %v1427, %v2500
    %v2502 = vpop.f32.mrb[0].mxu0
    %2503 = vmatprep.mubr.f32.mxu0 0.0
    %2504 = vmatmul.mubr.f32.gmra.mrb[0].mxu0 %v1806
    %v2505 = vpop.f32.mrb[0].mxu0
    %v2506 = vadd.f32 %v1427, %v2505
    %v2507 = vpop.f32.mrb[0].mxu0
    %2508 = vmatprep.mubr.f32.mxu0 0.0
    %2509 = vmatmul.mubr.f32.gmra.mrb[0].mxu0 %v1809
    %v2510 = vpop.f32.mrb[0].mxu0
    %v2511 = vadd.f32 %v1427, %v2510
    %v2512 = vpop.f32.mrb[0].mxu0
    %2513 = vmatprep.mubr.f32.mxu0 0.0
    %2514 = vmatmul.mubr.f32.gmra.mrb[0].mxu0 %v1812
    %v2515 = vpop.f32.mrb[0].mxu0
    %v2516 = vadd.f32 %v1427, %v2515
    %v2517 = vpop.f32.mrb[0].mxu0
    %2518 = vdwg.mxu0
    %v2519 = vmax.f32 %v1881, 0.0
    %v2520 = vmax.f32 %v1886, 0.0
    %v2521 = vmax.f32 %v1891, 0.0
    %v2522 = vmax.f32 %v1896, 0.0
    %v2523 = vmax.f32 %v1901, 0.0
    %v2524 = vmax.f32 %v1906, 0.0
    %v2525 = vmax.f32 %v1911, 0.0
    %v2526 = vmax.f32 %v1916, 0.0
    %v2527 = vmax.f32 %v1921, 0.0
    %v2528 = vmax.f32 %v1926, 0.0
    %v2529 = vmax.f32 %v1931, 0.0
    %v2530 = vmax.f32 %v1936, 0.0
    %v2531 = vmax.f32 %v1941, 0.0
    %v2532 = vmax.f32 %v1946, 0.0
    %v2533 = vmax.f32 %v1951, 0.0
    %v2534 = vmax.f32 %v1956, 0.0
    %v2535 = vmax.f32 %v1961, 0.0
    %v2536 = vmax.f32 %v1966, 0.0
    %v2537 = vmax.f32 %v1971, 0.0
    %v2538 = vmax.f32 %v1976, 0.0
    %v2539 = vmax.f32 %v1981, 0.0
    %v2540 = vmax.f32 %v1986, 0.0
    %v2541 = vmax.f32 %v1991, 0.0
    %v2542 = vmax.f32 %v1996, 0.0
    %v2543 = vmax.f32 %v2001, 0.0
    %v2544 = vmax.f32 %v2006, 0.0
    %v2545 = vmax.f32 %v2011, 0.0
    %v2546 = vmax.f32 %v2016, 0.0
    %v2547 = vmax.f32 %v2021, 0.0
    %v2548 = vmax.f32 %v2026, 0.0
    %v2549 = vmax.f32 %v2031, 0.0
    %v2550 = vmax.f32 %v2036, 0.0
    %v2551 = vmax.f32 %v2041, 0.0
    %v2552 = vmax.f32 %v2046, 0.0
    %v2553 = vmax.f32 %v2051, 0.0
    %v2554 = vmax.f32 %v2056, 0.0
    %v2555 = vmax.f32 %v2061, 0.0
    %v2556 = vmax.f32 %v2066, 0.0
    %v2557 = vmax.f32 %v2071, 0.0
    %v2558 = vmax.f32 %v2076, 0.0
    %v2559 = vmax.f32 %v2081, 0.0
    %v2560 = vmax.f32 %v2086, 0.0
    %v2561 = vmax.f32 %v2091, 0.0
    %v2562 = vmax.f32 %v2096, 0.0
    %v2563 = vmax.f32 %v2101, 0.0
    %v2564 = vmax.f32 %v2106, 0.0
    %v2565 = vmax.f32 %v2111, 0.0
    %v2566 = vmax.f32 %v2116, 0.0
    %v2567 = vmax.f32 %v2121, 0.0
    %v2568 = vmax.f32 %v2126, 0.0
    %v2569 = vmax.f32 %v2131, 0.0
    %v2570 = vmax.f32 %v2136, 0.0
    %v2571 = vmax.f32 %v2141, 0.0
    %v2572 = vmax.f32 %v2146, 0.0
    %v2573 = vmax.f32 %v2151, 0.0
    %v2574 = vmax.f32 %v2156, 0.0
    %v2575 = vmax.f32 %v2161, 0.0
    %v2576 = vmax.f32 %v2166, 0.0
    %v2577 = vmax.f32 %v2171, 0.0
    %v2578 = vmax.f32 %v2176, 0.0
    %v2579 = vmax.f32 %v2181, 0.0
    %v2580 = vmax.f32 %v2186, 0.0
    %v2581 = vmax.f32 %v2191, 0.0
    %v2582 = vmax.f32 %v2196, 0.0
    %v2583 = vmax.f32 %v2201, 0.0
    %v2584 = vmax.f32 %v2206, 0.0
    %v2585 = vmax.f32 %v2211, 0.0
    %v2586 = vmax.f32 %v2216, 0.0
    %v2587 = vmax.f32 %v2221, 0.0
    %v2588 = vmax.f32 %v2226, 0.0
    %v2589 = vmax.f32 %v2231, 0.0
    %v2590 = vmax.f32 %v2236, 0.0
    %v2591 = vmax.f32 %v2241, 0.0
    %v2592 = vmax.f32 %v2246, 0.0
    %v2593 = vmax.f32 %v2251, 0.0
    %v2594 = vmax.f32 %v2256, 0.0
    %v2595 = vmax.f32 %v2261, 0.0
    %v2596 = vmax.f32 %v2266, 0.0
    %v2597 = vmax.f32 %v2271, 0.0
    %v2598 = vmax.f32 %v2276, 0.0
    %v2599 = vmax.f32 %v2281, 0.0
    %v2600 = vmax.f32 %v2286, 0.0
    %v2601 = vmax.f32 %v2291, 0.0
    %v2602 = vmax.f32 %v2296, 0.0
    %v2603 = vmax.f32 %v2301, 0.0
    %v2604 = vmax.f32 %v2306, 0.0
    %v2605 = vmax.f32 %v2311, 0.0
    %v2606 = vmax.f32 %v2316, 0.0
    %v2607 = vmax.f32 %v2321, 0.0
    %v2608 = vmax.f32 %v2326, 0.0
    %v2609 = vmax.f32 %v2331, 0.0
    %v2610 = vmax.f32 %v2336, 0.0
    %v2611 = vmax.f32 %v2341, 0.0
    %v2612 = vmax.f32 %v2346, 0.0
    %v2613 = vmax.f32 %v2351, 0.0
    %v2614 = vmax.f32 %v2356, 0.0
    %v2615 = vmax.f32 %v2361, 0.0
    %v2616 = vmax.f32 %v2366, 0.0
    %v2617 = vmax.f32 %v2371, 0.0
    %v2618 = vmax.f32 %v2376, 0.0
    %v2619 = vmax.f32 %v2381, 0.0
    %v2620 = vmax.f32 %v2386, 0.0
    %v2621 = vmax.f32 %v2391, 0.0
    %v2622 = vmax.f32 %v2396, 0.0
    %v2623 = vmax.f32 %v2401, 0.0
    %v2624 = vmax.f32 %v2406, 0.0
    %v2625 = vmax.f32 %v2411, 0.0
    %v2626 = vmax.f32 %v2416, 0.0
    %v2627 = vmax.f32 %v2421, 0.0
    %v2628 = vmax.f32 %v2426, 0.0
    %v2629 = vmax.f32 %v2431, 0.0
    %v2630 = vmax.f32 %v2436, 0.0
    %v2631 = vmax.f32 %v2441, 0.0
    %v2632 = vmax.f32 %v2446, 0.0
    %v2633 = vmax.f32 %v2451, 0.0
    %v2634 = vmax.f32 %v2456, 0.0
    %v2635 = vmax.f32 %v2461, 0.0
    %v2636 = vmax.f32 %v2466, 0.0
    %v2637 = vmax.f32 %v2471, 0.0
    %v2638 = vmax.f32 %v2476, 0.0
    %v2639 = vmax.f32 %v2481, 0.0
    %v2640 = vmax.f32 %v2486, 0.0
    %v2641 = vmax.f32 %v2491, 0.0
    %v2642 = vmax.f32 %v2496, 0.0
    %v2643 = vmax.f32 %v2501, 0.0
    %v2644 = vmax.f32 %v2506, 0.0
    %v2645 = vmax.f32 %v2511, 0.0
    %v2646 = vmax.f32 %v2516, 0.0
    %vm2647 = vcmask 261120
    %v2648 = vsel %vm2647, %v2519, 0.0
    %v2649 = vsel %vm2647, %v2520, 0.0
    %v2650 = vadd.f32 %v2648, %v2649
    %v2651 = vrot.slane %v2650, 4
    %v2652 = vadd.f32 %v2650, %v2651
    %v2653 = vrot.slane %v2652, 2
    %v2654 = vadd.f32 %v2652, %v2653
    %v2655 = vrot.slane %v2654, 1
    %v2656 = vadd.f32 %v2654, %v2655
    %v2657 = vsel %vm2647, %v2521, 0.0
    %v2658 = vsel %vm2647, %v2522, 0.0
    %v2659 = vadd.f32 %v2657, %v2658
    %v2660 = vrot.slane %v2659, 4
    %v2661 = vadd.f32 %v2659, %v2660
    %v2662 = vrot.slane %v2661, 2
    %v2663 = vadd.f32 %v2661, %v2662
    %v2664 = vrot.slane %v2663, 1
    %v2665 = vadd.f32 %v2663, %v2664
    %v2666 = vsel %vm2647, %v2523, 0.0
    %v2667 = vsel %vm2647, %v2524, 0.0
    %v2668 = vadd.f32 %v2666, %v2667
    %v2669 = vrot.slane %v2668, 4
    %v2670 = vadd.f32 %v2668, %v2669
    %v2671 = vrot.slane %v2670, 2
    %v2672 = vadd.f32 %v2670, %v2671
    %v2673 = vrot.slane %v2672, 1
    %v2674 = vadd.f32 %v2672, %v2673
    %v2675 = vsel %vm2647, %v2525, 0.0
    %v2676 = vsel %vm2647, %v2526, 0.0
    %v2677 = vadd.f32 %v2675, %v2676
    %v2678 = vrot.slane %v2677, 4
    %v2679 = vadd.f32 %v2677, %v2678
    %v2680 = vrot.slane %v2679, 2
    %v2681 = vadd.f32 %v2679, %v2680
    %v2682 = vrot.slane %v2681, 1
    %v2683 = vadd.f32 %v2681, %v2682
    %v2684 = vsel %vm2647, %v2527, 0.0
    %v2685 = vsel %vm2647, %v2528, 0.0
    %v2686 = vadd.f32 %v2684, %v2685
    %v2687 = vrot.slane %v2686, 4
    %v2688 = vadd.f32 %v2686, %v2687
    %v2689 = vrot.slane %v2688, 2
    %v2690 = vadd.f32 %v2688, %v2689
    %v2691 = vrot.slane %v2690, 1
    %v2692 = vadd.f32 %v2690, %v2691
    %v2693 = vsel %vm2647, %v2529, 0.0
    %v2694 = vsel %vm2647, %v2530, 0.0
    %v2695 = vadd.f32 %v2693, %v2694
    %v2696 = vrot.slane %v2695, 4
    %v2697 = vadd.f32 %v2695, %v2696
    %v2698 = vrot.slane %v2697, 2
    %v2699 = vadd.f32 %v2697, %v2698
    %v2700 = vrot.slane %v2699, 1
    %v2701 = vadd.f32 %v2699, %v2700
    %v2702 = vsel %vm2647, %v2531, 0.0
    %v2703 = vsel %vm2647, %v2532, 0.0
    %v2704 = vadd.f32 %v2702, %v2703
    %v2705 = vrot.slane %v2704, 4
    %v2706 = vadd.f32 %v2704, %v2705
    %v2707 = vrot.slane %v2706, 2
    %v2708 = vadd.f32 %v2706, %v2707
    %v2709 = vrot.slane %v2708, 1
    %v2710 = vadd.f32 %v2708, %v2709
    %v2711 = vsel %vm2647, %v2533, 0.0
    %v2712 = vsel %vm2647, %v2534, 0.0
    %v2713 = vadd.f32 %v2711, %v2712
    %v2714 = vrot.slane %v2713, 4
    %v2715 = vadd.f32 %v2713, %v2714
    %v2716 = vrot.slane %v2715, 2
    %v2717 = vadd.f32 %v2715, %v2716
    %v2718 = vrot.slane %v2717, 1
    %v2719 = vadd.f32 %v2717, %v2718
    %v2720 = vsel %vm2647, %v2535, 0.0
    %v2721 = vsel %vm2647, %v2536, 0.0
    %v2722 = vadd.f32 %v2720, %v2721
    %v2723 = vrot.slane %v2722, 4
    %v2724 = vadd.f32 %v2722, %v2723
    %v2725 = vrot.slane %v2724, 2
    %v2726 = vadd.f32 %v2724, %v2725
    %v2727 = vrot.slane %v2726, 1
    %v2728 = vadd.f32 %v2726, %v2727
    %v2729 = vsel %vm2647, %v2537, 0.0
    %v2730 = vsel %vm2647, %v2538, 0.0
    %v2731 = vadd.f32 %v2729, %v2730
    %v2732 = vrot.slane %v2731, 4
    %v2733 = vadd.f32 %v2731, %v2732
    %v2734 = vrot.slane %v2733, 2
    %v2735 = vadd.f32 %v2733, %v2734
    %v2736 = vrot.slane %v2735, 1
    %v2737 = vadd.f32 %v2735, %v2736
    %v2738 = vsel %vm2647, %v2539, 0.0
    %v2739 = vsel %vm2647, %v2540, 0.0
    %v2740 = vadd.f32 %v2738, %v2739
    %v2741 = vrot.slane %v2740, 4
    %v2742 = vadd.f32 %v2740, %v2741
    %v2743 = vrot.slane %v2742, 2
    %v2744 = vadd.f32 %v2742, %v2743
    %v2745 = vrot.slane %v2744, 1
    %v2746 = vadd.f32 %v2744, %v2745
    %v2747 = vsel %vm2647, %v2541, 0.0
    %v2748 = vsel %vm2647, %v2542, 0.0
    %v2749 = vadd.f32 %v2747, %v2748
    %v2750 = vrot.slane %v2749, 4
    %v2751 = vadd.f32 %v2749, %v2750
    %v2752 = vrot.slane %v2751, 2
    %v2753 = vadd.f32 %v2751, %v2752
    %v2754 = vrot.slane %v2753, 1
    %v2755 = vadd.f32 %v2753, %v2754
    %v2756 = vsel %vm2647, %v2543, 0.0
    %v2757 = vsel %vm2647, %v2544, 0.0
    %v2758 = vadd.f32 %v2756, %v2757
    %v2759 = vrot.slane %v2758, 4
    %v2760 = vadd.f32 %v2758, %v2759
    %v2761 = vrot.slane %v2760, 2
    %v2762 = vadd.f32 %v2760, %v2761
    %v2763 = vrot.slane %v2762, 1
    %v2764 = vadd.f32 %v2762, %v2763
    %v2765 = vsel %vm2647, %v2545, 0.0
    %v2766 = vsel %vm2647, %v2546, 0.0
    %v2767 = vadd.f32 %v2765, %v2766
    %v2768 = vrot.slane %v2767, 4
    %v2769 = vadd.f32 %v2767, %v2768
    %v2770 = vrot.slane %v2769, 2
    %v2771 = vadd.f32 %v2769, %v2770
    %v2772 = vrot.slane %v2771, 1
    %v2773 = vadd.f32 %v2771, %v2772
    %v2774 = vsel %vm2647, %v2547, 0.0
    %v2775 = vsel %vm2647, %v2548, 0.0
    %v2776 = vadd.f32 %v2774, %v2775
    %v2777 = vrot.slane %v2776, 4
    %v2778 = vadd.f32 %v2776, %v2777
    %v2779 = vrot.slane %v2778, 2
    %v2780 = vadd.f32 %v2778, %v2779
    %v2781 = vrot.slane %v2780, 1
    %v2782 = vadd.f32 %v2780, %v2781
    %v2783 = vsel %vm2647, %v2549, 0.0
    %v2784 = vsel %vm2647, %v2550, 0.0
    %v2785 = vadd.f32 %v2783, %v2784
    %v2786 = vrot.slane %v2785, 4
    %v2787 = vadd.f32 %v2785, %v2786
    %v2788 = vrot.slane %v2787, 2
    %v2789 = vadd.f32 %v2787, %v2788
    %v2790 = vrot.slane %v2789, 1
    %v2791 = vadd.f32 %v2789, %v2790
    %v2792 = vsel %vm2647, %v2551, 0.0
    %v2793 = vsel %vm2647, %v2552, 0.0
    %v2794 = vadd.f32 %v2792, %v2793
    %v2795 = vrot.slane %v2794, 4
    %v2796 = vadd.f32 %v2794, %v2795
    %v2797 = vrot.slane %v2796, 2
    %v2798 = vadd.f32 %v2796, %v2797
    %v2799 = vrot.slane %v2798, 1
    %v2800 = vadd.f32 %v2798, %v2799
    %v2801 = vsel %vm2647, %v2553, 0.0
    %v2802 = vsel %vm2647, %v2554, 0.0
    %v2803 = vadd.f32 %v2801, %v2802
    %v2804 = vrot.slane %v2803, 4
    %v2805 = vadd.f32 %v2803, %v2804
    %v2806 = vrot.slane %v2805, 2
    %v2807 = vadd.f32 %v2805, %v2806
    %v2808 = vrot.slane %v2807, 1
    %v2809 = vadd.f32 %v2807, %v2808
    %v2810 = vsel %vm2647, %v2555, 0.0
    %v2811 = vsel %vm2647, %v2556, 0.0
    %v2812 = vadd.f32 %v2810, %v2811
    %v2813 = vrot.slane %v2812, 4
    %v2814 = vadd.f32 %v2812, %v2813
    %v2815 = vrot.slane %v2814, 2
    %v2816 = vadd.f32 %v2814, %v2815
    %v2817 = vrot.slane %v2816, 1
    %v2818 = vadd.f32 %v2816, %v2817
    %v2819 = vsel %vm2647, %v2557, 0.0
    %v2820 = vsel %vm2647, %v2558, 0.0
    %v2821 = vadd.f32 %v2819, %v2820
    %v2822 = vrot.slane %v2821, 4
    %v2823 = vadd.f32 %v2821, %v2822
    %v2824 = vrot.slane %v2823, 2
    %v2825 = vadd.f32 %v2823, %v2824
    %v2826 = vrot.slane %v2825, 1
    %v2827 = vadd.f32 %v2825, %v2826
    %v2828 = vsel %vm2647, %v2559, 0.0
    %v2829 = vsel %vm2647, %v2560, 0.0
    %v2830 = vadd.f32 %v2828, %v2829
    %v2831 = vrot.slane %v2830, 4
    %v2832 = vadd.f32 %v2830, %v2831
    %v2833 = vrot.slane %v2832, 2
    %v2834 = vadd.f32 %v2832, %v2833
    %v2835 = vrot.slane %v2834, 1
    %v2836 = vadd.f32 %v2834, %v2835
    %v2837 = vsel %vm2647, %v2561, 0.0
    %v2838 = vsel %vm2647, %v2562, 0.0
    %v2839 = vadd.f32 %v2837, %v2838
    %v2840 = vrot.slane %v2839, 4
    %v2841 = vadd.f32 %v2839, %v2840
    %v2842 = vrot.slane %v2841, 2
    %v2843 = vadd.f32 %v2841, %v2842
    %v2844 = vrot.slane %v2843, 1
    %v2845 = vadd.f32 %v2843, %v2844
    %v2846 = vsel %vm2647, %v2563, 0.0
    %v2847 = vsel %vm2647, %v2564, 0.0
    %v2848 = vadd.f32 %v2846, %v2847
    %v2849 = vrot.slane %v2848, 4
    %v2850 = vadd.f32 %v2848, %v2849
    %v2851 = vrot.slane %v2850, 2
    %v2852 = vadd.f32 %v2850, %v2851
    %v2853 = vrot.slane %v2852, 1
    %v2854 = vadd.f32 %v2852, %v2853
    %v2855 = vsel %vm2647, %v2565, 0.0
    %v2856 = vsel %vm2647, %v2566, 0.0
    %v2857 = vadd.f32 %v2855, %v2856
    %v2858 = vrot.slane %v2857, 4
    %v2859 = vadd.f32 %v2857, %v2858
    %v2860 = vrot.slane %v2859, 2
    %v2861 = vadd.f32 %v2859, %v2860
    %v2862 = vrot.slane %v2861, 1
    %v2863 = vadd.f32 %v2861, %v2862
    %v2864 = vsel %vm2647, %v2567, 0.0
    %v2865 = vsel %vm2647, %v2568, 0.0
    %v2866 = vadd.f32 %v2864, %v2865
    %v2867 = vrot.slane %v2866, 4
    %v2868 = vadd.f32 %v2866, %v2867
    %v2869 = vrot.slane %v2868, 2
    %v2870 = vadd.f32 %v2868, %v2869
    %v2871 = vrot.slane %v2870, 1
    %v2872 = vadd.f32 %v2870, %v2871
    %v2873 = vsel %vm2647, %v2569, 0.0
    %v2874 = vsel %vm2647, %v2570, 0.0
    %v2875 = vadd.f32 %v2873, %v2874
    %v2876 = vrot.slane %v2875, 4
    %v2877 = vadd.f32 %v2875, %v2876
    %v2878 = vrot.slane %v2877, 2
    %v2879 = vadd.f32 %v2877, %v2878
    %v2880 = vrot.slane %v2879, 1
    %v2881 = vadd.f32 %v2879, %v2880
    %v2882 = vsel %vm2647, %v2571, 0.0
    %v2883 = vsel %vm2647, %v2572, 0.0
    %v2884 = vadd.f32 %v2882, %v2883
    %v2885 = vrot.slane %v2884, 4
    %v2886 = vadd.f32 %v2884, %v2885
    %v2887 = vrot.slane %v2886, 2
    %v2888 = vadd.f32 %v2886, %v2887
    %v2889 = vrot.slane %v2888, 1
    %v2890 = vadd.f32 %v2888, %v2889
    %v2891 = vsel %vm2647, %v2573, 0.0
    %v2892 = vsel %vm2647, %v2574, 0.0
    %v2893 = vadd.f32 %v2891, %v2892
    %v2894 = vrot.slane %v2893, 4
    %v2895 = vadd.f32 %v2893, %v2894
    %v2896 = vrot.slane %v2895, 2
    %v2897 = vadd.f32 %v2895, %v2896
    %v2898 = vrot.slane %v2897, 1
    %v2899 = vadd.f32 %v2897, %v2898
    %v2900 = vsel %vm2647, %v2575, 0.0
    %v2901 = vsel %vm2647, %v2576, 0.0
    %v2902 = vadd.f32 %v2900, %v2901
    %v2903 = vrot.slane %v2902, 4
    %v2904 = vadd.f32 %v2902, %v2903
    %v2905 = vrot.slane %v2904, 2
    %v2906 = vadd.f32 %v2904, %v2905
    %v2907 = vrot.slane %v2906, 1
    %v2908 = vadd.f32 %v2906, %v2907
    %v2909 = vsel %vm2647, %v2577, 0.0
    %v2910 = vsel %vm2647, %v2578, 0.0
    %v2911 = vadd.f32 %v2909, %v2910
    %v2912 = vrot.slane %v2911, 4
    %v2913 = vadd.f32 %v2911, %v2912
    %v2914 = vrot.slane %v2913, 2
    %v2915 = vadd.f32 %v2913, %v2914
    %v2916 = vrot.slane %v2915, 1
    %v2917 = vadd.f32 %v2915, %v2916
    %v2918 = vsel %vm2647, %v2579, 0.0
    %v2919 = vsel %vm2647, %v2580, 0.0
    %v2920 = vadd.f32 %v2918, %v2919
    %v2921 = vrot.slane %v2920, 4
    %v2922 = vadd.f32 %v2920, %v2921
    %v2923 = vrot.slane %v2922, 2
    %v2924 = vadd.f32 %v2922, %v2923
    %v2925 = vrot.slane %v2924, 1
    %v2926 = vadd.f32 %v2924, %v2925
    %v2927 = vsel %vm2647, %v2581, 0.0
    %v2928 = vsel %vm2647, %v2582, 0.0
    %v2929 = vadd.f32 %v2927, %v2928
    %v2930 = vrot.slane %v2929, 4
    %v2931 = vadd.f32 %v2929, %v2930
    %v2932 = vrot.slane %v2931, 2
    %v2933 = vadd.f32 %v2931, %v2932
    %v2934 = vrot.slane %v2933, 1
    %v2935 = vadd.f32 %v2933, %v2934
    %v2936 = vsel %vm2647, %v2583, 0.0
    %v2937 = vsel %vm2647, %v2584, 0.0
    %v2938 = vadd.f32 %v2936, %v2937
    %v2939 = vrot.slane %v2938, 4
    %v2940 = vadd.f32 %v2938, %v2939
    %v2941 = vrot.slane %v2940, 2
    %v2942 = vadd.f32 %v2940, %v2941
    %v2943 = vrot.slane %v2942, 1
    %v2944 = vadd.f32 %v2942, %v2943
    %v2945 = vsel %vm2647, %v2585, 0.0
    %v2946 = vsel %vm2647, %v2586, 0.0
    %v2947 = vadd.f32 %v2945, %v2946
    %v2948 = vrot.slane %v2947, 4
    %v2949 = vadd.f32 %v2947, %v2948
    %v2950 = vrot.slane %v2949, 2
    %v2951 = vadd.f32 %v2949, %v2950
    %v2952 = vrot.slane %v2951, 1
    %v2953 = vadd.f32 %v2951, %v2952
    %v2954 = vsel %vm2647, %v2587, 0.0
    %v2955 = vsel %vm2647, %v2588, 0.0
    %v2956 = vadd.f32 %v2954, %v2955
    %v2957 = vrot.slane %v2956, 4
    %v2958 = vadd.f32 %v2956, %v2957
    %v2959 = vrot.slane %v2958, 2
    %v2960 = vadd.f32 %v2958, %v2959
    %v2961 = vrot.slane %v2960, 1
    %v2962 = vadd.f32 %v2960, %v2961
    %v2963 = vsel %vm2647, %v2589, 0.0
    %v2964 = vsel %vm2647, %v2590, 0.0
    %v2965 = vadd.f32 %v2963, %v2964
    %v2966 = vrot.slane %v2965, 4
    %v2967 = vadd.f32 %v2965, %v2966
    %v2968 = vrot.slane %v2967, 2
    %v2969 = vadd.f32 %v2967, %v2968
    %v2970 = vrot.slane %v2969, 1
    %v2971 = vadd.f32 %v2969, %v2970
    %v2972 = vsel %vm2647, %v2591, 0.0
    %v2973 = vsel %vm2647, %v2592, 0.0
    %v2974 = vadd.f32 %v2972, %v2973
    %v2975 = vrot.slane %v2974, 4
    %v2976 = vadd.f32 %v2974, %v2975
    %v2977 = vrot.slane %v2976, 2
    %v2978 = vadd.f32 %v2976, %v2977
    %v2979 = vrot.slane %v2978, 1
    %v2980 = vadd.f32 %v2978, %v2979
    %v2981 = vsel %vm2647, %v2593, 0.0
    %v2982 = vsel %vm2647, %v2594, 0.0
    %v2983 = vadd.f32 %v2981, %v2982
    %v2984 = vrot.slane %v2983, 4
    %v2985 = vadd.f32 %v2983, %v2984
    %v2986 = vrot.slane %v2985, 2
    %v2987 = vadd.f32 %v2985, %v2986
    %v2988 = vrot.slane %v2987, 1
    %v2989 = vadd.f32 %v2987, %v2988
    %v2990 = vsel %vm2647, %v2595, 0.0
    %v2991 = vsel %vm2647, %v2596, 0.0
    %v2992 = vadd.f32 %v2990, %v2991
    %v2993 = vrot.slane %v2992, 4
    %v2994 = vadd.f32 %v2992, %v2993
    %v2995 = vrot.slane %v2994, 2
    %v2996 = vadd.f32 %v2994, %v2995
    %v2997 = vrot.slane %v2996, 1
    %v2998 = vadd.f32 %v2996, %v2997
    %v2999 = vsel %vm2647, %v2597, 0.0
    %v3000 = vsel %vm2647, %v2598, 0.0
    %v3001 = vadd.f32 %v2999, %v3000
    %v3002 = vrot.slane %v3001, 4
    %v3003 = vadd.f32 %v3001, %v3002
    %v3004 = vrot.slane %v3003, 2
    %v3005 = vadd.f32 %v3003, %v3004
    %v3006 = vrot.slane %v3005, 1
    %v3007 = vadd.f32 %v3005, %v3006
    %v3008 = vsel %vm2647, %v2599, 0.0
    %v3009 = vsel %vm2647, %v2600, 0.0
    %v3010 = vadd.f32 %v3008, %v3009
    %v3011 = vrot.slane %v3010, 4
    %v3012 = vadd.f32 %v3010, %v3011
    %v3013 = vrot.slane %v3012, 2
    %v3014 = vadd.f32 %v3012, %v3013
    %v3015 = vrot.slane %v3014, 1
    %v3016 = vadd.f32 %v3014, %v3015
    %v3017 = vsel %vm2647, %v2601, 0.0
    %v3018 = vsel %vm2647, %v2602, 0.0
    %v3019 = vadd.f32 %v3017, %v3018
    %v3020 = vrot.slane %v3019, 4
    %v3021 = vadd.f32 %v3019, %v3020
    %v3022 = vrot.slane %v3021, 2
    %v3023 = vadd.f32 %v3021, %v3022
    %v3024 = vrot.slane %v3023, 1
    %v3025 = vadd.f32 %v3023, %v3024
    %v3026 = vsel %vm2647, %v2603, 0.0
    %v3027 = vsel %vm2647, %v2604, 0.0
    %v3028 = vadd.f32 %v3026, %v3027
    %v3029 = vrot.slane %v3028, 4
    %v3030 = vadd.f32 %v3028, %v3029
    %v3031 = vrot.slane %v3030, 2
    %v3032 = vadd.f32 %v3030, %v3031
    %v3033 = vrot.slane %v3032, 1
    %v3034 = vadd.f32 %v3032, %v3033
    %v3035 = vsel %vm2647, %v2605, 0.0
    %v3036 = vsel %vm2647, %v2606, 0.0
    %v3037 = vadd.f32 %v3035, %v3036
    %v3038 = vrot.slane %v3037, 4
    %v3039 = vadd.f32 %v3037, %v3038
    %v3040 = vrot.slane %v3039, 2
    %v3041 = vadd.f32 %v3039, %v3040
    %v3042 = vrot.slane %v3041, 1
    %v3043 = vadd.f32 %v3041, %v3042
    %v3044 = vsel %vm2647, %v2607, 0.0
    %v3045 = vsel %vm2647, %v2608, 0.0
    %v3046 = vadd.f32 %v3044, %v3045
    %v3047 = vrot.slane %v3046, 4
    %v3048 = vadd.f32 %v3046, %v3047
    %v3049 = vrot.slane %v3048, 2
    %v3050 = vadd.f32 %v3048, %v3049
    %v3051 = vrot.slane %v3050, 1
    %v3052 = vadd.f32 %v3050, %v3051
    %v3053 = vsel %vm2647, %v2609, 0.0
    %v3054 = vsel %vm2647, %v2610, 0.0
    %v3055 = vadd.f32 %v3053, %v3054
    %v3056 = vrot.slane %v3055, 4
    %v3057 = vadd.f32 %v3055, %v3056
    %v3058 = vrot.slane %v3057, 2
    %v3059 = vadd.f32 %v3057, %v3058
    %v3060 = vrot.slane %v3059, 1
    %v3061 = vadd.f32 %v3059, %v3060
    %v3062 = vsel %vm2647, %v2611, 0.0
    %v3063 = vsel %vm2647, %v2612, 0.0
    %v3064 = vadd.f32 %v3062, %v3063
    %v3065 = vrot.slane %v3064, 4
    %v3066 = vadd.f32 %v3064, %v3065
    %v3067 = vrot.slane %v3066, 2
    %v3068 = vadd.f32 %v3066, %v3067
    %v3069 = vrot.slane %v3068, 1
    %v3070 = vadd.f32 %v3068, %v3069
    %v3071 = vsel %vm2647, %v2613, 0.0
    %v3072 = vsel %vm2647, %v2614, 0.0
    %v3073 = vadd.f32 %v3071, %v3072
    %v3074 = vrot.slane %v3073, 4
    %v3075 = vadd.f32 %v3073, %v3074
    %v3076 = vrot.slane %v3075, 2
    %v3077 = vadd.f32 %v3075, %v3076
    %v3078 = vrot.slane %v3077, 1
    %v3079 = vadd.f32 %v3077, %v3078
    %v3080 = vsel %vm2647, %v2615, 0.0
    %v3081 = vsel %vm2647, %v2616, 0.0
    %v3082 = vadd.f32 %v3080, %v3081
    %v3083 = vrot.slane %v3082, 4
    %v3084 = vadd.f32 %v3082, %v3083
    %v3085 = vrot.slane %v3084, 2
    %v3086 = vadd.f32 %v3084, %v3085
    %v3087 = vrot.slane %v3086, 1
    %v3088 = vadd.f32 %v3086, %v3087
    %v3089 = vsel %vm2647, %v2617, 0.0
    %v3090 = vsel %vm2647, %v2618, 0.0
    %v3091 = vadd.f32 %v3089, %v3090
    %v3092 = vrot.slane %v3091, 4
    %v3093 = vadd.f32 %v3091, %v3092
    %v3094 = vrot.slane %v3093, 2
    %v3095 = vadd.f32 %v3093, %v3094
    %v3096 = vrot.slane %v3095, 1
    %v3097 = vadd.f32 %v3095, %v3096
    %v3098 = vsel %vm2647, %v2619, 0.0
    %v3099 = vsel %vm2647, %v2620, 0.0
    %v3100 = vadd.f32 %v3098, %v3099
    %v3101 = vrot.slane %v3100, 4
    %v3102 = vadd.f32 %v3100, %v3101
    %v3103 = vrot.slane %v3102, 2
    %v3104 = vadd.f32 %v3102, %v3103
    %v3105 = vrot.slane %v3104, 1
    %v3106 = vadd.f32 %v3104, %v3105
    %v3107 = vsel %vm2647, %v2621, 0.0
    %v3108 = vsel %vm2647, %v2622, 0.0
    %v3109 = vadd.f32 %v3107, %v3108
    %v3110 = vrot.slane %v3109, 4
    %v3111 = vadd.f32 %v3109, %v3110
    %v3112 = vrot.slane %v3111, 2
    %v3113 = vadd.f32 %v3111, %v3112
    %v3114 = vrot.slane %v3113, 1
    %v3115 = vadd.f32 %v3113, %v3114
    %v3116 = vsel %vm2647, %v2623, 0.0
    %v3117 = vsel %vm2647, %v2624, 0.0
    %v3118 = vadd.f32 %v3116, %v3117
    %v3119 = vrot.slane %v3118, 4
    %v3120 = vadd.f32 %v3118, %v3119
    %v3121 = vrot.slane %v3120, 2
    %v3122 = vadd.f32 %v3120, %v3121
    %v3123 = vrot.slane %v3122, 1
    %v3124 = vadd.f32 %v3122, %v3123
    %v3125 = vsel %vm2647, %v2625, 0.0
    %v3126 = vsel %vm2647, %v2626, 0.0
    %v3127 = vadd.f32 %v3125, %v3126
    %v3128 = vrot.slane %v3127, 4
    %v3129 = vadd.f32 %v3127, %v3128
    %v3130 = vrot.slane %v3129, 2
    %v3131 = vadd.f32 %v3129, %v3130
    %v3132 = vrot.slane %v3131, 1
    %v3133 = vadd.f32 %v3131, %v3132
    %v3134 = vsel %vm2647, %v2627, 0.0
    %v3135 = vsel %vm2647, %v2628, 0.0
    %v3136 = vadd.f32 %v3134, %v3135
    %v3137 = vrot.slane %v3136, 4
    %v3138 = vadd.f32 %v3136, %v3137
    %v3139 = vrot.slane %v3138, 2
    %v3140 = vadd.f32 %v3138, %v3139
    %v3141 = vrot.slane %v3140, 1
    %v3142 = vadd.f32 %v3140, %v3141
    %v3143 = vsel %vm2647, %v2629, 0.0
    %v3144 = vsel %vm2647, %v2630, 0.0
    %v3145 = vadd.f32 %v3143, %v3144
    %v3146 = vrot.slane %v3145, 4
    %v3147 = vadd.f32 %v3145, %v3146
    %v3148 = vrot.slane %v3147, 2
    %v3149 = vadd.f32 %v3147, %v3148
    %v3150 = vrot.slane %v3149, 1
    %v3151 = vadd.f32 %v3149, %v3150
    %v3152 = vsel %vm2647, %v2631, 0.0
    %v3153 = vsel %vm2647, %v2632, 0.0
    %v3154 = vadd.f32 %v3152, %v3153
    %v3155 = vrot.slane %v3154, 4
    %v3156 = vadd.f32 %v3154, %v3155
    %v3157 = vrot.slane %v3156, 2
    %v3158 = vadd.f32 %v3156, %v3157
    %v3159 = vrot.slane %v3158, 1
    %v3160 = vadd.f32 %v3158, %v3159
    %v3161 = vsel %vm2647, %v2633, 0.0
    %v3162 = vsel %vm2647, %v2634, 0.0
    %v3163 = vadd.f32 %v3161, %v3162
    %v3164 = vrot.slane %v3163, 4
    %v3165 = vadd.f32 %v3163, %v3164
    %v3166 = vrot.slane %v3165, 2
    %v3167 = vadd.f32 %v3165, %v3166
    %v3168 = vrot.slane %v3167, 1
    %v3169 = vadd.f32 %v3167, %v3168
    %v3170 = vsel %vm2647, %v2635, 0.0
    %v3171 = vsel %vm2647, %v2636, 0.0
    %v3172 = vadd.f32 %v3170, %v3171
    %v3173 = vrot.slane %v3172, 4
    %v3174 = vadd.f32 %v3172, %v3173
    %v3175 = vrot.slane %v3174, 2
    %v3176 = vadd.f32 %v3174, %v3175
    %v3177 = vrot.slane %v3176, 1
    %v3178 = vadd.f32 %v3176, %v3177
    %v3179 = vsel %vm2647, %v2637, 0.0
    %v3180 = vsel %vm2647, %v2638, 0.0
    %v3181 = vadd.f32 %v3179, %v3180
    %v3182 = vrot.slane %v3181, 4
    %v3183 = vadd.f32 %v3181, %v3182
    %v3184 = vrot.slane %v3183, 2
    %v3185 = vadd.f32 %v3183, %v3184
    %v3186 = vrot.slane %v3185, 1
    %v3187 = vadd.f32 %v3185, %v3186
    %v3188 = vsel %vm2647, %v2639, 0.0
    %v3189 = vsel %vm2647, %v2640, 0.0
    %v3190 = vadd.f32 %v3188, %v3189
    %v3191 = vrot.slane %v3190, 4
    %v3192 = vadd.f32 %v3190, %v3191
    %v3193 = vrot.slane %v3192, 2
    %v3194 = vadd.f32 %v3192, %v3193
    %v3195 = vrot.slane %v3194, 1
    %v3196 = vadd.f32 %v3194, %v3195
    %v3197 = vsel %vm2647, %v2641, 0.0
    %v3198 = vsel %vm2647, %v2642, 0.0
    %v3199 = vadd.f32 %v3197, %v3198
    %v3200 = vrot.slane %v3199, 4
    %v3201 = vadd.f32 %v3199, %v3200
    %v3202 = vrot.slane %v3201, 2
    %v3203 = vadd.f32 %v3201, %v3202
    %v3204 = vrot.slane %v3203, 1
    %v3205 = vadd.f32 %v3203, %v3204
    %v3206 = vsel %vm2647, %v2643, 0.0
    %v3207 = vsel %vm2647, %v2644, 0.0
    %v3208 = vadd.f32 %v3206, %v3207
    %v3209 = vrot.slane %v3208, 4
    %v3210 = vadd.f32 %v3208, %v3209
    %v3211 = vrot.slane %v3210, 2
    %v3212 = vadd.f32 %v3210, %v3211
    %v3213 = vrot.slane %v3212, 1
    %v3214 = vadd.f32 %v3212, %v3213
    %v3215 = vsel %vm2647, %v2645, 0.0
    %v3216 = vsel %vm2647, %v2646, 0.0
    %v3217 = vadd.f32 %v3215, %v3216
    %v3218 = vrot.slane %v3217, 4
    %v3219 = vadd.f32 %v3217, %v3218
    %v3220 = vrot.slane %v3219, 2
    %v3221 = vadd.f32 %v3219, %v3220
    %v3222 = vrot.slane %v3221, 1
    %v3223 = vadd.f32 %v3221, %v3222
    %v3224 = vmul.f32 %v2656, 0.0625
    %v3225 = vmul.f32 %v2665, 0.0625
    %v3226 = vmul.f32 %v2674, 0.0625
    %v3227 = vmul.f32 %v2683, 0.0625
    %v3228 = vmul.f32 %v2692, 0.0625
    %v3229 = vmul.f32 %v2701, 0.0625
    %v3230 = vmul.f32 %v2710, 0.0625
    %v3231 = vmul.f32 %v2719, 0.0625
    %v3232 = vmul.f32 %v2728, 0.0625
    %v3233 = vmul.f32 %v2737, 0.0625
    %v3234 = vmul.f32 %v2746, 0.0625
    %v3235 = vmul.f32 %v2755, 0.0625
    %v3236 = vmul.f32 %v2764, 0.0625
    %v3237 = vmul.f32 %v2773, 0.0625
    %v3238 = vmul.f32 %v2782, 0.0625
    %v3239 = vmul.f32 %v2791, 0.0625
    %v3240 = vmul.f32 %v2800, 0.0625
    %v3241 = vmul.f32 %v2809, 0.0625
    %v3242 = vmul.f32 %v2818, 0.0625
    %v3243 = vmul.f32 %v2827, 0.0625
    %v3244 = vmul.f32 %v2836, 0.0625
    %v3245 = vmul.f32 %v2845, 0.0625
    %v3246 = vmul.f32 %v2854, 0.0625
    %v3247 = vmul.f32 %v2863, 0.0625
    %v3248 = vmul.f32 %v2872, 0.0625
    %v3249 = vmul.f32 %v2881, 0.0625
    %v3250 = vmul.f32 %v2890, 0.0625
    %v3251 = vmul.f32 %v2899, 0.0625
    %v3252 = vmul.f32 %v2908, 0.0625
    %v3253 = vmul.f32 %v2917, 0.0625
    %v3254 = vmul.f32 %v2926, 0.0625
    %v3255 = vmul.f32 %v2935, 0.0625
    %v3256 = vmul.f32 %v2944, 0.0625
    %v3257 = vmul.f32 %v2953, 0.0625
    %v3258 = vmul.f32 %v2962, 0.0625
    %v3259 = vmul.f32 %v2971, 0.0625
    %v3260 = vmul.f32 %v2980, 0.0625
    %v3261 = vmul.f32 %v2989, 0.0625
    %v3262 = vmul.f32 %v2998, 0.0625
    %v3263 = vmul.f32 %v3007, 0.0625
    %v3264 = vmul.f32 %v3016, 0.0625
    %v3265 = vmul.f32 %v3025, 0.0625
    %v3266 = vmul.f32 %v3034, 0.0625
    %v3267 = vmul.f32 %v3043, 0.0625
    %v3268 = vmul.f32 %v3052, 0.0625
    %v3269 = vmul.f32 %v3061, 0.0625
    %v3270 = vmul.f32 %v3070, 0.0625
    %v3271 = vmul.f32 %v3079, 0.0625
    %v3272 = vmul.f32 %v3088, 0.0625
    %v3273 = vmul.f32 %v3097, 0.0625
    %v3274 = vmul.f32 %v3106, 0.0625
    %v3275 = vmul.f32 %v3115, 0.0625
    %v3276 = vmul.f32 %v3124, 0.0625
    %v3277 = vmul.f32 %v3133, 0.0625
    %v3278 = vmul.f32 %v3142, 0.0625
    %v3279 = vmul.f32 %v3151, 0.0625
    %v3280 = vmul.f32 %v3160, 0.0625
    %v3281 = vmul.f32 %v3169, 0.0625
    %v3282 = vmul.f32 %v3178, 0.0625
    %v3283 = vmul.f32 %v3187, 0.0625
    %v3284 = vmul.f32 %v3196, 0.0625
    %v3285 = vmul.f32 %v3205, 0.0625
    %v3286 = vmul.f32 %v3214, 0.0625
    %v3287 = vmul.f32 %v3223, 0.0625
    %v3288 = vld [vmem:[%s5] sm:$0xff]
    %v3289 = vld [vmem:[%s5 + $0x8] sm:$0xff]
    %v3290 = vld [vmem:[%s5 + $0x10] sm:$0xff]
    %v3291 = vld [vmem:[%s5 + $0x18] sm:$0xff]
    %v3292 = vld [vmem:[%s5 + $0x20] sm:$0xff]
    %v3293 = vld [vmem:[%s5 + $0x28] sm:$0xff]
    %v3294 = vld [vmem:[%s5 + $0x30] sm:$0xff]
    %v3295 = vld [vmem:[%s5 + $0x38] sm:$0xff]
    %3297 = vset.pattern.permute.xlu0 0
    %3298 = vperm.xlu0 %3297, %v3288
    %v3299 = vpop.permute.xlu0 %3298
    %3301 = vset.pattern.permute.xlu0 0
    %3302 = vperm.xlu0 %3301, %v3289
    %v3303 = vpop.permute.xlu0 %3302
    %3305 = vset.pattern.permute.xlu0 0
    %3306 = vperm.xlu0 %3305, %v3290
    %v3307 = vpop.permute.xlu0 %3306
    %3309 = vset.pattern.permute.xlu0 0
    %3310 = vperm.xlu0 %3309, %v3291
    %v3311 = vpop.permute.xlu0 %3310
    %3313 = vset.pattern.permute.xlu0 0
    %3314 = vperm.xlu0 %3313, %v3292
    %v3315 = vpop.permute.xlu0 %3314
    %3317 = vset.pattern.permute.xlu0 0
    %3318 = vperm.xlu0 %3317, %v3293
    %v3319 = vpop.permute.xlu0 %3318
    %3321 = vset.pattern.permute.xlu0 0
    %3322 = vperm.xlu0 %3321, %v3294
    %v3323 = vpop.permute.xlu0 %3322
    %3325 = vset.pattern.permute.xlu0 0
    %3326 = vperm.xlu0 %3325, %v3295
    %v3327 = vpop.permute.xlu0 %3326
    %v3328 = vrot.slane %v3299, 1
    %v3329 = vrot.slane %v3299, 2
    %v3330 = vrot.slane %v3299, 3
    %v3331 = vrot.slane %v3299, 4
    %v3332 = vrot.slane %v3299, 5
    %v3333 = vrot.slane %v3299, 6
    %v3334 = vrot.slane %v3299, 7
    %v3335 = vrot.slane %v3303, 1
    %v3336 = vrot.slane %v3303, 2
    %v3337 = vrot.slane %v3303, 3
    %v3338 = vrot.slane %v3303, 4
    %v3339 = vrot.slane %v3303, 5
    %v3340 = vrot.slane %v3303, 6
    %v3341 = vrot.slane %v3303, 7
    %v3342 = vrot.slane %v3307, 1
    %v3343 = vrot.slane %v3307, 2
    %v3344 = vrot.slane %v3307, 3
    %v3345 = vrot.slane %v3307, 4
    %v3346 = vrot.slane %v3307, 5
    %v3347 = vrot.slane %v3307, 6
    %v3348 = vrot.slane %v3307, 7
    %v3349 = vrot.slane %v3311, 1
    %v3350 = vrot.slane %v3311, 2
    %v3351 = vrot.slane %v3311, 3
    %v3352 = vrot.slane %v3311, 4
    %v3353 = vrot.slane %v3311, 5
    %v3354 = vrot.slane %v3311, 6
    %v3355 = vrot.slane %v3311, 7
    %v3356 = vrot.slane %v3315, 1
    %v3357 = vrot.slane %v3315, 2
    %v3358 = vrot.slane %v3315, 3
    %v3359 = vrot.slane %v3315, 4
    %v3360 = vrot.slane %v3315, 5
    %v3361 = vrot.slane %v3315, 6
    %v3362 = vrot.slane %v3315, 7
    %v3363 = vrot.slane %v3319, 1
    %v3364 = vrot.slane %v3319, 2
    %v3365 = vrot.slane %v3319, 3
    %v3366 = vrot.slane %v3319, 4
    %v3367 = vrot.slane %v3319, 5
    %v3368 = vrot.slane %v3319, 6
    %v3369 = vrot.slane %v3319, 7
    %v3370 = vrot.slane %v3323, 1
    %v3371 = vrot.slane %v3323, 2
    %v3372 = vrot.slane %v3323, 3
    %v3373 = vrot.slane %v3323, 4
    %v3374 = vrot.slane %v3323, 5
    %v3375 = vrot.slane %v3323, 6
    %v3376 = vrot.slane %v3323, 7
    %v3377 = vrot.slane %v3327, 1
    %v3378 = vrot.slane %v3327, 2
    %v3379 = vrot.slane %v3327, 3
    %v3380 = vrot.slane %v3327, 4
    %v3381 = vrot.slane %v3327, 5
    %v3382 = vrot.slane %v3327, 6
    %v3383 = vrot.slane %v3327, 7
    %v3448 = vmul.f32 %v3224, %v3299
    %v3449 = vmul.f32 %v3225, %v3328
    %v3450 = vmul.f32 %v3226, %v3329
    %v3451 = vmul.f32 %v3227, %v3330
    %v3452 = vmul.f32 %v3228, %v3331
    %v3453 = vmul.f32 %v3229, %v3332
    %v3454 = vmul.f32 %v3230, %v3333
    %v3455 = vmul.f32 %v3231, %v3334
    %v3456 = vmul.f32 %v3232, %v3303
    %v3457 = vmul.f32 %v3233, %v3335
    %v3458 = vmul.f32 %v3234, %v3336
    %v3459 = vmul.f32 %v3235, %v3337
    %v3460 = vmul.f32 %v3236, %v3338
    %v3461 = vmul.f32 %v3237, %v3339
    %v3462 = vmul.f32 %v3238, %v3340
    %v3463 = vmul.f32 %v3239, %v3341
    %v3464 = vmul.f32 %v3240, %v3307
    %v3465 = vmul.f32 %v3241, %v3342
    %v3466 = vmul.f32 %v3242, %v3343
    %v3467 = vmul.f32 %v3243, %v3344
    %v3468 = vmul.f32 %v3244, %v3345
    %v3469 = vmul.f32 %v3245, %v3346
    %v3470 = vmul.f32 %v3246, %v3347
    %v3471 = vmul.f32 %v3247, %v3348
    %v3472 = vmul.f32 %v3248, %v3311
    %v3473 = vmul.f32 %v3249, %v3349
    %v3474 = vmul.f32 %v3250, %v3350
    %v3475 = vmul.f32 %v3251, %v3351
    %v3476 = vmul.f32 %v3252, %v3352
    %v3477 = vmul.f32 %v3253, %v3353
    %v3478 = vmul.f32 %v3254, %v3354
    %v3479 = vmul.f32 %v3255, %v3355
    %v3480 = vmul.f32 %v3256, %v3315
    %v3481 = vmul.f32 %v3257, %v3356
    %v3482 = vmul.f32 %v3258, %v3357
    %v3483 = vmul.f32 %v3259, %v3358
    %v3484 = vmul.f32 %v3260, %v3359
    %v3485 = vmul.f32 %v3261, %v3360
    %v3486 = vmul.f32 %v3262, %v3361
    %v3487 = vmul.f32 %v3263, %v3362
    %v3488 = vmul.f32 %v3264, %v3319
    %v3489 = vmul.f32 %v3265, %v3363
    %v3490 = vmul.f32 %v3266, %v3364
    %v3491 = vmul.f32 %v3267, %v3365
    %v3492 = vmul.f32 %v3268, %v3366
    %v3493 = vmul.f32 %v3269, %v3367
    %v3494 = vmul.f32 %v3270, %v3368
    %v3495 = vmul.f32 %v3271, %v3369
    %v3496 = vmul.f32 %v3272, %v3323
    %v3497 = vmul.f32 %v3273, %v3370
    %v3498 = vmul.f32 %v3274, %v3371
    %v3499 = vmul.f32 %v3275, %v3372
    %v3500 = vmul.f32 %v3276, %v3373
    %v3501 = vmul.f32 %v3277, %v3374
    %v3502 = vmul.f32 %v3278, %v3375
    %v3503 = vmul.f32 %v3279, %v3376
    %v3504 = vmul.f32 %v3280, %v3327
    %v3505 = vmul.f32 %v3281, %v3377
    %v3506 = vmul.f32 %v3282, %v3378
    %v3507 = vmul.f32 %v3283, %v3379
    %v3508 = vmul.f32 %v3284, %v3380
    %v3509 = vmul.f32 %v3285, %v3381
    %v3510 = vmul.f32 %v3286, %v3382
    %v3511 = vmul.f32 %v3287, %v3383
    %v3512 = vld [vmem:[%s7] sm:$0x3]
    %v3514 = vlaneseq
    %v3515 = vshrl.u32 %v3514, 7
    %v3516 = vsub.s32 0, %v3515
    %v3517 = vrot.slane %v3512, %v3516
    %v3518 = vlaneseq
    %v3519 = vshrl.u32 %v3518, 7
    %v3520 = vsub.s32 1, %v3519
    %v3521 = vrot.slane %v3512, %v3520
    %v3588 = vrot.slane %v3449, 7
    %vm3589 = vcmask 1041409
    %v3590 = vsel %vm3589, %v3588, %v3448
    %v3591 = vrot.slane %v3450, 6
    %vm3592 = vcmask 1042434
    %v3593 = vsel %vm3592, %v3591, %v3590
    %v3594 = vrot.slane %v3451, 5
    %vm3595 = vcmask 1043459
    %v3596 = vsel %vm3595, %v3594, %v3593
    %v3597 = vrot.slane %v3452, 4
    %vm3598 = vcmask 1044484
    %v3599 = vsel %vm3598, %v3597, %v3596
    %v3600 = vrot.slane %v3453, 3
    %vm3601 = vcmask 1045509
    %v3602 = vsel %vm3601, %v3600, %v3599
    %v3603 = vrot.slane %v3454, 2
    %vm3604 = vcmask 1046534
    %v3605 = vsel %vm3604, %v3603, %v3602
    %v3606 = vrot.slane %v3455, 1
    %vm3607 = vcmask 1047559
    %v3608 = vsel %vm3607, %v3606, %v3605
    %v3609 = vrot.slane %v3457, 7
    %v3610 = vsel %vm3589, %v3609, %v3456
    %v3611 = vrot.slane %v3458, 6
    %v3612 = vsel %vm3592, %v3611, %v3610
    %v3613 = vrot.slane %v3459, 5
    %v3614 = vsel %vm3595, %v3613, %v3612
    %v3615 = vrot.slane %v3460, 4
    %v3616 = vsel %vm3598, %v3615, %v3614
    %v3617 = vrot.slane %v3461, 3
    %v3618 = vsel %vm3601, %v3617, %v3616
    %v3619 = vrot.slane %v3462, 2
    %v3620 = vsel %vm3604, %v3619, %v3618
    %v3621 = vrot.slane %v3463, 1
    %v3622 = vsel %vm3607, %v3621, %v3620
    %v3623 = vrot.slane %v3465, 7
    %v3624 = vsel %vm3589, %v3623, %v3464
    %v3625 = vrot.slane %v3466, 6
    %v3626 = vsel %vm3592, %v3625, %v3624
    %v3627 = vrot.slane %v3467, 5
    %v3628 = vsel %vm3595, %v3627, %v3626
    %v3629 = vrot.slane %v3468, 4
    %v3630 = vsel %vm3598, %v3629, %v3628
    %v3631 = vrot.slane %v3469, 3
    %v3632 = vsel %vm3601, %v3631, %v3630
    %v3633 = vrot.slane %v3470, 2
    %v3634 = vsel %vm3604, %v3633, %v3632
    %v3635 = vrot.slane %v3471, 1
    %v3636 = vsel %vm3607, %v3635, %v3634
    %v3637 = vrot.slane %v3473, 7
    %v3638 = vsel %vm3589, %v3637, %v3472
    %v3639 = vrot.slane %v3474, 6
    %v3640 = vsel %vm3592, %v3639, %v3638
    %v3641 = vrot.slane %v3475, 5
    %v3642 = vsel %vm3595, %v3641, %v3640
    %v3643 = vrot.slane %v3476, 4
    %v3644 = vsel %vm3598, %v3643, %v3642
    %v3645 = vrot.slane %v3477, 3
    %v3646 = vsel %vm3601, %v3645, %v3644
    %v3647 = vrot.slane %v3478, 2
    %v3648 = vsel %vm3604, %v3647, %v3646
    %v3649 = vrot.slane %v3479, 1
    %v3650 = vsel %vm3607, %v3649, %v3648
    %v3651 = vrot.slane %v3481, 7
    %v3652 = vsel %vm3589, %v3651, %v3480
    %v3653 = vrot.slane %v3482, 6
    %v3654 = vsel %vm3592, %v3653, %v3652
    %v3655 = vrot.slane %v3483, 5
    %v3656 = vsel %vm3595, %v3655, %v3654
    %v3657 = vrot.slane %v3484, 4
    %v3658 = vsel %vm3598, %v3657, %v3656
    %v3659 = vrot.slane %v3485, 3
    %v3660 = vsel %vm3601, %v3659, %v3658
    %v3661 = vrot.slane %v3486, 2
    %v3662 = vsel %vm3604, %v3661, %v3660
    %v3663 = vrot.slane %v3487, 1
    %v3664 = vsel %vm3607, %v3663, %v3662
    %v3665 = vrot.slane %v3489, 7
    %v3666 = vsel %vm3589, %v3665, %v3488
    %v3667 = vrot.slane %v3490, 6
    %v3668 = vsel %vm3592, %v3667, %v3666
    %v3669 = vrot.slane %v3491, 5
    %v3670 = vsel %vm3595, %v3669, %v3668
    %v3671 = vrot.slane %v3492, 4
    %v3672 = vsel %vm3598, %v3671, %v3670
    %v3673 = vrot.slane %v3493, 3
    %v3674 = vsel %vm3601, %v3673, %v3672
    %v3675 = vrot.slane %v3494, 2
    %v3676 = vsel %vm3604, %v3675, %v3674
    %v3677 = vrot.slane %v3495, 1
    %v3678 = vsel %vm3607, %v3677, %v3676
    %v3679 = vrot.slane %v3497, 7
    %v3680 = vsel %vm3589, %v3679, %v3496
    %v3681 = vrot.slane %v3498, 6
    %v3682 = vsel %vm3592, %v3681, %v3680
    %v3683 = vrot.slane %v3499, 5
    %v3684 = vsel %vm3595, %v3683, %v3682
    %v3685 = vrot.slane %v3500, 4
    %v3686 = vsel %vm3598, %v3685, %v3684
    %v3687 = vrot.slane %v3501, 3
    %v3688 = vsel %vm3601, %v3687, %v3686
    %v3689 = vrot.slane %v3502, 2
    %v3690 = vsel %vm3604, %v3689, %v3688
    %v3691 = vrot.slane %v3503, 1
    %v3692 = vsel %vm3607, %v3691, %v3690
    %v3693 = vrot.slane %v3505, 7
    %v3694 = vsel %vm3589, %v3693, %v3504
    %v3695 = vrot.slane %v3506, 6
    %v3696 = vsel %vm3592, %v3695, %v3694
    %v3697 = vrot.slane %v3507, 5
    %v3698 = vsel %vm3595, %v3697, %v3696
    %v3699 = vrot.slane %v3508, 4
    %v3700 = vsel %vm3598, %v3699, %v3698
    %v3701 = vrot.slane %v3509, 3
    %v3702 = vsel %vm3601, %v3701, %v3700
    %v3703 = vrot.slane %v3510, 2
    %v3704 = vsel %vm3604, %v3703, %v3702
    %v3705 = vrot.slane %v3511, 1
    %v3706 = vsel %vm3607, %v3705, %v3704
    %v3707 = vsel %vm2647, %v3608, 0
    %v3709 = vsel %vm2647, %v3622, 0
    %v3711 = vsel %vm2647, %v3636, 0
    %v3713 = vsel %vm2647, %v3650, 0
    %v3715 = vsel %vm2647, %v3664, 0
    %v3717 = vsel %vm2647, %v3678, 0
    %v3719 = vsel %vm2647, %v3692, 0
    %v3721 = vsel %vm2647, %v3706, 0
    %3723 = vmatprep.subr.mxu0 %v46
    %3724 = vmatpush1.msra.mxu0 %v45
    %3725 = vmatprep.subr.mxu0 %v48
    %3726 = vmatpush1.msra.mxu0 %v47
    %3727 = vmatprep.subr.mxu0 %v50
    %3728 = vmatpush1.msra.mxu0 %v49
    %3729 = vmatprep.subr.mxu0 %v52
    %3730 = vmatpush1.msra.mxu0 %v51
    %3731 = vmatprep.subr.mxu0 0.0
    %3732 = vmatpush1.msra.mxu0 0.0
    %3733 = vmatprep.subr.mxu0 0.0
    %3734 = vmatpush1.msra.mxu0 0.0
    %3735 = vmatprep.subr.mxu0 0.0
    %3736 = vmatpush1.msra.mxu0 0.0
    %3737 = vmatprep.subr.mxu0 0.0
    %3738 = vmatpush1.msra.mxu0 0.0
    %3739 = vmatprep.subr.mxu0 0.0
    %3740 = vmatpush1.msra.mxu0 0.0
    %3741 = vmatprep.subr.mxu0 0.0
    %3742 = vmatpush1.msra.mxu0 0.0
    %3743 = vmatprep.subr.mxu0 0.0
    %3744 = vmatpush1.msra.mxu0 0.0
    %3745 = vmatprep.subr.mxu0 0.0
    %3746 = vmatpush1.msra.mxu0 0.0
    %3747 = vmatprep.subr.mxu0 0.0
    %3748 = vmatpush1.msra.mxu0 0.0
    %3749 = vmatprep.subr.mxu0 0.0
    %3750 = vmatpush1.msra.mxu0 0.0
    %3751 = vmatprep.subr.mxu0 0.0
    %3752 = vmatpush1.msra.mxu0 0.0
    %3753 = vmatprep.subr.mxu0 0.0
    %3754 = vmatpush1.msra.mxu0 0.0
    %3755 = vmatprep.subr.mxu0 0.0
    %3756 = vmatpush1.msra.mxu0 0.0
    %3757 = vmatprep.subr.mxu0 0.0
    %3758 = vmatpush1.msra.mxu0 0.0
    %3759 = vmatprep.subr.mxu0 0.0
    %3760 = vmatpush1.msra.mxu0 0.0
    %3761 = vmatprep.subr.mxu0 0.0
    %3762 = vmatpush1.msra.mxu0 0.0
    %3763 = vmatprep.subr.mxu0 0.0
    %3764 = vmatpush1.msra.mxu0 0.0
    %3765 = vmatprep.subr.mxu0 0.0
    %3766 = vmatpush1.msra.mxu0 0.0
    %3767 = vmatprep.subr.mxu0 0.0
    %3768 = vmatpush1.msra.mxu0 0.0
    %3769 = vmatprep.subr.mxu0 0.0
    %3770 = vmatpush1.msra.mxu0 0.0
    %3771 = vmatprep.subr.mxu0 0.0
    %3772 = vmatpush1.msra.mxu0 0.0
    %3773 = vmatprep.subr.mxu0 0.0
    %3774 = vmatpush1.msra.mxu0 0.0
    %3775 = vmatprep.subr.mxu0 0.0
    %3776 = vmatpush1.msra.mxu0 0.0
    %3777 = vmatprep.subr.mxu0 0.0
    %3778 = vmatpush1.msra.mxu0 0.0
    %3779 = vmatprep.subr.mxu0 0.0
    %3780 = vmatpush1.msra.mxu0 0.0
    %3781 = vmatprep.subr.mxu0 0.0
    %3782 = vmatpush1.msra.mxu0 0.0
    %3783 = vmatprep.subr.mxu0 0.0
    %3784 = vmatpush1.msra.mxu0 0.0
    %3785 = vmatprep.subr.mxu0 0.0
    %3786 = vmatpush1.msra.mxu0 0.0
    %3787 = vmatprep.mubr.f32.mxu0 0.0
    %3788 = vmatmul.mubr.f32.gmra.mrb[0].mxu0 %v3707
    %v3789 = vpop.f32.mrb[0].mxu0
    %v3790 = vadd.f32 %v3517, %v3789
    %v3791 = vpop.f32.mrb[0].mxu0
    %v3792 = vadd.f32 %v3521, %v3791
    %3793 = vmatprep.mubr.f32.mxu0 0.0
    %3794 = vmatmul.mubr.f32.gmra.mrb[0].mxu0 %v3709
    %v3795 = vpop.f32.mrb[0].mxu0
    %v3796 = vadd.f32 %v3517, %v3795
    %v3797 = vpop.f32.mrb[0].mxu0
    %v3798 = vadd.f32 %v3521, %v3797
    %3799 = vmatprep.mubr.f32.mxu0 0.0
    %3800 = vmatmul.mubr.f32.gmra.mrb[0].mxu0 %v3711
    %v3801 = vpop.f32.mrb[0].mxu0
    %v3802 = vadd.f32 %v3517, %v3801
    %v3803 = vpop.f32.mrb[0].mxu0
    %v3804 = vadd.f32 %v3521, %v3803
    %3805 = vmatprep.mubr.f32.mxu0 0.0
    %3806 = vmatmul.mubr.f32.gmra.mrb[0].mxu0 %v3713
    %v3807 = vpop.f32.mrb[0].mxu0
    %v3808 = vadd.f32 %v3517, %v3807
    %v3809 = vpop.f32.mrb[0].mxu0
    %v3810 = vadd.f32 %v3521, %v3809
    %3811 = vmatprep.mubr.f32.mxu0 0.0
    %3812 = vmatmul.mubr.f32.gmra.mrb[0].mxu0 %v3715
    %v3813 = vpop.f32.mrb[0].mxu0
    %v3814 = vadd.f32 %v3517, %v3813
    %v3815 = vpop.f32.mrb[0].mxu0
    %v3816 = vadd.f32 %v3521, %v3815
    %3817 = vmatprep.mubr.f32.mxu0 0.0
    %3818 = vmatmul.mubr.f32.gmra.mrb[0].mxu0 %v3717
    %v3819 = vpop.f32.mrb[0].mxu0
    %v3820 = vadd.f32 %v3517, %v3819
    %v3821 = vpop.f32.mrb[0].mxu0
    %v3822 = vadd.f32 %v3521, %v3821
    %3823 = vmatprep.mubr.f32.mxu0 0.0
    %3824 = vmatmul.mubr.f32.gmra.mrb[0].mxu0 %v3719
    %v3825 = vpop.f32.mrb[0].mxu0
    %v3826 = vadd.f32 %v3517, %v3825
    %v3827 = vpop.f32.mrb[0].mxu0
    %v3828 = vadd.f32 %v3521, %v3827
    %3829 = vmatprep.mubr.f32.mxu0 0.0
    %3830 = vmatmul.mubr.f32.gmra.mrb[0].mxu0 %v3721
    %v3831 = vpop.f32.mrb[0].mxu0
    %v3832 = vadd.f32 %v3517, %v3831
    %v3833 = vpop.f32.mrb[0].mxu0
    %v3834 = vadd.f32 %v3521, %v3833
    %3835 = vdwg.mxu0
    %3836 = vst [vmem:[#allocation2] sm:$0xff] %v3790
    %3837 = vst [vmem:[#allocation2 + $0x8] sm:$0xff] %v3792
    %3838 = vst [vmem:[#allocation2 + $0x10] sm:$0xff] %v3796
    %3839 = vst [vmem:[#allocation2 + $0x18] sm:$0xff] %v3798
    %3840 = vst [vmem:[#allocation2 + $0x20] sm:$0xff] %v3802
    %3841 = vst [vmem:[#allocation2 + $0x28] sm:$0xff] %v3804
    %3842 = vst [vmem:[#allocation2 + $0x30] sm:$0xff] %v3808
    %3843 = vst [vmem:[#allocation2 + $0x38] sm:$0xff] %v3810
    %3844 = vst [vmem:[#allocation2 + $0x40] sm:$0xff] %v3814
    %3845 = vst [vmem:[#allocation2 + $0x48] sm:$0xff] %v3816
    %3846 = vst [vmem:[#allocation2 + $0x50] sm:$0xff] %v3820
    %3847 = vst [vmem:[#allocation2 + $0x58] sm:$0xff] %v3822
    %3848 = vst [vmem:[#allocation2 + $0x60] sm:$0xff] %v3826
    %3849 = vst [vmem:[#allocation2 + $0x68] sm:$0xff] %v3828
    %3850 = vst [vmem:[#allocation2 + $0x70] sm:$0xff] %v3832
    %3851 = vst [vmem:[#allocation2 + $0x78] sm:$0xff] %v3834
    %v3852 = vld [vmem:[%s9] sm:$0xff]
    %v3853 = vrcp.pop %v3852
    %v3854 = vmul.f32 1.0, %v3853
    %s3855 = smul.u32 0, 2
    %s3856 = smul.addr %s3855, 8
    %s3857 = scalar_lea.vmem [#allocation2], %s3856
    %v3858 = vld [vmem:[%s3857] sm:$0xff]
    %v3859 = vld [vmem:[%s3857 + $0x8] sm:$0xff]
    %s3860 = smul.u32 7, 2
    %s3861 = smul.addr %s3860, 8
    %s3862 = scalar_lea.vmem [#allocation2], %s3861
    %v3863 = vld [vmem:[%s3862] sm:$0xff]
    %v3864 = vld [vmem:[%s3862 + $0x8] sm:$0xff]
    %v3866 = vsel %vm1429, 0.0, 0
    %3868 = vmatprep.subr.mxu0 %v54
    %3869 = vmatpush1.msra.mxu0 %v53
    %3870 = vmatprep.subr.mxu0 %v56
    %3871 = vmatpush1.msra.mxu0 %v55
    %3872 = vmatprep.subr.mxu0 %v58
    %3873 = vmatpush1.msra.mxu0 %v57
    %3874 = vmatprep.subr.mxu0 %v60
    %3875 = vmatpush1.msra.mxu0 %v59
    %3876 = vmatprep.subr.mxu0 %v62
    %3877 = vmatpush1.msra.mxu0 %v61
    %3878 = vmatprep.subr.mxu0 %v64
    %3879 = vmatpush1.msra.mxu0 %v63
    %3880 = vmatprep.subr.mxu0 %v66
    %3881 = vmatpush1.msra.mxu0 %v65
    %3882 = vmatprep.subr.mxu0 %v68
    %3883 = vmatpush1.msra.mxu0 %v67
    %3884 = vmatprep.subr.mxu0 0.0
    %3885 = vmatpush1.msra.mxu0 0.0
    %3886 = vmatprep.subr.mxu0 0.0
    %3887 = vmatpush1.msra.mxu0 0.0
    %3888 = vmatprep.subr.mxu0 0.0
    %3889 = vmatpush1.msra.mxu0 0.0
    %3890 = vmatprep.subr.mxu0 0.0
    %3891 = vmatpush1.msra.mxu0 0.0
    %3892 = vmatprep.subr.mxu0 0.0
    %3893 = vmatpush1.msra.mxu0 0.0
    %3894 = vmatprep.subr.mxu0 0.0
    %3895 = vmatpush1.msra.mxu0 0.0
    %3896 = vmatprep.subr.mxu0 0.0
    %3897 = vmatpush1.msra.mxu0 0.0
    %3898 = vmatprep.subr.mxu0 0.0
    %3899 = vmatpush1.msra.mxu0 0.0
    %3900 = vmatprep.subr.mxu0 0.0
    %3901 = vmatpush1.msra.mxu0 0.0
    %3902 = vmatprep.subr.mxu0 0.0
    %3903 = vmatpush1.msra.mxu0 0.0
    %3904 = vmatprep.subr.mxu0 0.0
    %3905 = vmatpush1.msra.mxu0 0.0
    %3906 = vmatprep.subr.mxu0 0.0
    %3907 = vmatpush1.msra.mxu0 0.0
    %3908 = vmatprep.subr.mxu0 0.0
    %3909 = vmatpush1.msra.mxu0 0.0
    %3910 = vmatprep.subr.mxu0 0.0
    %3911 = vmatpush1.msra.mxu0 0.0
    %3912 = vmatprep.subr.mxu0 0.0
    %3913 = vmatpush1.msra.mxu0 0.0
    %3914 = vmatprep.subr.mxu0 0.0
    %3915 = vmatpush1.msra.mxu0 0.0
    %3916 = vmatprep.subr.mxu0 0.0
    %3917 = vmatpush1.msra.mxu0 0.0
    %3918 = vmatprep.subr.mxu0 0.0
    %3919 = vmatpush1.msra.mxu0 0.0
    %3920 = vmatprep.subr.mxu0 0.0
    %3921 = vmatpush1.msra.mxu0 0.0
    %3922 = vmatprep.subr.mxu0 0.0
    %3923 = vmatpush1.msra.mxu0 0.0
    %3924 = vmatprep.subr.mxu0 0.0
    %3925 = vmatpush1.msra.mxu0 0.0
    %3926 = vmatprep.subr.mxu0 0.0
    %3927 = vmatpush1.msra.mxu0 0.0
    %3928 = vmatprep.subr.mxu0 0.0
    %3929 = vmatpush1.msra.mxu0 0.0
    %3930 = vmatprep.subr.mxu0 0.0
    %3931 = vmatpush1.msra.mxu0 0.0
    %3932 = vmatprep.mubr.f32.mxu0 0.0
    %3933 = vmatmul.mubr.f32.gmra.mrb[0].mxu0 %v3866
    %v3934 = vpop.f32.mrb[0].mxu0
    %v3935 = vadd.f32 0.0, %v3934
    %v3936 = vpop.f32.mrb[0].mxu0
    %v3937 = vadd.f32 0.0, %v3936
    %3938 = vdwg.mxu0
    %v3939 = vadd.f32 %v3858, %v3935
    %v3940 = vadd.f32 %v3864, %v3937
    %3942 = vrot.lane.b32.xlu0 %v3940, 32
    %v3943 = vpop.permute.xlu0 %3942
    %v3945 = vsel %vm2647, %v3939, %v3943
    %v3946 = vmul.f32 %v3945, 0.5
    %v3947 = vtanh.pop %v3946
    %v3948 = vmul.f32 %v3947, 0.5
    %v3949 = vadd.f32 %v3948, 0.5
    %3951 = vrot.lane.b32.xlu0 %v3939, 96
    %v3952 = vpop.permute.xlu0 %3951
    %v3954 = vsel %vm2647, %v3952, %v3940
    %v3955 = vmul.f32 %v3954, 0.5
    %v3956 = vtanh.pop %v3955
    %v3957 = vmul.f32 %v3956, 0.5
    %v3958 = vadd.f32 %v3957, 0.5
    %3959 = vrot.lane.b32.xlu0 %v3939, 64
    %v3960 = vpop.permute.xlu0 %3959
    %3962 = vrot.lane.b32.xlu0 %v3940, 96
    %v3963 = vpop.permute.xlu0 %3962
    %v3965 = vsel %vm2647, %v3960, %v3963
    %v3966 = vtanh.pop %v3965
    %3967 = vrot.lane.b32.xlu0 %v3939, 32
    %v3968 = vpop.permute.xlu0 %3967
    %3970 = vrot.lane.b32.xlu0 %v3940, 64
    %v3971 = vpop.permute.xlu0 %3970
    %v3973 = vsel %vm2647, %v3968, %v3971
    %v3974 = vmul.f32 %v3973, 0.5
    %v3975 = vtanh.pop %v3974
    %v3976 = vmul.f32 %v3975, 0.5
    %v3977 = vadd.f32 %v3976, 0.5
    %v3978 = vmul.f32 %v3958, 0.0
    %v3979 = vmul.f32 %v3949, %v3966
    %v3980 = vadd.f32 %v3978, %v3979
    %v3981 = vtanh.pop %v3980
    %v3982 = vmul.f32 %v3977, %v3981
    %v3983 = vld [vmem:[%s5] sm:$0xff]
    %s3984 = scalar_lea.vmem %s5, 56
    %v3985 = vld [vmem:[%s3984] sm:$0xff]
    %3987 = vset.pattern.permute.xlu0 0
    %3988 = vperm.xlu0 %3987, %v3983
    %v3989 = vpop.permute.xlu0 %3988
    %v3991 = vmul.f32 %v3989, %v3982
    %v3992 = vadd.f32 %v3991, 0.0
    %3994 = vset.pattern.permute.xlu0 0
    %3995 = vperm.xlu0 %3994, %v3985
    %v3996 = vpop.permute.xlu0 %3995
    %v3998 = vmul.f32 %v3996, %v3982
    %v3999 = vadd.f32 %v3998, 0.0
    %s4000 = smul.u32 1, 2
    %s4001 = smul.addr %s4000, 8
    %s4002 = scalar_lea.vmem [#allocation2], %s4001
    %v4003 = vld [vmem:[%s4002] sm:$0xff]
    %v4004 = vld [vmem:[%s4002 + $0x8] sm:$0xff]
    %s4005 = smul.u32 6, 2
    %s4006 = smul.addr %s4005, 8
    %s4007 = scalar_lea.vmem [#allocation2], %s4006
    %v4008 = vld [vmem:[%s4007] sm:$0xff]
    %v4009 = vld [vmem:[%s4007 + $0x8] sm:$0xff]
    %v4011 = vsel %vm1429, %v3982, 0
    %4013 = vmatprep.subr.mxu0 %v54
    %4014 = vmatpush1.msra.mxu0 %v53
    %4015 = vmatprep.subr.mxu0 %v56
    %4016 = vmatpush1.msra.mxu0 %v55
    %4017 = vmatprep.subr.mxu0 %v58
    %4018 = vmatpush1.msra.mxu0 %v57
    %4019 = vmatprep.subr.mxu0 %v60
    %4020 = vmatpush1.msra.mxu0 %v59
    %4021 = vmatprep.subr.mxu0 %v62
    %4022 = vmatpush1.msra.mxu0 %v61
    %4023 = vmatprep.subr.mxu0 %v64
    %4024 = vmatpush1.msra.mxu0 %v63
    %4025 = vmatprep.subr.mxu0 %v66
    %4026 = vmatpush1.msra.mxu0 %v65
    %4027 = vmatprep.subr.mxu0 %v68
    %4028 = vmatpush1.msra.mxu0 %v67
    %4029 = vmatprep.subr.mxu0 0.0
    %4030 = vmatpush1.msra.mxu0 0.0
    %4031 = vmatprep.subr.mxu0 0.0
    %4032 = vmatpush1.msra.mxu0 0.0
    %4033 = vmatprep.subr.mxu0 0.0
    %4034 = vmatpush1.msra.mxu0 0.0
    %4035 = vmatprep.subr.mxu0 0.0
    %4036 = vmatpush1.msra.mxu0 0.0
    %4037 = vmatprep.subr.mxu0 0.0
    %4038 = vmatpush1.msra.mxu0 0.0
    %4039 = vmatprep.subr.mxu0 0.0
    %4040 = vmatpush1.msra.mxu0 0.0
    %4041 = vmatprep.subr.mxu0 0.0
    %4042 = vmatpush1.msra.mxu0 0.0
    %4043 = vmatprep.subr.mxu0 0.0
    %4044 = vmatpush1.msra.mxu0 0.0
    %4045 = vmatprep.subr.mxu0 0.0
    %4046 = vmatpush1.msra.mxu0 0.0
    %4047 = vmatprep.subr.mxu0 0.0
    %4048 = vmatpush1.msra.mxu0 0.0
    %4049 = vmatprep.subr.mxu0 0.0
    %4050 = vmatpush1.msra.mxu0 0.0
    %4051 = vmatprep.subr.mxu0 0.0
    %4052 = vmatpush1.msra.mxu0 0.0
    %4053 = vmatprep.subr.mxu0 0.0
    %4054 = vmatpush1.msra.mxu0 0.0
    %4055 = vmatprep.subr.mxu0 0.0
    %4056 = vmatpush1.msra.mxu0 0.0
    %4057 = vmatprep.subr.mxu0 0.0
    %4058 = vmatpush1.msra.mxu0 0.0
    %4059 = vmatprep.subr.mxu0 0.0
    %4060 = vmatpush1.msra.mxu0 0.0
    %4061 = vmatprep.subr.mxu0 0.0
    %4062 = vmatpush1.msra.mxu0 0.0
    %4063 = vmatprep.subr.mxu0 0.0
    %4064 = vmatpush1.msra.mxu0 0.0
    %4065 = vmatprep.subr.mxu0 0.0
    %4066 = vmatpush1.msra.mxu0 0.0
    %4067 = vmatprep.subr.mxu0 0.0
    %4068 = vmatpush1.msra.mxu0 0.0
    %4069 = vmatprep.subr.mxu0 0.0
    %4070 = vmatpush1.msra.mxu0 0.0
    %4071 = vmatprep.subr.mxu0 0.0
    %4072 = vmatpush1.msra.mxu0 0.0
    %4073 = vmatprep.subr.mxu0 0.0
    %4074 = vmatpush1.msra.mxu0 0.0
    %4075 = vmatprep.subr.mxu0 0.0
    %4076 = vmatpush1.msra.mxu0 0.0
    %4077 = vmatprep.mubr.f32.mxu0 0.0
    %4078 = vmatmul.mubr.f32.gmra.mrb[0].mxu0 %v4011
    %v4079 = vpop.f32.mrb[0].mxu0
    %v4080 = vadd.f32 0.0, %v4079
    %v4081 = vpop.f32.mrb[0].mxu0
    %v4082 = vadd.f32 0.0, %v4081
    %4083 = vdwg.mxu0
    %v4084 = vadd.f32 %v4003, %v4080
    %v4085 = vadd.f32 %v4009, %v4082
    %4087 = vrot.lane.b32.xlu0 %v4085, 32
    %v4088 = vpop.permute.xlu0 %4087
    %v4090 = vsel %vm2647, %v4084, %v4088
    %v4091 = vmul.f32 %v4090, 0.5
    %v4092 = vtanh.pop %v4091
    %v4093 = vmul.f32 %v4092, 0.5
    %v4094 = vadd.f32 %v4093, 0.5
    %4096 = vrot.lane.b32.xlu0 %v4084, 96
    %v4097 = vpop.permute.xlu0 %4096
    %v4099 = vsel %vm2647, %v4097, %v4085
    %v4100 = vmul.f32 %v4099, 0.5
    %v4101 = vtanh.pop %v4100
    %v4102 = vmul.f32 %v4101, 0.5
    %v4103 = vadd.f32 %v4102, 0.5
    %4104 = vrot.lane.b32.xlu0 %v4084, 64
    %v4105 = vpop.permute.xlu0 %4104
    %4107 = vrot.lane.b32.xlu0 %v4085, 96
    %v4108 = vpop.permute.xlu0 %4107
    %v4110 = vsel %vm2647, %v4105, %v4108
    %v4111 = vtanh.pop %v4110
    %4112 = vrot.lane.b32.xlu0 %v4084, 32
    %v4113 = vpop.permute.xlu0 %4112
    %4115 = vrot.lane.b32.xlu0 %v4085, 64
    %v4116 = vpop.permute.xlu0 %4115
    %v4118 = vsel %vm2647, %v4113, %v4116
    %v4119 = vmul.f32 %v4118, 0.5
    %v4120 = vtanh.pop %v4119
    %v4121 = vmul.f32 %v4120, 0.5
    %v4122 = vadd.f32 %v4121, 0.5
    %v4123 = vmul.f32 %v4103, %v3980
    %v4124 = vmul.f32 %v4094, %v4111
    %v4125 = vadd.f32 %v4123, %v4124
    %v4126 = vtanh.pop %v4125
    %v4127 = vmul.f32 %v4122, %v4126
    %s4128 = scalar_lea.vmem %s5, 8
    %v4129 = vld [vmem:[%s4128] sm:$0xff]
    %s4130 = scalar_lea.vmem %s5, 48
    %v4131 = vld [vmem:[%s4130] sm:$0xff]
    %4133 = vset.pattern.permute.xlu0 0
    %4134 = vperm.xlu0 %4133, %v4129
    %v4135 = vpop.permute.xlu0 %4134
    %v4137 = vmul.f32 %v4135, %v4127
    %v4138 = vadd.f32 %v3992, %v4137
    %4140 = vset.pattern.permute.xlu0 0
    %4141 = vperm.xlu0 %4140, %v4131
    %v4142 = vpop.permute.xlu0 %4141
    %v4144 = vmul.f32 %v4142, %v4127
    %v4145 = vadd.f32 %v3999, %v4144
    %s4146 = smul.u32 2, 2
    %s4147 = smul.addr %s4146, 8
    %s4148 = scalar_lea.vmem [#allocation2], %s4147
    %v4149 = vld [vmem:[%s4148] sm:$0xff]
    %v4150 = vld [vmem:[%s4148 + $0x8] sm:$0xff]
    %s4151 = smul.u32 5, 2
    %s4152 = smul.addr %s4151, 8
    %s4153 = scalar_lea.vmem [#allocation2], %s4152
    %v4154 = vld [vmem:[%s4153] sm:$0xff]
    %v4155 = vld [vmem:[%s4153 + $0x8] sm:$0xff]
    %v4157 = vsel %vm1429, %v4127, 0
    %4159 = vmatprep.subr.mxu0 %v54
    %4160 = vmatpush1.msra.mxu0 %v53
    %4161 = vmatprep.subr.mxu0 %v56
    %4162 = vmatpush1.msra.mxu0 %v55
    %4163 = vmatprep.subr.mxu0 %v58
    %4164 = vmatpush1.msra.mxu0 %v57
    %4165 = vmatprep.subr.mxu0 %v60
    %4166 = vmatpush1.msra.mxu0 %v59
    %4167 = vmatprep.subr.mxu0 %v62
    %4168 = vmatpush1.msra.mxu0 %v61
    %4169 = vmatprep.subr.mxu0 %v64
    %4170 = vmatpush1.msra.mxu0 %v63
    %4171 = vmatprep.subr.mxu0 %v66
    %4172 = vmatpush1.msra.mxu0 %v65
    %4173 = vmatprep.subr.mxu0 %v68
    %4174 = vmatpush1.msra.mxu0 %v67
    %4175 = vmatprep.subr.mxu0 0.0
    %4176 = vmatpush1.msra.mxu0 0.0
    %4177 = vmatprep.subr.mxu0 0.0
    %4178 = vmatpush1.msra.mxu0 0.0
    %4179 = vmatprep.subr.mxu0 0.0
    %4180 = vmatpush1.msra.mxu0 0.0
    %4181 = vmatprep.subr.mxu0 0.0
    %4182 = vmatpush1.msra.mxu0 0.0
    %4183 = vmatprep.subr.mxu0 0.0
    %4184 = vmatpush1.msra.mxu0 0.0
    %4185 = vmatprep.subr.mxu0 0.0
    %4186 = vmatpush1.msra.mxu0 0.0
    %4187 = vmatprep.subr.mxu0 0.0
    %4188 = vmatpush1.msra.mxu0 0.0
    %4189 = vmatprep.subr.mxu0 0.0
    %4190 = vmatpush1.msra.mxu0 0.0
    %4191 = vmatprep.subr.mxu0 0.0
    %4192 = vmatpush1.msra.mxu0 0.0
    %4193 = vmatprep.subr.mxu0 0.0
    %4194 = vmatpush1.msra.mxu0 0.0
    %4195 = vmatprep.subr.mxu0 0.0
    %4196 = vmatpush1.msra.mxu0 0.0
    %4197 = vmatprep.subr.mxu0 0.0
    %4198 = vmatpush1.msra.mxu0 0.0
    %4199 = vmatprep.subr.mxu0 0.0
    %4200 = vmatpush1.msra.mxu0 0.0
    %4201 = vmatprep.subr.mxu0 0.0
    %4202 = vmatpush1.msra.mxu0 0.0
    %4203 = vmatprep.subr.mxu0 0.0
    %4204 = vmatpush1.msra.mxu0 0.0
    %4205 = vmatprep.subr.mxu0 0.0
    %4206 = vmatpush1.msra.mxu0 0.0
    %4207 = vmatprep.subr.mxu0 0.0
    %4208 = vmatpush1.msra.mxu0 0.0
    %4209 = vmatprep.subr.mxu0 0.0
    %4210 = vmatpush1.msra.mxu0 0.0
    %4211 = vmatprep.subr.mxu0 0.0
    %4212 = vmatpush1.msra.mxu0 0.0
    %4213 = vmatprep.subr.mxu0 0.0
    %4214 = vmatpush1.msra.mxu0 0.0
    %4215 = vmatprep.subr.mxu0 0.0
    %4216 = vmatpush1.msra.mxu0 0.0
    %4217 = vmatprep.subr.mxu0 0.0
    %4218 = vmatpush1.msra.mxu0 0.0
    %4219 = vmatprep.subr.mxu0 0.0
    %4220 = vmatpush1.msra.mxu0 0.0
    %4221 = vmatprep.subr.mxu0 0.0
    %4222 = vmatpush1.msra.mxu0 0.0
    %4223 = vmatprep.mubr.f32.mxu0 0.0
    %4224 = vmatmul.mubr.f32.gmra.mrb[0].mxu0 %v4157
    %v4225 = vpop.f32.mrb[0].mxu0
    %v4226 = vadd.f32 0.0, %v4225
    %v4227 = vpop.f32.mrb[0].mxu0
    %v4228 = vadd.f32 0.0, %v4227
    %4229 = vdwg.mxu0
    %v4230 = vadd.f32 %v4149, %v4226
    %v4231 = vadd.f32 %v4155, %v4228
    %4233 = vrot.lane.b32.xlu0 %v4231, 32
    %v4234 = vpop.permute.xlu0 %4233
    %v4236 = vsel %vm2647, %v4230, %v4234
    %v4237 = vmul.f32 %v4236, 0.5
    %v4238 = vtanh.pop %v4237
    %v4239 = vmul.f32 %v4238, 0.5
    %v4240 = vadd.f32 %v4239, 0.5
    %4242 = vrot.lane.b32.xlu0 %v4230, 96
    %v4243 = vpop.permute.xlu0 %4242
    %v4245 = vsel %vm2647, %v4243, %v4231
    %v4246 = vmul.f32 %v4245, 0.5
    %v4247 = vtanh.pop %v4246
    %v4248 = vmul.f32 %v4247, 0.5
    %v4249 = vadd.f32 %v4248, 0.5
    %4250 = vrot.lane.b32.xlu0 %v4230, 64
    %v4251 = vpop.permute.xlu0 %4250
    %4253 = vrot.lane.b32.xlu0 %v4231, 96
    %v4254 = vpop.permute.xlu0 %4253
    %v4256 = vsel %vm2647, %v4251, %v4254
    %v4257 = vtanh.pop %v4256
    %4258 = vrot.lane.b32.xlu0 %v4230, 32
    %v4259 = vpop.permute.xlu0 %4258
    %4261 = vrot.lane.b32.xlu0 %v4231, 64
    %v4262 = vpop.permute.xlu0 %4261
    %v4264 = vsel %vm2647, %v4259, %v4262
    %v4265 = vmul.f32 %v4264, 0.5
    %v4266 = vtanh.pop %v4265
    %v4267 = vmul.f32 %v4266, 0.5
    %v4268 = vadd.f32 %v4267, 0.5
    %v4269 = vmul.f32 %v4249, %v4125
    %v4270 = vmul.f32 %v4240, %v4257
    %v4271 = vadd.f32 %v4269, %v4270
    %v4272 = vtanh.pop %v4271
    %v4273 = vmul.f32 %v4268, %v4272
    %s4274 = scalar_lea.vmem %s5, 16
    %v4275 = vld [vmem:[%s4274] sm:$0xff]
    %s4276 = scalar_lea.vmem %s5, 40
    %v4277 = vld [vmem:[%s4276] sm:$0xff]
    %4279 = vset.pattern.permute.xlu0 0
    %4280 = vperm.xlu0 %4279, %v4275
    %v4281 = vpop.permute.xlu0 %4280
    %v4283 = vmul.f32 %v4281, %v4273
    %v4284 = vadd.f32 %v4138, %v4283
    %4286 = vset.pattern.permute.xlu0 0
    %4287 = vperm.xlu0 %4286, %v4277
    %v4288 = vpop.permute.xlu0 %4287
    %v4290 = vmul.f32 %v4288, %v4273
    %v4291 = vadd.f32 %v4145, %v4290
    %s4292 = smul.u32 3, 2
    %s4293 = smul.addr %s4292, 8
    %s4294 = scalar_lea.vmem [#allocation2], %s4293
    %v4295 = vld [vmem:[%s4294] sm:$0xff]
    %v4296 = vld [vmem:[%s4294 + $0x8] sm:$0xff]
    %s4297 = smul.u32 4, 2
    %s4298 = smul.addr %s4297, 8
    %s4299 = scalar_lea.vmem [#allocation2], %s4298
    %v4300 = vld [vmem:[%s4299] sm:$0xff]
    %v4301 = vld [vmem:[%s4299 + $0x8] sm:$0xff]
    %v4303 = vsel %vm1429, %v4273, 0
    %4305 = vmatprep.subr.mxu0 %v54
    %4306 = vmatpush1.msra.mxu0 %v53
    %4307 = vmatprep.subr.mxu0 %v56
    %4308 = vmatpush1.msra.mxu0 %v55
    %4309 = vmatprep.subr.mxu0 %v58
    %4310 = vmatpush1.msra.mxu0 %v57
    %4311 = vmatprep.subr.mxu0 %v60
    %4312 = vmatpush1.msra.mxu0 %v59
    %4313 = vmatprep.subr.mxu0 %v62
    %4314 = vmatpush1.msra.mxu0 %v61
    %4315 = vmatprep.subr.mxu0 %v64
    %4316 = vmatpush1.msra.mxu0 %v63
    %4317 = vmatprep.subr.mxu0 %v66
    %4318 = vmatpush1.msra.mxu0 %v65
    %4319 = vmatprep.subr.mxu0 %v68
    %4320 = vmatpush1.msra.mxu0 %v67
    %4321 = vmatprep.subr.mxu0 0.0
    %4322 = vmatpush1.msra.mxu0 0.0
    %4323 = vmatprep.subr.mxu0 0.0
    %4324 = vmatpush1.msra.mxu0 0.0
    %4325 = vmatprep.subr.mxu0 0.0
    %4326 = vmatpush1.msra.mxu0 0.0
    %4327 = vmatprep.subr.mxu0 0.0
    %4328 = vmatpush1.msra.mxu0 0.0
    %4329 = vmatprep.subr.mxu0 0.0
    %4330 = vmatpush1.msra.mxu0 0.0
    %4331 = vmatprep.subr.mxu0 0.0
    %4332 = vmatpush1.msra.mxu0 0.0
    %4333 = vmatprep.subr.mxu0 0.0
    %4334 = vmatpush1.msra.mxu0 0.0
    %4335 = vmatprep.subr.mxu0 0.0
    %4336 = vmatpush1.msra.mxu0 0.0
    %4337 = vmatprep.subr.mxu0 0.0
    %4338 = vmatpush1.msra.mxu0 0.0
    %4339 = vmatprep.subr.mxu0 0.0
    %4340 = vmatpush1.msra.mxu0 0.0
    %4341 = vmatprep.subr.mxu0 0.0
    %4342 = vmatpush1.msra.mxu0 0.0
    %4343 = vmatprep.subr.mxu0 0.0
    %4344 = vmatpush1.msra.mxu0 0.0
    %4345 = vmatprep.subr.mxu0 0.0
    %4346 = vmatpush1.msra.mxu0 0.0
    %4347 = vmatprep.subr.mxu0 0.0
    %4348 = vmatpush1.msra.mxu0 0.0
    %4349 = vmatprep.subr.mxu0 0.0
    %4350 = vmatpush1.msra.mxu0 0.0
    %4351 = vmatprep.subr.mxu0 0.0
    %4352 = vmatpush1.msra.mxu0 0.0
    %4353 = vmatprep.subr.mxu0 0.0
    %4354 = vmatpush1.msra.mxu0 0.0
    %4355 = vmatprep.subr.mxu0 0.0
    %4356 = vmatpush1.msra.mxu0 0.0
    %4357 = vmatprep.subr.mxu0 0.0
    %4358 = vmatpush1.msra.mxu0 0.0
    %4359 = vmatprep.subr.mxu0 0.0
    %4360 = vmatpush1.msra.mxu0 0.0
    %4361 = vmatprep.subr.mxu0 0.0
    %4362 = vmatpush1.msra.mxu0 0.0
    %4363 = vmatprep.subr.mxu0 0.0
    %4364 = vmatpush1.msra.mxu0 0.0
    %4365 = vmatprep.subr.mxu0 0.0
    %4366 = vmatpush1.msra.mxu0 0.0
    %4367 = vmatprep.subr.mxu0 0.0
    %4368 = vmatpush1.msra.mxu0 0.0
    %4369 = vmatprep.mubr.f32.mxu0 0.0
    %4370 = vmatmul.mubr.f32.gmra.mrb[0].mxu0 %v4303
    %v4371 = vpop.f32.mrb[0].mxu0
    %v4372 = vadd.f32 0.0, %v4371
    %v4373 = vpop.f32.mrb[0].mxu0
    %v4374 = vadd.f32 0.0, %v4373
    %4375 = vdwg.mxu0
    %v4376 = vadd.f32 %v4295, %v4372
    %v4377 = vadd.f32 %v4301, %v4374
    %4379 = vrot.lane.b32.xlu0 %v4377, 32
    %v4380 = vpop.permute.xlu0 %4379
    %v4382 = vsel %vm2647, %v4376, %v4380
    %v4383 = vmul.f32 %v4382, 0.5
    %v4384 = vtanh.pop %v4383
    %v4385 = vmul.f32 %v4384, 0.5
    %v4386 = vadd.f32 %v4385, 0.5
    %4388 = vrot.lane.b32.xlu0 %v4376, 96
    %v4389 = vpop.permute.xlu0 %4388
    %v4391 = vsel %vm2647, %v4389, %v4377
    %v4392 = vmul.f32 %v4391, 0.5
    %v4393 = vtanh.pop %v4392
    %v4394 = vmul.f32 %v4393, 0.5
    %v4395 = vadd.f32 %v4394, 0.5
    %4396 = vrot.lane.b32.xlu0 %v4376, 64
    %v4397 = vpop.permute.xlu0 %4396
    %4399 = vrot.lane.b32.xlu0 %v4377, 96
    %v4400 = vpop.permute.xlu0 %4399
    %v4402 = vsel %vm2647, %v4397, %v4400
    %v4403 = vtanh.pop %v4402
    %4404 = vrot.lane.b32.xlu0 %v4376, 32
    %v4405 = vpop.permute.xlu0 %4404
    %4407 = vrot.lane.b32.xlu0 %v4377, 64
    %v4408 = vpop.permute.xlu0 %4407
    %v4410 = vsel %vm2647, %v4405, %v4408
    %v4411 = vmul.f32 %v4410, 0.5
    %v4412 = vtanh.pop %v4411
    %v4413 = vmul.f32 %v4412, 0.5
    %v4414 = vadd.f32 %v4413, 0.5
    %v4415 = vmul.f32 %v4395, %v4271
    %v4416 = vmul.f32 %v4386, %v4403
    %v4417 = vadd.f32 %v4415, %v4416
    %v4418 = vtanh.pop %v4417
    %v4419 = vmul.f32 %v4414, %v4418
    %s4420 = scalar_lea.vmem %s5, 24
    %v4421 = vld [vmem:[%s4420] sm:$0xff]
    %s4422 = scalar_lea.vmem %s5, 32
    %v4423 = vld [vmem:[%s4422] sm:$0xff]
    %4425 = vset.pattern.permute.xlu0 0
    %4426 = vperm.xlu0 %4425, %v4421
    %v4427 = vpop.permute.xlu0 %4426
    %v4429 = vmul.f32 %v4427, %v4419
    %v4430 = vadd.f32 %v4284, %v4429
    %4432 = vset.pattern.permute.xlu0 0
    %4433 = vperm.xlu0 %4432, %v4423
    %v4434 = vpop.permute.xlu0 %4433
    %v4436 = vmul.f32 %v4434, %v4419
    %v4437 = vadd.f32 %v4291, %v4436
    %v4439 = vsel %vm1429, %v4419, 0
    %4441 = vmatprep.subr.mxu0 %v54
    %4442 = vmatpush1.msra.mxu0 %v53
    %4443 = vmatprep.subr.mxu0 %v56
    %4444 = vmatpush1.msra.mxu0 %v55
    %4445 = vmatprep.subr.mxu0 %v58
    %4446 = vmatpush1.msra.mxu0 %v57
    %4447 = vmatprep.subr.mxu0 %v60
    %4448 = vmatpush1.msra.mxu0 %v59
    %4449 = vmatprep.subr.mxu0 %v62
    %4450 = vmatpush1.msra.mxu0 %v61
    %4451 = vmatprep.subr.mxu0 %v64
    %4452 = vmatpush1.msra.mxu0 %v63
    %4453 = vmatprep.subr.mxu0 %v66
    %4454 = vmatpush1.msra.mxu0 %v65
    %4455 = vmatprep.subr.mxu0 %v68
    %4456 = vmatpush1.msra.mxu0 %v67
    %4457 = vmatprep.subr.mxu0 0.0
    %4458 = vmatpush1.msra.mxu0 0.0
    %4459 = vmatprep.subr.mxu0 0.0
    %4460 = vmatpush1.msra.mxu0 0.0
    %4461 = vmatprep.subr.mxu0 0.0
    %4462 = vmatpush1.msra.mxu0 0.0
    %4463 = vmatprep.subr.mxu0 0.0
    %4464 = vmatpush1.msra.mxu0 0.0
    %4465 = vmatprep.subr.mxu0 0.0
    %4466 = vmatpush1.msra.mxu0 0.0
    %4467 = vmatprep.subr.mxu0 0.0
    %4468 = vmatpush1.msra.mxu0 0.0
    %4469 = vmatprep.subr.mxu0 0.0
    %4470 = vmatpush1.msra.mxu0 0.0
    %4471 = vmatprep.subr.mxu0 0.0
    %4472 = vmatpush1.msra.mxu0 0.0
    %4473 = vmatprep.subr.mxu0 0.0
    %4474 = vmatpush1.msra.mxu0 0.0
    %4475 = vmatprep.subr.mxu0 0.0
    %4476 = vmatpush1.msra.mxu0 0.0
    %4477 = vmatprep.subr.mxu0 0.0
    %4478 = vmatpush1.msra.mxu0 0.0
    %4479 = vmatprep.subr.mxu0 0.0
    %4480 = vmatpush1.msra.mxu0 0.0
    %4481 = vmatprep.subr.mxu0 0.0
    %4482 = vmatpush1.msra.mxu0 0.0
    %4483 = vmatprep.subr.mxu0 0.0
    %4484 = vmatpush1.msra.mxu0 0.0
    %4485 = vmatprep.subr.mxu0 0.0
    %4486 = vmatpush1.msra.mxu0 0.0
    %4487 = vmatprep.subr.mxu0 0.0
    %4488 = vmatpush1.msra.mxu0 0.0
    %4489 = vmatprep.subr.mxu0 0.0
    %4490 = vmatpush1.msra.mxu0 0.0
    %4491 = vmatprep.subr.mxu0 0.0
    %4492 = vmatpush1.msra.mxu0 0.0
    %4493 = vmatprep.subr.mxu0 0.0
    %4494 = vmatpush1.msra.mxu0 0.0
    %4495 = vmatprep.subr.mxu0 0.0
    %4496 = vmatpush1.msra.mxu0 0.0
    %4497 = vmatprep.subr.mxu0 0.0
    %4498 = vmatpush1.msra.mxu0 0.0
    %4499 = vmatprep.subr.mxu0 0.0
    %4500 = vmatpush1.msra.mxu0 0.0
    %4501 = vmatprep.subr.mxu0 0.0
    %4502 = vmatpush1.msra.mxu0 0.0
    %4503 = vmatprep.subr.mxu0 0.0
    %4504 = vmatpush1.msra.mxu0 0.0
    %4505 = vmatprep.mubr.f32.mxu0 0.0
    %4506 = vmatmul.mubr.f32.gmra.mrb[0].mxu0 %v4439
    %v4507 = vpop.f32.mrb[0].mxu0
    %v4508 = vadd.f32 0.0, %v4507
    %v4509 = vpop.f32.mrb[0].mxu0
    %v4510 = vadd.f32 0.0, %v4509
    %4511 = vdwg.mxu0
    %v4512 = vadd.f32 %v4300, %v4508
    %v4513 = vadd.f32 %v4296, %v4510
    %4515 = vrot.lane.b32.xlu0 %v4513, 32
    %v4516 = vpop.permute.xlu0 %4515
    %v4518 = vsel %vm2647, %v4512, %v4516
    %v4519 = vmul.f32 %v4518, 0.5
    %v4520 = vtanh.pop %v4519
    %v4521 = vmul.f32 %v4520, 0.5
    %v4522 = vadd.f32 %v4521, 0.5
    %4524 = vrot.lane.b32.xlu0 %v4512, 96
    %v4525 = vpop.permute.xlu0 %4524
    %v4527 = vsel %vm2647, %v4525, %v4513
    %v4528 = vmul.f32 %v4527, 0.5
    %v4529 = vtanh.pop %v4528
    %v4530 = vmul.f32 %v4529, 0.5
    %v4531 = vadd.f32 %v4530, 0.5
    %4532 = vrot.lane.b32.xlu0 %v4512, 64
    %v4533 = vpop.permute.xlu0 %4532
    %4535 = vrot.lane.b32.xlu0 %v4513, 96
    %v4536 = vpop.permute.xlu0 %4535
    %v4538 = vsel %vm2647, %v4533, %v4536
    %v4539 = vtanh.pop %v4538
    %4540 = vrot.lane.b32.xlu0 %v4512, 32
    %v4541 = vpop.permute.xlu0 %4540
    %4543 = vrot.lane.b32.xlu0 %v4513, 64
    %v4544 = vpop.permute.xlu0 %4543
    %v4546 = vsel %vm2647, %v4541, %v4544
    %v4547 = vmul.f32 %v4546, 0.5
    %v4548 = vtanh.pop %v4547
    %v4549 = vmul.f32 %v4548, 0.5
    %v4550 = vadd.f32 %v4549, 0.5
    %v4551 = vmul.f32 %v4531, %v4417
    %v4552 = vmul.f32 %v4522, %v4539
    %v4553 = vadd.f32 %v4551, %v4552
    %v4554 = vtanh.pop %v4553
    %v4555 = vmul.f32 %v4550, %v4554
    %v4556 = vmul.f32 %v4434, %v4555
    %v4557 = vadd.f32 %v4430, %v4556
    %v4558 = vmul.f32 %v4427, %v4555
    %v4559 = vadd.f32 %v4437, %v4558
    %v4561 = vsel %vm1429, %v4555, 0
    %4563 = vmatprep.subr.mxu0 %v54
    %4564 = vmatpush1.msra.mxu0 %v53
    %4565 = vmatprep.subr.mxu0 %v56
    %4566 = vmatpush1.msra.mxu0 %v55
    %4567 = vmatprep.subr.mxu0 %v58
    %4568 = vmatpush1.msra.mxu0 %v57
    %4569 = vmatprep.subr.mxu0 %v60
    %4570 = vmatpush1.msra.mxu0 %v59
    %4571 = vmatprep.subr.mxu0 %v62
    %4572 = vmatpush1.msra.mxu0 %v61
    %4573 = vmatprep.subr.mxu0 %v64
    %4574 = vmatpush1.msra.mxu0 %v63
    %4575 = vmatprep.subr.mxu0 %v66
    %4576 = vmatpush1.msra.mxu0 %v65
    %4577 = vmatprep.subr.mxu0 %v68
    %4578 = vmatpush1.msra.mxu0 %v67
    %4579 = vmatprep.subr.mxu0 0.0
    %4580 = vmatpush1.msra.mxu0 0.0
    %4581 = vmatprep.subr.mxu0 0.0
    %4582 = vmatpush1.msra.mxu0 0.0
    %4583 = vmatprep.subr.mxu0 0.0
    %4584 = vmatpush1.msra.mxu0 0.0
    %4585 = vmatprep.subr.mxu0 0.0
    %4586 = vmatpush1.msra.mxu0 0.0
    %4587 = vmatprep.subr.mxu0 0.0
    %4588 = vmatpush1.msra.mxu0 0.0
    %4589 = vmatprep.subr.mxu0 0.0
    %4590 = vmatpush1.msra.mxu0 0.0
    %4591 = vmatprep.subr.mxu0 0.0
    %4592 = vmatpush1.msra.mxu0 0.0
    %4593 = vmatprep.subr.mxu0 0.0
    %4594 = vmatpush1.msra.mxu0 0.0
    %4595 = vmatprep.subr.mxu0 0.0
    %4596 = vmatpush1.msra.mxu0 0.0
    %4597 = vmatprep.subr.mxu0 0.0
    %4598 = vmatpush1.msra.mxu0 0.0
    %4599 = vmatprep.subr.mxu0 0.0
    %4600 = vmatpush1.msra.mxu0 0.0
    %4601 = vmatprep.subr.mxu0 0.0
    %4602 = vmatpush1.msra.mxu0 0.0
    %4603 = vmatprep.subr.mxu0 0.0
    %4604 = vmatpush1.msra.mxu0 0.0
    %4605 = vmatprep.subr.mxu0 0.0
    %4606 = vmatpush1.msra.mxu0 0.0
    %4607 = vmatprep.subr.mxu0 0.0
    %4608 = vmatpush1.msra.mxu0 0.0
    %4609 = vmatprep.subr.mxu0 0.0
    %4610 = vmatpush1.msra.mxu0 0.0
    %4611 = vmatprep.subr.mxu0 0.0
    %4612 = vmatpush1.msra.mxu0 0.0
    %4613 = vmatprep.subr.mxu0 0.0
    %4614 = vmatpush1.msra.mxu0 0.0
    %4615 = vmatprep.subr.mxu0 0.0
    %4616 = vmatpush1.msra.mxu0 0.0
    %4617 = vmatprep.subr.mxu0 0.0
    %4618 = vmatpush1.msra.mxu0 0.0
    %4619 = vmatprep.subr.mxu0 0.0
    %4620 = vmatpush1.msra.mxu0 0.0
    %4621 = vmatprep.subr.mxu0 0.0
    %4622 = vmatpush1.msra.mxu0 0.0
    %4623 = vmatprep.subr.mxu0 0.0
    %4624 = vmatpush1.msra.mxu0 0.0
    %4625 = vmatprep.subr.mxu0 0.0
    %4626 = vmatpush1.msra.mxu0 0.0
    %4627 = vmatprep.mubr.f32.mxu0 0.0
    %4628 = vmatmul.mubr.f32.gmra.mrb[0].mxu0 %v4561
    %v4629 = vpop.f32.mrb[0].mxu0
    %v4630 = vadd.f32 0.0, %v4629
    %v4631 = vpop.f32.mrb[0].mxu0
    %v4632 = vadd.f32 0.0, %v4631
    %4633 = vdwg.mxu0
    %v4634 = vadd.f32 %v4154, %v4630
    %v4635 = vadd.f32 %v4150, %v4632
    %4637 = vrot.lane.b32.xlu0 %v4635, 32
    %v4638 = vpop.permute.xlu0 %4637
    %v4640 = vsel %vm2647, %v4634, %v4638
    %v4641 = vmul.f32 %v4640, 0.5
    %v4642 = vtanh.pop %v4641
    %v4643 = vmul.f32 %v4642, 0.5
    %v4644 = vadd.f32 %v4643, 0.5
    %4646 = vrot.lane.b32.xlu0 %v4634, 96
    %v4647 = vpop.permute.xlu0 %4646
    %v4649 = vsel %vm2647, %v4647, %v4635
    %v4650 = vmul.f32 %v4649, 0.5
    %v4651 = vtanh.pop %v4650
    %v4652 = vmul.f32 %v4651, 0.5
    %v4653 = vadd.f32 %v4652, 0.5
    %4654 = vrot.lane.b32.xlu0 %v4634, 64
    %v4655 = vpop.permute.xlu0 %4654
    %4657 = vrot.lane.b32.xlu0 %v4635, 96
    %v4658 = vpop.permute.xlu0 %4657
    %v4660 = vsel %vm2647, %v4655, %v4658
    %v4661 = vtanh.pop %v4660
    %4662 = vrot.lane.b32.xlu0 %v4634, 32
    %v4663 = vpop.permute.xlu0 %4662
    %4665 = vrot.lane.b32.xlu0 %v4635, 64
    %v4666 = vpop.permute.xlu0 %4665
    %v4668 = vsel %vm2647, %v4663, %v4666
    %v4669 = vmul.f32 %v4668, 0.5
    %v4670 = vtanh.pop %v4669
    %v4671 = vmul.f32 %v4670, 0.5
    %v4672 = vadd.f32 %v4671, 0.5
    %v4673 = vmul.f32 %v4653, %v4553
    %v4674 = vmul.f32 %v4644, %v4661
    %v4675 = vadd.f32 %v4673, %v4674
    %v4676 = vtanh.pop %v4675
    %v4677 = vmul.f32 %v4672, %v4676
    %v4678 = vmul.f32 %v4288, %v4677
    %v4679 = vadd.f32 %v4557, %v4678
    %v4680 = vmul.f32 %v4281, %v4677
    %v4681 = vadd.f32 %v4559, %v4680
    %v4683 = vsel %vm1429, %v4677, 0
    %4685 = vmatprep.subr.mxu0 %v54
    %4686 = vmatpush1.msra.mxu0 %v53
    %4687 = vmatprep.subr.mxu0 %v56
    %4688 = vmatpush1.msra.mxu0 %v55
    %4689 = vmatprep.subr.mxu0 %v58
    %4690 = vmatpush1.msra.mxu0 %v57
    %4691 = vmatprep.subr.mxu0 %v60
    %4692 = vmatpush1.msra.mxu0 %v59
    %4693 = vmatprep.subr.mxu0 %v62
    %4694 = vmatpush1.msra.mxu0 %v61
    %4695 = vmatprep.subr.mxu0 %v64
    %4696 = vmatpush1.msra.mxu0 %v63
    %4697 = vmatprep.subr.mxu0 %v66
    %4698 = vmatpush1.msra.mxu0 %v65
    %4699 = vmatprep.subr.mxu0 %v68
    %4700 = vmatpush1.msra.mxu0 %v67
    %4701 = vmatprep.subr.mxu0 0.0
    %4702 = vmatpush1.msra.mxu0 0.0
    %4703 = vmatprep.subr.mxu0 0.0
    %4704 = vmatpush1.msra.mxu0 0.0
    %4705 = vmatprep.subr.mxu0 0.0
    %4706 = vmatpush1.msra.mxu0 0.0
    %4707 = vmatprep.subr.mxu0 0.0
    %4708 = vmatpush1.msra.mxu0 0.0
    %4709 = vmatprep.subr.mxu0 0.0
    %4710 = vmatpush1.msra.mxu0 0.0
    %4711 = vmatprep.subr.mxu0 0.0
    %4712 = vmatpush1.msra.mxu0 0.0
    %4713 = vmatprep.subr.mxu0 0.0
    %4714 = vmatpush1.msra.mxu0 0.0
    %4715 = vmatprep.subr.mxu0 0.0
    %4716 = vmatpush1.msra.mxu0 0.0
    %4717 = vmatprep.subr.mxu0 0.0
    %4718 = vmatpush1.msra.mxu0 0.0
    %4719 = vmatprep.subr.mxu0 0.0
    %4720 = vmatpush1.msra.mxu0 0.0
    %4721 = vmatprep.subr.mxu0 0.0
    %4722 = vmatpush1.msra.mxu0 0.0
    %4723 = vmatprep.subr.mxu0 0.0
    %4724 = vmatpush1.msra.mxu0 0.0
    %4725 = vmatprep.subr.mxu0 0.0
    %4726 = vmatpush1.msra.mxu0 0.0
    %4727 = vmatprep.subr.mxu0 0.0
    %4728 = vmatpush1.msra.mxu0 0.0
    %4729 = vmatprep.subr.mxu0 0.0
    %4730 = vmatpush1.msra.mxu0 0.0
    %4731 = vmatprep.subr.mxu0 0.0
    %4732 = vmatpush1.msra.mxu0 0.0
    %4733 = vmatprep.subr.mxu0 0.0
    %4734 = vmatpush1.msra.mxu0 0.0
    %4735 = vmatprep.subr.mxu0 0.0
    %4736 = vmatpush1.msra.mxu0 0.0
    %4737 = vmatprep.subr.mxu0 0.0
    %4738 = vmatpush1.msra.mxu0 0.0
    %4739 = vmatprep.subr.mxu0 0.0
    %4740 = vmatpush1.msra.mxu0 0.0
    %4741 = vmatprep.subr.mxu0 0.0
    %4742 = vmatpush1.msra.mxu0 0.0
    %4743 = vmatprep.subr.mxu0 0.0
    %4744 = vmatpush1.msra.mxu0 0.0
    %4745 = vmatprep.subr.mxu0 0.0
    %4746 = vmatpush1.msra.mxu0 0.0
    %4747 = vmatprep.subr.mxu0 0.0
    %4748 = vmatpush1.msra.mxu0 0.0
    %4749 = vmatprep.mubr.f32.mxu0 0.0
    %4750 = vmatmul.mubr.f32.gmra.mrb[0].mxu0 %v4683
    %v4751 = vpop.f32.mrb[0].mxu0
    %v4752 = vadd.f32 0.0, %v4751
    %v4753 = vpop.f32.mrb[0].mxu0
    %v4754 = vadd.f32 0.0, %v4753
    %4755 = vdwg.mxu0
    %v4756 = vadd.f32 %v4008, %v4752
    %v4757 = vadd.f32 %v4004, %v4754
    %4759 = vrot.lane.b32.xlu0 %v4757, 32
    %v4760 = vpop.permute.xlu0 %4759
    %v4762 = vsel %vm2647, %v4756, %v4760
    %v4763 = vmul.f32 %v4762, 0.5
    %v4764 = vtanh.pop %v4763
    %v4765 = vmul.f32 %v4764, 0.5
    %v4766 = vadd.f32 %v4765, 0.5
    %4768 = vrot.lane.b32.xlu0 %v4756, 96
    %v4769 = vpop.permute.xlu0 %4768
    %v4771 = vsel %vm2647, %v4769, %v4757
    %v4772 = vmul.f32 %v4771, 0.5
    %v4773 = vtanh.pop %v4772
    %v4774 = vmul.f32 %v4773, 0.5
    %v4775 = vadd.f32 %v4774, 0.5
    %4776 = vrot.lane.b32.xlu0 %v4756, 64
    %v4777 = vpop.permute.xlu0 %4776
    %4779 = vrot.lane.b32.xlu0 %v4757, 96
    %v4780 = vpop.permute.xlu0 %4779
    %v4782 = vsel %vm2647, %v4777, %v4780
    %v4783 = vtanh.pop %v4782
    %4784 = vrot.lane.b32.xlu0 %v4756, 32
    %v4785 = vpop.permute.xlu0 %4784
    %4787 = vrot.lane.b32.xlu0 %v4757, 64
    %v4788 = vpop.permute.xlu0 %4787
    %v4790 = vsel %vm2647, %v4785, %v4788
    %v4791 = vmul.f32 %v4790, 0.5
    %v4792 = vtanh.pop %v4791
    %v4793 = vmul.f32 %v4792, 0.5
    %v4794 = vadd.f32 %v4793, 0.5
    %v4795 = vmul.f32 %v4775, %v4675
    %v4796 = vmul.f32 %v4766, %v4783
    %v4797 = vadd.f32 %v4795, %v4796
    %v4798 = vtanh.pop %v4797
    %v4799 = vmul.f32 %v4794, %v4798
    %v4800 = vmul.f32 %v4142, %v4799
    %v4801 = vadd.f32 %v4679, %v4800
    %v4802 = vmul.f32 %v4135, %v4799
    %v4803 = vadd.f32 %v4681, %v4802
    %v4805 = vsel %vm1429, %v4799, 0
    %4807 = vmatprep.subr.mxu0 %v54
    %4808 = vmatpush1.msra.mxu0 %v53
    %4809 = vmatprep.subr.mxu0 %v56
    %4810 = vmatpush1.msra.mxu0 %v55
    %4811 = vmatprep.subr.mxu0 %v58
    %4812 = vmatpush1.msra.mxu0 %v57
    %4813 = vmatprep.subr.mxu0 %v60
    %4814 = vmatpush1.msra.mxu0 %v59
    %4815 = vmatprep.subr.mxu0 %v62
    %4816 = vmatpush1.msra.mxu0 %v61
    %4817 = vmatprep.subr.mxu0 %v64
    %4818 = vmatpush1.msra.mxu0 %v63
    %4819 = vmatprep.subr.mxu0 %v66
    %4820 = vmatpush1.msra.mxu0 %v65
    %4821 = vmatprep.subr.mxu0 %v68
    %4822 = vmatpush1.msra.mxu0 %v67
    %4823 = vmatprep.subr.mxu0 0.0
    %4824 = vmatpush1.msra.mxu0 0.0
    %4825 = vmatprep.subr.mxu0 0.0
    %4826 = vmatpush1.msra.mxu0 0.0
    %4827 = vmatprep.subr.mxu0 0.0
    %4828 = vmatpush1.msra.mxu0 0.0
    %4829 = vmatprep.subr.mxu0 0.0
    %4830 = vmatpush1.msra.mxu0 0.0
    %4831 = vmatprep.subr.mxu0 0.0
    %4832 = vmatpush1.msra.mxu0 0.0
    %4833 = vmatprep.subr.mxu0 0.0
    %4834 = vmatpush1.msra.mxu0 0.0
    %4835 = vmatprep.subr.mxu0 0.0
    %4836 = vmatpush1.msra.mxu0 0.0
    %4837 = vmatprep.subr.mxu0 0.0
    %4838 = vmatpush1.msra.mxu0 0.0
    %4839 = vmatprep.subr.mxu0 0.0
    %4840 = vmatpush1.msra.mxu0 0.0
    %4841 = vmatprep.subr.mxu0 0.0
    %4842 = vmatpush1.msra.mxu0 0.0
    %4843 = vmatprep.subr.mxu0 0.0
    %4844 = vmatpush1.msra.mxu0 0.0
    %4845 = vmatprep.subr.mxu0 0.0
    %4846 = vmatpush1.msra.mxu0 0.0
    %4847 = vmatprep.subr.mxu0 0.0
    %4848 = vmatpush1.msra.mxu0 0.0
    %4849 = vmatprep.subr.mxu0 0.0
    %4850 = vmatpush1.msra.mxu0 0.0
    %4851 = vmatprep.subr.mxu0 0.0
    %4852 = vmatpush1.msra.mxu0 0.0
    %4853 = vmatprep.subr.mxu0 0.0
    %4854 = vmatpush1.msra.mxu0 0.0
    %4855 = vmatprep.subr.mxu0 0.0
    %4856 = vmatpush1.msra.mxu0 0.0
    %4857 = vmatprep.subr.mxu0 0.0
    %4858 = vmatpush1.msra.mxu0 0.0
    %4859 = vmatprep.subr.mxu0 0.0
    %4860 = vmatpush1.msra.mxu0 0.0
    %4861 = vmatprep.subr.mxu0 0.0
    %4862 = vmatpush1.msra.mxu0 0.0
    %4863 = vmatprep.subr.mxu0 0.0
    %4864 = vmatpush1.msra.mxu0 0.0
    %4865 = vmatprep.subr.mxu0 0.0
    %4866 = vmatpush1.msra.mxu0 0.0
    %4867 = vmatprep.subr.mxu0 0.0
    %4868 = vmatpush1.msra.mxu0 0.0
    %4869 = vmatprep.subr.mxu0 0.0
    %4870 = vmatpush1.msra.mxu0 0.0
    %4871 = vmatprep.mubr.f32.mxu0 0.0
    %4872 = vmatmul.mubr.f32.gmra.mrb[0].mxu0 %v4805
    %v4873 = vpop.f32.mrb[0].mxu0
    %v4874 = vadd.f32 0.0, %v4873
    %v4875 = vpop.f32.mrb[0].mxu0
    %v4876 = vadd.f32 0.0, %v4875
    %4877 = vdwg.mxu0
    %v4878 = vadd.f32 %v3863, %v4874
    %v4879 = vadd.f32 %v3859, %v4876
    %4881 = vrot.lane.b32.xlu0 %v4879, 32
    %v4882 = vpop.permute.xlu0 %4881
    %v4884 = vsel %vm2647, %v4878, %v4882
    %v4885 = vmul.f32 %v4884, 0.5
    %v4886 = vtanh.pop %v4885
    %v4887 = vmul.f32 %v4886, 0.5
    %v4888 = vadd.f32 %v4887, 0.5
    %4890 = vrot.lane.b32.xlu0 %v4878, 96
    %v4891 = vpop.permute.xlu0 %4890
    %v4893 = vsel %vm2647, %v4891, %v4879
    %v4894 = vmul.f32 %v4893, 0.5
    %v4895 = vtanh.pop %v4894
    %v4896 = vmul.f32 %v4895, 0.5
    %v4897 = vadd.f32 %v4896, 0.5
    %4898 = vrot.lane.b32.xlu0 %v4878, 64
    %v4899 = vpop.permute.xlu0 %4898
    %4901 = vrot.lane.b32.xlu0 %v4879, 96
    %v4902 = vpop.permute.xlu0 %4901
    %v4904 = vsel %vm2647, %v4899, %v4902
    %v4905 = vtanh.pop %v4904
    %4906 = vrot.lane.b32.xlu0 %v4878, 32
    %v4907 = vpop.permute.xlu0 %4906
    %4909 = vrot.lane.b32.xlu0 %v4879, 64
    %v4910 = vpop.permute.xlu0 %4909
    %v4912 = vsel %vm2647, %v4907, %v4910
    %v4913 = vmul.f32 %v4912, 0.5
    %v4914 = vtanh.pop %v4913
    %v4915 = vmul.f32 %v4914, 0.5
    %v4916 = vadd.f32 %v4915, 0.5
    %v4917 = vmul.f32 %v4897, %v4797
    %v4918 = vmul.f32 %v4888, %v4905
    %v4919 = vadd.f32 %v4917, %v4918
    %v4920 = vtanh.pop %v4919
    %v4921 = vmul.f32 %v4916, %v4920
    %v4922 = vmul.f32 %v3996, %v4921
    %v4923 = vadd.f32 %v4801, %v4922
    %v4924 = vmul.f32 %v3989, %v4921
    %v4925 = vadd.f32 %v4803, %v4924
    %v4926 = vsel %vm2647, %v4923, %v4925
    %4928 = vset.pattern.permute.xlu0 0
    %4929 = vperm.xlu0 %4928, %v3854
    %v4930 = vpop.permute.xlu0 %4929
    %v4932 = vmul.f32 %v4926, %v4930
    %4933 = vst.msk [vmem:[#allocation3] sm:$0xff] %vm1429, %v4932
    // Predicated region
    $region42: #{tpu_custom_call.1} parent=1 // pred_check
      _
    $region43: #{tpu_custom_call.1} parent=1 // pred_check_branch
      %4935 = sbr.rel (0) target = $region45
    $region44: #{tpu_custom_call.1} parent=1 // pred_region
      %s4937 = ssub.s32 128, 128
      %4938 = vsyncadd [#allocation4], %s4937
      %s4940 = sshll.u32 [#allocation3], 4
      %s4941 = int_to_ptr.vmem [resolvable:$true] %s4940
      %4943 = dma.vmem_to_hbm [thread:$0]  %s4941, 128, %s10, [#allocation4]
    $region45: #{tpu_custom_call.1} parent=1 // pred_fallthru
      _
    // Predicated region
    $region46: #{tpu_custom_call.1} parent=1 // pred_check
      _
    $region47: #{tpu_custom_call.1} parent=1 // pred_check_branch
      %4945 = sbr.rel (0) target = $region49
    $region48: #{tpu_custom_call.1} parent=1 // pred_region
      %4946 = dma.done [#allocation4], 128
    $region49: #{tpu_custom_call.1} parent=1 // pred_fallthru
      _
    %4947 = vsyncpa [#allocation4], 1

</llo_original>
